<compile_context>
chip_gen: v6e
topology: v6e:2x2x1
jax: 0.10.0
libtpu: 0.0.40
codegen_flags: <defaults>
</compile_context>

<pallas_src>
import functools

import jax
import jax.numpy as jnp
from jax.experimental import pallas as pl
from jax.experimental.pallas import tpu as pltpu


def _round_up(x, m):
    return (x + m - 1) // m * m


_VMEM_LIMIT = 32 * 1024 * 1024  # safe on v5e/v6e (128 MiB) and v7x (64 MiB/TC)
_K = 5                           # conv kernel size
_PAD = 2                         # conv spatial padding


# ----------------------------------------------------------------------------
# Pallas kernels
# ----------------------------------------------------------------------------
def _conv_relu_pool_kernel(x_ref, w_ref, b_ref, o_ref, *, wp2, tail):
    """Fused Conv2d(k=5,s=1,p=2) + bias + ReLU + MaxPool2d(2) for one batch tile.

    Layout (channels on sublanes, flat spatial on lanes => lane-dense):
      x_ref: (4, Ci, NR) bf16 — parity-decomposed padded input; parity
             p = 2*(row%2)+(col%2); lane n = b*SP2 + r*wp2 + c holds the
             half-resolution padded pixel (2r+pr, 2c+pc) of image b.
      w_ref: (Co, 25*Ci) bf16 — conv weights, K ordered (kh, kw, ci).
      b_ref: (Co, 1)     f32  — bias.
      o_ref: (Co, NR)         — pooled output; lane n = b*SP2 + ho*wp2 + wo.

    The patch matrix for each of the 4 pooling phases is built in VMEM by
    concatenating 25 statically shifted windows of the resident block, then a
    single MXU matmul + f32 bias/ReLU/max epilogue produces the pooled tile.
    relu(max(.)) == max(relu(.)) since ReLU is monotone.  The last `tail`
    lanes (bottom-pad rows of the tile's last image — never valid pooled
    positions) cannot be computed from this block and are zero-filled.
    """
    nr_in = x_ref.shape[-1]
    nr_out = nr_in - tail
    co = w_ref.shape[0]

    w = w_ref[...]                                  # (Co, 25*Ci) bf16, resident
    bias = b_ref[...]                               # (Co, 1)     f32

    # 4 phases x 25 taps reference only 36 distinct shifted windows; load once.
    windows = {}

    def window(pr, rr, pc, cc):
        off = rr * wp2 + cc                         # static lane offset
        return x_ref[2 * pr + pc, :, pl.ds(off, nr_out)]      # (Ci, nr_out)

    result = None
    for di in (0, 1):                               # pooling phase (rows)
        for dj in (0, 1):                           # pooling phase (cols)
            taps = []
            for kh in range(_K):
                for kw in range(_K):
                    key = ((di + kh) % 2, (di + kh) // 2,
                           (dj + kw) % 2, (dj + kw) // 2)
                    if key not in windows:
                        windows[key] = window(*key)
                    taps.append(windows[key])
            patches = jnp.concatenate(taps, axis=0)            # (25*Ci, nr_out)
            acc = jnp.dot(w, patches, preferred_element_type=jnp.float32)
            phase = jnp.maximum(acc + bias, 0.0)               # bias + ReLU
            result = phase if result is None else jnp.maximum(result, phase)

    o_ref[:, pl.ds(0, nr_out)] = result.astype(o_ref.dtype)
    o_ref[:, pl.ds(nr_out, tail)] = jnp.zeros((co, tail), o_ref.dtype)


def _linear_kernel(x_ref, w_ref, b_ref, o_ref):
    """o = x @ w + b.  bf16 operands, f32 MXU accumulation, 128-lane output."""
    acc = jnp.dot(x_ref[...], w_ref[...], preferred_element_type=jnp.float32)
    o_ref[...] = (acc + b_ref[...]).astype(o_ref.dtype)


# ----------------------------------------------------------------------------
# XLA-side layout glue (1x bytes — no im2col blowup leaves the chip)
# ----------------------------------------------------------------------------
def _parity_slabs(a_nhwc, sp2, dtype):
    """(B, H, W, Ci) -> (4, Ci, B*sp2) parity-decomposed padded layout.

    slab[2*pr+pc, ci, b*sp2 + r*wp2 + c] = a_padded[b, 2r+pr, 2c+pc, ci]
    with wp2 = (H + 2*pad)/2; per-image lane stride sp2 is 128-aligned.
    """
    B, H, W, Ci = a_nhwc.shape
    hp2 = (H + 2 * _PAD) // 2
    ap = jnp.pad(a_nhwc, ((0, 0), (_PAD, _PAD), (_PAD, _PAD), (0, 0)))
    ap = ap.reshape(B, hp2, 2, hp2, 2, Ci)          # i = 2r+pr, j = 2c+pc
    ap = ap.transpose(2, 4, 5, 0, 1, 3)             # (pr, pc, Ci, B, r, c)
    ap = ap.reshape(4, Ci, B, hp2 * hp2)
    if sp2 > hp2 * hp2:
        ap = jnp.pad(ap, ((0, 0), (0, 0), (0, 0), (0, sp2 - hp2 * hp2)))
    return ap.reshape(4, Ci, B * sp2).astype(dtype)


# ----------------------------------------------------------------------------
# pallas_call wrappers
# ----------------------------------------------------------------------------
def conv_relu_pool(a_nhwc, w2d, bias, *, out_dtype, tile_b=8):
    """Conv2d(k=5, s=1, p=2) + ReLU + MaxPool2d(2). Returns (B, H/2, W/2, Co)."""
    B, H, W, Ci = a_nhwc.shape
    assert H == W and H % 2 == 0
    Co = w2d.shape[0]
    ho = H // 2
    hp2 = ho + 2                        # parity-image side (padded input / 2)
    sp2 = _round_up(hp2 * hp2, 128)     # per-image lane stride (lane-aligned)
    tail = 2 * hp2 + 2                  # uncomputable tail lanes (never valid)

    # Batch tile: at least 2 grid steps when B >= 2 so both v7x cores get work.
    tb = max(1, min(tile_b, B // 2))
    bp = _round_up(B, tb)
    if bp != B:                         # pad with zero images, sliced off below
        a_nhwc = jnp.pad(a_nhwc, ((0, bp - B), (0, 0), (0, 0), (0, 0)))

    slabs = _parity_slabs(a_nhwc, sp2, jnp.bfloat16)           # (4, Ci, bp*sp2)
    kernel = functools.partial(_conv_relu_pool_kernel, wp2=hp2, tail=tail)

    out = pl.pallas_call(
        kernel,
        out_shape=jax.ShapeDtypeStruct((Co, bp * sp2), out_dtype),
        grid=(bp // tb,),
        in_specs=[
            pl.BlockSpec((4, Ci, tb * sp2), lambda i: (0, 0, i)),
            pl.BlockSpec((Co, _K * _K * Ci), lambda i: (0, 0)),   # resident
            pl.BlockSpec((Co, 1), lambda i: (0, 0)),              # resident
        ],
        out_specs=pl.BlockSpec((Co, tb * sp2), lambda i: (0, i)),
        compiler_params=pltpu.CompilerParams(
            dimension_semantics=("parallel",),
            vmem_limit_bytes=_VMEM_LIMIT,
        ),
    )(slabs, w2d, bias)

    # (Co, bp*sp2) -> (B, ho, ho, Co): drop per-image lane padding, the two
    # pad rows/cols of each parity image, and any batch padding.
    out = out.reshape(Co, bp, sp2)[:, :B, : hp2 * hp2]
    out = out.reshape(Co, B, hp2, hp2)[:, :, :ho, :ho]
    return out.transpose(1, 2, 3, 0)                           # (B, ho, ho, Co)


def linear_matmul(x_bf16, w2d, bias):
    """(B, K) bf16 @ (K, Np) bf16 + bias -> (B, Np) f32; Np is 128-padded."""
    B, K = x_bf16.shape
    Np = w2d.shape[1]
    row_tile = min(128, _round_up(B, 8))
    bp = _round_up(B, row_tile)
    if bp != B:
        x_bf16 = jnp.pad(x_bf16, ((0, bp - B), (0, 0)))

    out = pl.pallas_call(
        _linear_kernel,
        out_shape=jax.ShapeDtypeStruct((bp, Np), jnp.float32),
        grid=(bp // row_tile,),
        in_specs=[
            pl.BlockSpec((row_tile, K), lambda i: (i, 0)),
            pl.BlockSpec((K, Np), lambda i: (0, 0)),
            pl.BlockSpec((1, Np), lambda i: (0, 0)),
        ],
        out_specs=pl.BlockSpec((row_tile, Np), lambda i: (i, 0)),
        compiler_params=pltpu.CompilerParams(
            dimension_semantics=("parallel",),
            vmem_limit_bytes=_VMEM_LIMIT,
        ),
    )(x_bf16, w2d, bias)
    return out[:B]


# ----------------------------------------------------------------------------
# Parameters and forward pass
# ----------------------------------------------------------------------------
def init_params(key):
    """Deterministic synthetic parameters in PyTorch layouts."""
    k1, k2, k3, k4, k5, k6 = jax.random.split(key, 6)
    return {
        "w1": jax.random.normal(k1, (16, 1, 5, 5), jnp.float32) * 0.1,
        "b1": jax.random.normal(k2, (16,), jnp.float32) * 0.1,
        "w2": jax.random.normal(k3, (32, 16, 5, 5), jnp.float32) * 0.05,
        "b2": jax.random.normal(k4, (32,), jnp.float32) * 0.05,
        "w_out": jax.random.normal(k5, (10, 32 * 7 * 7), jnp.float32) * 0.02,
        "b_out": jax.random.normal(k6, (10,), jnp.float32) * 0.02,
    }


def prepare_params(params):
    """One-time conversion of PyTorch-layout weights into kernel layouts:
    conv weights (Co, KH*KW*Cin) bf16 with K ordered (kh, kw, ci); Linear
    weight (K, 128) bf16 zero-padded from N=10 to 128 lanes; f32 biases."""
    w1 = jnp.transpose(params["w1"], (0, 2, 3, 1)).reshape(16, 25)
    w2 = jnp.transpose(params["w2"], (0, 2, 3, 1)).reshape(32, 400)
    w_out = jnp.pad(params["w_out"].T, ((0, 0), (0, 128 - 10)))  # (1568, 128)
    b_out = jnp.pad(params["b_out"], (0, 128 - 10)).reshape(1, 128)
    return {
        "w1": w1.astype(jnp.bfloat16),
        "b1": params["b1"].reshape(16, 1).astype(jnp.float32),
        "w2": w2.astype(jnp.bfloat16),
        "b2": params["b2"].reshape(32, 1).astype(jnp.float32),
        "w_out": w_out.astype(jnp.bfloat16),
        "b_out": b_out.astype(jnp.float32),
    }


def cnn_forward(kparams, x_nchw):
    """Matches CNN.forward: returns (logits, flattened_conv_features)."""
    B = x_nchw.shape[0]
    x = jnp.transpose(x_nchw, (0, 2, 3, 1))                      # NCHW -> NHWC
    x = conv_relu_pool(x, kparams["w1"], kparams["b1"],
                       out_dtype=jnp.bfloat16)                   # (B,14,14,16)
    # nn.MaxPool3d(2) in the source is a typo; MaxPool2d(2) is what the
    # Linear(32*7*7, 10) input size implies.
    x = conv_relu_pool(x, kparams["w2"], kparams["b2"],
                       out_dtype=jnp.float32)                    # (B,7,7,32)
    # PyTorch x.view(B, -1) flattens in NCHW (C, H, W) order.
    flat = jnp.transpose(x, (0, 3, 1, 2)).reshape(B, -1)         # (B,1568) f32
    logits = linear_matmul(flat.astype(jnp.bfloat16),
                           kparams["w_out"], kparams["b_out"])[:, :10]
    return logits, flat


# ----------------------------------------------------------------------------
if __name__ == "__main__":
    key = jax.random.PRNGKey(0)
    pkey, xkey = jax.random.split(key)
    params = init_params(pkey)
    kparams = prepare_params(params)   # one-time weight layout/dtype prep

    # 28x28 single-channel input is required by Linear(32*7*7, 10); batch=2.
    x = jax.random.normal(xkey, (2, 1, 28, 28), jnp.float32)

    logits, feats = jax.jit(cnn_forward)(kparams, x)
    jax.block_until_ready((logits, feats))

    assert logits.shape == (2, 10), logits.shape
    assert feats.shape == (2, 32 * 7 * 7), feats.shape
    assert logits.dtype == jnp.float32 and feats.dtype == jnp.float32
    assert bool(jnp.all(jnp.isfinite(logits))) and bool(jnp.all(jnp.isfinite(feats)))
    print("KERNEL_OK")
</pallas_src>

<mosaic_0001>
module attributes {stable_mosaic.version = 11 : i64} {
  func.func @_conv_relu_pool_kernel(%arg0: i32, %arg1: memref<4x1x256xbf16, #tpu.memory_space<vmem>>, %arg2: memref<16x25xbf16, #tpu.memory_space<vmem>>, %arg3: memref<16x1xf32, #tpu.memory_space<vmem>>, %arg4: memref<16x256xbf16, #tpu.memory_space<vmem>>) attributes {dimension_semantics = [#tpu.dimension_semantics<parallel>], iteration_bounds = array<i64: 2>, scalar_prefetch = 0 : i64, scratch_operands = 0 : i64, tpu.core_type = #tpu.core_type<tc>, window_params = [{transform_indices = @transform_0, window_bounds = array<i64: 4, 1, 256>}, {pipeline_mode = #tpu.pipeline_mode<synchronous>, transform_indices = @transform_1, window_bounds = array<i64: 16, 25>}, {pipeline_mode = #tpu.pipeline_mode<synchronous>, transform_indices = @transform_2, window_bounds = array<i64: 16, 1>}, {transform_indices = @transform_3, window_bounds = array<i64: 16, 256>}]} {
    %c0 = arith.constant 0 : index
    %c0_0 = arith.constant 0 : index
    %0 = vector.load %arg2[%c0, %c0_0] : memref<16x25xbf16, #tpu.memory_space<vmem>>, vector<16x25xbf16>
    %c0_1 = arith.constant 0 : index
    %c0_2 = arith.constant 0 : index
    %1 = vector.load %arg3[%c0_1, %c0_2] : memref<16x1xf32, #tpu.memory_space<vmem>>, vector<16x1xf32>
    %c0_3 = arith.constant 0 : index
    %c0_4 = arith.constant 0 : index
    %c0_5 = arith.constant 0 : index
    %2 = vector.load %arg1[%c0_3, %c0_4, %c0_5] : memref<4x1x256xbf16, #tpu.memory_space<vmem>>, vector<1x1x222xbf16>
    %3 = vector.shape_cast %2 : vector<1x1x222xbf16> to vector<1x222xbf16>
    %c1 = arith.constant 1 : index
    %c0_6 = arith.constant 0 : index
    %c0_7 = arith.constant 0 : index
    %4 = vector.load %arg1[%c1, %c0_6, %c0_7] : memref<4x1x256xbf16, #tpu.memory_space<vmem>>, vector<1x1x222xbf16>
    %5 = vector.shape_cast %4 : vector<1x1x222xbf16> to vector<1x222xbf16>
    %c0_8 = arith.constant 0 : index
    %c0_9 = arith.constant 0 : index
    %c1_10 = arith.constant 1 : index
    %6 = vector.load %arg1[%c0_8, %c0_9, %c1_10] : memref<4x1x256xbf16, #tpu.memory_space<vmem>>, vector<1x1x222xbf16>
    %7 = vector.shape_cast %6 : vector<1x1x222xbf16> to vector<1x222xbf16>
    %c1_11 = arith.constant 1 : index
    %c0_12 = arith.constant 0 : index
    %c1_13 = arith.constant 1 : index
    %8 = vector.load %arg1[%c1_11, %c0_12, %c1_13] : memref<4x1x256xbf16, #tpu.memory_space<vmem>>, vector<1x1x222xbf16>
    %9 = vector.shape_cast %8 : vector<1x1x222xbf16> to vector<1x222xbf16>
    %c0_14 = arith.constant 0 : index
    %c0_15 = arith.constant 0 : index
    %c2 = arith.constant 2 : index
    %10 = vector.load %arg1[%c0_14, %c0_15, %c2] : memref<4x1x256xbf16, #tpu.memory_space<vmem>>, vector<1x1x222xbf16>
    %11 = vector.shape_cast %10 : vector<1x1x222xbf16> to vector<1x222xbf16>
    %c2_16 = arith.constant 2 : index
    %c0_17 = arith.constant 0 : index
    %c0_18 = arith.constant 0 : index
    %12 = vector.load %arg1[%c2_16, %c0_17, %c0_18] : memref<4x1x256xbf16, #tpu.memory_space<vmem>>, vector<1x1x222xbf16>
    %13 = vector.shape_cast %12 : vector<1x1x222xbf16> to vector<1x222xbf16>
    %c3 = arith.constant 3 : index
    %c0_19 = arith.constant 0 : index
    %c0_20 = arith.constant 0 : index
    %14 = vector.load %arg1[%c3, %c0_19, %c0_20] : memref<4x1x256xbf16, #tpu.memory_space<vmem>>, vector<1x1x222xbf16>
    %15 = vector.shape_cast %14 : vector<1x1x222xbf16> to vector<1x222xbf16>
    %c2_21 = arith.constant 2 : index
    %c0_22 = arith.constant 0 : index
    %c1_23 = arith.constant 1 : index
    %16 = vector.load %arg1[%c2_21, %c0_22, %c1_23] : memref<4x1x256xbf16, #tpu.memory_space<vmem>>, vector<1x1x222xbf16>
    %17 = vector.shape_cast %16 : vector<1x1x222xbf16> to vector<1x222xbf16>
    %c3_24 = arith.constant 3 : index
    %c0_25 = arith.constant 0 : index
    %c1_26 = arith.constant 1 : index
    %18 = vector.load %arg1[%c3_24, %c0_25, %c1_26] : memref<4x1x256xbf16, #tpu.memory_space<vmem>>, vector<1x1x222xbf16>
    %19 = vector.shape_cast %18 : vector<1x1x222xbf16> to vector<1x222xbf16>
    %c2_27 = arith.constant 2 : index
    %c0_28 = arith.constant 0 : index
    %c2_29 = arith.constant 2 : index
    %20 = vector.load %arg1[%c2_27, %c0_28, %c2_29] : memref<4x1x256xbf16, #tpu.memory_space<vmem>>, vector<1x1x222xbf16>
    %21 = vector.shape_cast %20 : vector<1x1x222xbf16> to vector<1x222xbf16>
    %c0_30 = arith.constant 0 : index
    %c0_31 = arith.constant 0 : index
    %c16 = arith.constant 16 : index
    %22 = vector.load %arg1[%c0_30, %c0_31, %c16] : memref<4x1x256xbf16, #tpu.memory_space<vmem>>, vector<1x1x222xbf16>
    %23 = vector.shape_cast %22 : vector<1x1x222xbf16> to vector<1x222xbf16>
    %c1_32 = arith.constant 1 : index
    %c0_33 = arith.constant 0 : index
    %c16_34 = arith.constant 16 : index
    %24 = vector.load %arg1[%c1_32, %c0_33, %c16_34] : memref<4x1x256xbf16, #tpu.memory_space<vmem>>, vector<1x1x222xbf16>
    %25 = vector.shape_cast %24 : vector<1x1x222xbf16> to vector<1x222xbf16>
    %c0_35 = arith.constant 0 : index
    %c0_36 = arith.constant 0 : index
    %c17 = arith.constant 17 : index
    %26 = vector.load %arg1[%c0_35, %c0_36, %c17] : memref<4x1x256xbf16, #tpu.memory_space<vmem>>, vector<1x1x222xbf16>
    %27 = vector.shape_cast %26 : vector<1x1x222xbf16> to vector<1x222xbf16>
    %c1_37 = arith.constant 1 : index
    %c0_38 = arith.constant 0 : index
    %c17_39 = arith.constant 17 : index
    %28 = vector.load %arg1[%c1_37, %c0_38, %c17_39] : memref<4x1x256xbf16, #tpu.memory_space<vmem>>, vector<1x1x222xbf16>
    %29 = vector.shape_cast %28 : vector<1x1x222xbf16> to vector<1x222xbf16>
    %c0_40 = arith.constant 0 : index
    %c0_41 = arith.constant 0 : index
    %c18 = arith.constant 18 : index
    %30 = vector.load %arg1[%c0_40, %c0_41, %c18] : memref<4x1x256xbf16, #tpu.memory_space<vmem>>, vector<1x1x222xbf16>
    %31 = vector.shape_cast %30 : vector<1x1x222xbf16> to vector<1x222xbf16>
    %c2_42 = arith.constant 2 : index
    %c0_43 = arith.constant 0 : index
    %c16_44 = arith.constant 16 : index
    %32 = vector.load %arg1[%c2_42, %c0_43, %c16_44] : memref<4x1x256xbf16, #tpu.memory_space<vmem>>, vector<1x1x222xbf16>
    %33 = vector.shape_cast %32 : vector<1x1x222xbf16> to vector<1x222xbf16>
    %c3_45 = arith.constant 3 : index
    %c0_46 = arith.constant 0 : index
    %c16_47 = arith.constant 16 : index
    %34 = vector.load %arg1[%c3_45, %c0_46, %c16_47] : memref<4x1x256xbf16, #tpu.memory_space<vmem>>, vector<1x1x222xbf16>
    %35 = vector.shape_cast %34 : vector<1x1x222xbf16> to vector<1x222xbf16>
    %c2_48 = arith.constant 2 : index
    %c0_49 = arith.constant 0 : index
    %c17_50 = arith.constant 17 : index
    %36 = vector.load %arg1[%c2_48, %c0_49, %c17_50] : memref<4x1x256xbf16, #tpu.memory_space<vmem>>, vector<1x1x222xbf16>
    %37 = vector.shape_cast %36 : vector<1x1x222xbf16> to vector<1x222xbf16>
    %c3_51 = arith.constant 3 : index
    %c0_52 = arith.constant 0 : index
    %c17_53 = arith.constant 17 : index
    %38 = vector.load %arg1[%c3_51, %c0_52, %c17_53] : memref<4x1x256xbf16, #tpu.memory_space<vmem>>, vector<1x1x222xbf16>
    %39 = vector.shape_cast %38 : vector<1x1x222xbf16> to vector<1x222xbf16>
    %c2_54 = arith.constant 2 : index
    %c0_55 = arith.constant 0 : index
    %c18_56 = arith.constant 18 : index
    %40 = vector.load %arg1[%c2_54, %c0_55, %c18_56] : memref<4x1x256xbf16, #tpu.memory_space<vmem>>, vector<1x1x222xbf16>
    %41 = vector.shape_cast %40 : vector<1x1x222xbf16> to vector<1x222xbf16>
    %c0_57 = arith.constant 0 : index
    %c0_58 = arith.constant 0 : index
    %c32 = arith.constant 32 : index
    %42 = vector.load %arg1[%c0_57, %c0_58, %c32] : memref<4x1x256xbf16, #tpu.memory_space<vmem>>, vector<1x1x222xbf16>
    %43 = vector.shape_cast %42 : vector<1x1x222xbf16> to vector<1x222xbf16>
    %c1_59 = arith.constant 1 : index
    %c0_60 = arith.constant 0 : index
    %c32_61 = arith.constant 32 : index
    %44 = vector.load %arg1[%c1_59, %c0_60, %c32_61] : memref<4x1x256xbf16, #tpu.memory_space<vmem>>, vector<1x1x222xbf16>
    %45 = vector.shape_cast %44 : vector<1x1x222xbf16> to vector<1x222xbf16>
    %c0_62 = arith.constant 0 : index
    %c0_63 = arith.constant 0 : index
    %c33 = arith.constant 33 : index
    %46 = vector.load %arg1[%c0_62, %c0_63, %c33] : memref<4x1x256xbf16, #tpu.memory_space<vmem>>, vector<1x1x222xbf16>
    %47 = vector.shape_cast %46 : vector<1x1x222xbf16> to vector<1x222xbf16>
    %c1_64 = arith.constant 1 : index
    %c0_65 = arith.constant 0 : index
    %c33_66 = arith.constant 33 : index
    %48 = vector.load %arg1[%c1_64, %c0_65, %c33_66] : memref<4x1x256xbf16, #tpu.memory_space<vmem>>, vector<1x1x222xbf16>
    %49 = vector.shape_cast %48 : vector<1x1x222xbf16> to vector<1x222xbf16>
    %c0_67 = arith.constant 0 : index
    %c0_68 = arith.constant 0 : index
    %c34 = arith.constant 34 : index
    %50 = vector.load %arg1[%c0_67, %c0_68, %c34] : memref<4x1x256xbf16, #tpu.memory_space<vmem>>, vector<1x1x222xbf16>
    %51 = vector.shape_cast %50 : vector<1x1x222xbf16> to vector<1x222xbf16>
    %52 = tpu.concatenate %3, %5, %7, %9, %11, %13, %15, %17, %19, %21, %23, %25, %27, %29, %31, %33 in 0 : vector<1x222xbf16>, vector<1x222xbf16>, vector<1x222xbf16>, vector<1x222xbf16>, vector<1x222xbf16>, vector<1x222xbf16>, vector<1x222xbf16>, vector<1x222xbf16>, vector<1x222xbf16>, vector<1x222xbf16>, vector<1x222xbf16>, vector<1x222xbf16>, vector<1x222xbf16>, vector<1x222xbf16>, vector<1x222xbf16>, vector<1x222xbf16> -> vector<16x222xbf16>
    %53 = tpu.concatenate %35, %37, %39, %41, %43, %45, %47, %49, %51 in 0 : vector<1x222xbf16>, vector<1x222xbf16>, vector<1x222xbf16>, vector<1x222xbf16>, vector<1x222xbf16>, vector<1x222xbf16>, vector<1x222xbf16>, vector<1x222xbf16>, vector<1x222xbf16> -> vector<9x222xbf16>
    %54 = tpu.concatenate %52, %53 in 0 : vector<16x222xbf16>, vector<9x222xbf16> -> vector<25x222xbf16>
    %cst = arith.constant dense<0.000000e+00> : vector<16x222xf32>
    %55 = tpu.matmul %0, %54, %cst {dimension_numbers = #tpu.dot_dimension_numbers<[1], [0], [0], [1], [0, 0, 1, 1], [], []>} : vector<16x25xbf16>, vector<25x222xbf16>, vector<16x222xf32> -> vector<16x222xf32>
    %56 = vector.broadcast %1 : vector<16x1xf32> to vector<16x222xf32>
    %57 = arith.addf %55, %56 : vector<16x222xf32>
    %cst_69 = arith.constant 0.000000e+00 : f32
    %58 = vector.broadcast %cst_69 : f32 to vector<16x222xf32>
    %59 = arith.maximumf %57, %58 : vector<16x222xf32>
    %c1_70 = arith.constant 1 : index
    %c0_71 = arith.constant 0 : index
    %c2_72 = arith.constant 2 : index
    %60 = vector.load %arg1[%c1_70, %c0_71, %c2_72] : memref<4x1x256xbf16, #tpu.memory_space<vmem>>, vector<1x1x222xbf16>
    %61 = vector.shape_cast %60 : vector<1x1x222xbf16> to vector<1x222xbf16>
    %c3_73 = arith.constant 3 : index
    %c0_74 = arith.constant 0 : index
    %c2_75 = arith.constant 2 : index
    %62 = vector.load %arg1[%c3_73, %c0_74, %c2_75] : memref<4x1x256xbf16, #tpu.memory_space<vmem>>, vector<1x1x222xbf16>
    %63 = vector.shape_cast %62 : vector<1x1x222xbf16> to vector<1x222xbf16>
    %c1_76 = arith.constant 1 : index
    %c0_77 = arith.constant 0 : index
    %c18_78 = arith.constant 18 : index
    %64 = vector.load %arg1[%c1_76, %c0_77, %c18_78] : memref<4x1x256xbf16, #tpu.memory_space<vmem>>, vector<1x1x222xbf16>
    %65 = vector.shape_cast %64 : vector<1x1x222xbf16> to vector<1x222xbf16>
    %c3_79 = arith.constant 3 : index
    %c0_80 = arith.constant 0 : index
    %c18_81 = arith.constant 18 : index
    %66 = vector.load %arg1[%c3_79, %c0_80, %c18_81] : memref<4x1x256xbf16, #tpu.memory_space<vmem>>, vector<1x1x222xbf16>
    %67 = vector.shape_cast %66 : vector<1x1x222xbf16> to vector<1x222xbf16>
    %c1_82 = arith.constant 1 : index
    %c0_83 = arith.constant 0 : index
    %c34_84 = arith.constant 34 : index
    %68 = vector.load %arg1[%c1_82, %c0_83, %c34_84] : memref<4x1x256xbf16, #tpu.memory_space<vmem>>, vector<1x1x222xbf16>
    %69 = vector.shape_cast %68 : vector<1x1x222xbf16> to vector<1x222xbf16>
    %70 = tpu.concatenate %5, %7, %9, %11, %61, %15, %17, %19, %21, %63, %25, %27, %29, %31, %65, %35 in 0 : vector<1x222xbf16>, vector<1x222xbf16>, vector<1x222xbf16>, vector<1x222xbf16>, vector<1x222xbf16>, vector<1x222xbf16>, vector<1x222xbf16>, vector<1x222xbf16>, vector<1x222xbf16>, vector<1x222xbf16>, vector<1x222xbf16>, vector<1x222xbf16>, vector<1x222xbf16>, vector<1x222xbf16>, vector<1x222xbf16>, vector<1x222xbf16> -> vector<16x222xbf16>
    %71 = tpu.concatenate %37, %39, %41, %67, %45, %47, %49, %51, %69 in 0 : vector<1x222xbf16>, vector<1x222xbf16>, vector<1x222xbf16>, vector<1x222xbf16>, vector<1x222xbf16>, vector<1x222xbf16>, vector<1x222xbf16>, vector<1x222xbf16>, vector<1x222xbf16> -> vector<9x222xbf16>
    %72 = tpu.concatenate %70, %71 in 0 : vector<16x222xbf16>, vector<9x222xbf16> -> vector<25x222xbf16>
    %cst_85 = arith.constant dense<0.000000e+00> : vector<16x222xf32>
    %73 = tpu.matmul %0, %72, %cst_85 {dimension_numbers = #tpu.dot_dimension_numbers<[1], [0], [0], [1], [0, 0, 1, 1], [], []>} : vector<16x25xbf16>, vector<25x222xbf16>, vector<16x222xf32> -> vector<16x222xf32>
    %74 = vector.broadcast %1 : vector<16x1xf32> to vector<16x222xf32>
    %75 = arith.addf %73, %74 : vector<16x222xf32>
    %cst_86 = arith.constant 0.000000e+00 : f32
    %76 = vector.broadcast %cst_86 : f32 to vector<16x222xf32>
    %77 = arith.maximumf %75, %76 : vector<16x222xf32>
    %78 = arith.maximumf %59, %77 : vector<16x222xf32>
    %c2_87 = arith.constant 2 : index
    %c0_88 = arith.constant 0 : index
    %c32_89 = arith.constant 32 : index
    %79 = vector.load %arg1[%c2_87, %c0_88, %c32_89] : memref<4x1x256xbf16, #tpu.memory_space<vmem>>, vector<1x1x222xbf16>
    %80 = vector.shape_cast %79 : vector<1x1x222xbf16> to vector<1x222xbf16>
    %c3_90 = arith.constant 3 : index
    %c0_91 = arith.constant 0 : index
    %c32_92 = arith.constant 32 : index
    %81 = vector.load %arg1[%c3_90, %c0_91, %c32_92] : memref<4x1x256xbf16, #tpu.memory_space<vmem>>, vector<1x1x222xbf16>
    %82 = vector.shape_cast %81 : vector<1x1x222xbf16> to vector<1x222xbf16>
    %c2_93 = arith.constant 2 : index
    %c0_94 = arith.constant 0 : index
    %c33_95 = arith.constant 33 : index
    %83 = vector.load %arg1[%c2_93, %c0_94, %c33_95] : memref<4x1x256xbf16, #tpu.memory_space<vmem>>, vector<1x1x222xbf16>
    %84 = vector.shape_cast %83 : vector<1x1x222xbf16> to vector<1x222xbf16>
    %c3_96 = arith.constant 3 : index
    %c0_97 = arith.constant 0 : index
    %c33_98 = arith.constant 33 : index
    %85 = vector.load %arg1[%c3_96, %c0_97, %c33_98] : memref<4x1x256xbf16, #tpu.memory_space<vmem>>, vector<1x1x222xbf16>
    %86 = vector.shape_cast %85 : vector<1x1x222xbf16> to vector<1x222xbf16>
    %c2_99 = arith.constant 2 : index
    %c0_100 = arith.constant 0 : index
    %c34_101 = arith.constant 34 : index
    %87 = vector.load %arg1[%c2_99, %c0_100, %c34_101] : memref<4x1x256xbf16, #tpu.memory_space<vmem>>, vector<1x1x222xbf16>
    %88 = vector.shape_cast %87 : vector<1x1x222xbf16> to vector<1x222xbf16>
    %89 = tpu.concatenate %13, %15, %17, %19, %21, %23, %25, %27, %29, %31, %33, %35, %37, %39, %41, %43 in 0 : vector<1x222xbf16>, vector<1x222xbf16>, vector<1x222xbf16>, vector<1x222xbf16>, vector<1x222xbf16>, vector<1x222xbf16>, vector<1x222xbf16>, vector<1x222xbf16>, vector<1x222xbf16>, vector<1x222xbf16>, vector<1x222xbf16>, vector<1x222xbf16>, vector<1x222xbf16>, vector<1x222xbf16>, vector<1x222xbf16>, vector<1x222xbf16> -> vector<16x222xbf16>
    %90 = tpu.concatenate %45, %47, %49, %51, %80, %82, %84, %86, %88 in 0 : vector<1x222xbf16>, vector<1x222xbf16>, vector<1x222xbf16>, vector<1x222xbf16>, vector<1x222xbf16>, vector<1x222xbf16>, vector<1x222xbf16>, vector<1x222xbf16>, vector<1x222xbf16> -> vector<9x222xbf16>
    %91 = tpu.concatenate %89, %90 in 0 : vector<16x222xbf16>, vector<9x222xbf16> -> vector<25x222xbf16>
    %cst_102 = arith.constant dense<0.000000e+00> : vector<16x222xf32>
    %92 = tpu.matmul %0, %91, %cst_102 {dimension_numbers = #tpu.dot_dimension_numbers<[1], [0], [0], [1], [0, 0, 1, 1], [], []>} : vector<16x25xbf16>, vector<25x222xbf16>, vector<16x222xf32> -> vector<16x222xf32>
    %93 = vector.broadcast %1 : vector<16x1xf32> to vector<16x222xf32>
    %94 = arith.addf %92, %93 : vector<16x222xf32>
    %cst_103 = arith.constant 0.000000e+00 : f32
    %95 = vector.broadcast %cst_103 : f32 to vector<16x222xf32>
    %96 = arith.maximumf %94, %95 : vector<16x222xf32>
    %97 = arith.maximumf %78, %96 : vector<16x222xf32>
    %c3_104 = arith.constant 3 : index
    %c0_105 = arith.constant 0 : index
    %c34_106 = arith.constant 34 : index
    %98 = vector.load %arg1[%c3_104, %c0_105, %c34_106] : memref<4x1x256xbf16, #tpu.memory_space<vmem>>, vector<1x1x222xbf16>
    %99 = vector.shape_cast %98 : vector<1x1x222xbf16> to vector<1x222xbf16>
    %100 = tpu.concatenate %15, %17, %19, %21, %63, %25, %27, %29, %31, %65, %35, %37, %39, %41, %67, %45 in 0 : vector<1x222xbf16>, vector<1x222xbf16>, vector<1x222xbf16>, vector<1x222xbf16>, vector<1x222xbf16>, vector<1x222xbf16>, vector<1x222xbf16>, vector<1x222xbf16>, vector<1x222xbf16>, vector<1x222xbf16>, vector<1x222xbf16>, vector<1x222xbf16>, vector<1x222xbf16>, vector<1x222xbf16>, vector<1x222xbf16>, vector<1x222xbf16> -> vector<16x222xbf16>
    %101 = tpu.concatenate %47, %49, %51, %69, %82, %84, %86, %88, %99 in 0 : vector<1x222xbf16>, vector<1x222xbf16>, vector<1x222xbf16>, vector<1x222xbf16>, vector<1x222xbf16>, vector<1x222xbf16>, vector<1x222xbf16>, vector<1x222xbf16>, vector<1x222xbf16> -> vector<9x222xbf16>
    %102 = tpu.concatenate %100, %101 in 0 : vector<16x222xbf16>, vector<9x222xbf16> -> vector<25x222xbf16>
    %cst_107 = arith.constant dense<0.000000e+00> : vector<16x222xf32>
    %103 = tpu.matmul %0, %102, %cst_107 {dimension_numbers = #tpu.dot_dimension_numbers<[1], [0], [0], [1], [0, 0, 1, 1], [], []>} : vector<16x25xbf16>, vector<25x222xbf16>, vector<16x222xf32> -> vector<16x222xf32>
    %104 = vector.broadcast %1 : vector<16x1xf32> to vector<16x222xf32>
    %105 = arith.addf %103, %104 : vector<16x222xf32>
    %cst_108 = arith.constant 0.000000e+00 : f32
    %106 = vector.broadcast %cst_108 : f32 to vector<16x222xf32>
    %107 = arith.maximumf %105, %106 : vector<16x222xf32>
    %108 = arith.maximumf %97, %107 : vector<16x222xf32>
    %109 = arith.truncf %108 : vector<16x222xf32> to vector<16x222xbf16>
    %c0_109 = arith.constant 0 : index
    %c0_110 = arith.constant 0 : index
    %110 = vector.load %arg4[%c0_109, %c0_110] : memref<16x256xbf16, #tpu.memory_space<vmem>>, vector<16x222xbf16>
    tpu.vector_store %arg4[%c0_109, %c0_110], %109 {strides = array<i32>} : memref<16x256xbf16, #tpu.memory_space<vmem>>, vector<16x222xbf16>,
    %cst_111 = arith.constant 0.000000e+00 : bf16
    %111 = vector.broadcast %cst_111 : bf16 to vector<16x34xbf16>
    %c0_112 = arith.constant 0 : index
    %c222 = arith.constant 222 : index
    %112 = vector.load %arg4[%c0_112, %c222] : memref<16x256xbf16, #tpu.memory_space<vmem>>, vector<16x34xbf16>
    tpu.vector_store %arg4[%c0_112, %c222], %111 {strides = array<i32>} : memref<16x256xbf16, #tpu.memory_space<vmem>>, vector<16x34xbf16>,
    return
  }
  func.func @transform_0(%arg0: i32) -> (i32, i32, i32) {
    %c0_i32 = arith.constant 0 : i32
    %c0_i32_0 = arith.constant 0 : i32
    %c0_i32_1 = arith.constant 0 : i32
    return %c0_i32, %c0_i32_0, %arg0 : i32, i32, i32
  }
  func.func @transform_1(%arg0: i32) -> (i32, i32) {
    %c0_i32 = arith.constant 0 : i32
    %c0_i32_0 = arith.constant 0 : i32
    %c0_i32_1 = arith.constant 0 : i32
    return %c0_i32, %c0_i32_0 : i32, i32
  }
  func.func @transform_2(%arg0: i32) -> (i32, i32) {
    %c0_i32 = arith.constant 0 : i32
    %c0_i32_0 = arith.constant 0 : i32
    %c0_i32_1 = arith.constant 0 : i32
    return %c0_i32, %c0_i32_0 : i32, i32
  }
  func.func @transform_3(%arg0: i32) -> (i32, i32) {
    %c0_i32 = arith.constant 0 : i32
    %c0_i32_0 = arith.constant 0 : i32
    return %c0_i32, %arg0 : i32, i32
  }
}

module attributes {stable_mosaic.version = 11 : i64} {
  func.func @_conv_relu_pool_kernel(%arg0: i32, %arg1: memref<4x16x128xbf16, #tpu.memory_space<vmem>>, %arg2: memref<32x400xbf16, #tpu.memory_space<vmem>>, %arg3: memref<32x1xf32, #tpu.memory_space<vmem>>, %arg4: memref<32x128xf32, #tpu.memory_space<vmem>>) attributes {dimension_semantics = [#tpu.dimension_semantics<parallel>], iteration_bounds = array<i64: 2>, scalar_prefetch = 0 : i64, scratch_operands = 0 : i64, tpu.core_type = #tpu.core_type<tc>, window_params = [{transform_indices = @transform_0, window_bounds = array<i64: 4, 16, 128>}, {pipeline_mode = #tpu.pipeline_mode<synchronous>, transform_indices = @transform_1, window_bounds = array<i64: 32, 400>}, {pipeline_mode = #tpu.pipeline_mode<synchronous>, transform_indices = @transform_2, window_bounds = array<i64: 32, 1>}, {transform_indices = @transform_3, window_bounds = array<i64: 32, 128>}]} {
    %c0 = arith.constant 0 : index
    %c0_0 = arith.constant 0 : index
    %0 = vector.load %arg2[%c0, %c0_0] : memref<32x400xbf16, #tpu.memory_space<vmem>>, vector<32x400xbf16>
    %c0_1 = arith.constant 0 : index
    %c0_2 = arith.constant 0 : index
    %1 = vector.load %arg3[%c0_1, %c0_2] : memref<32x1xf32, #tpu.memory_space<vmem>>, vector<32x1xf32>
    %c0_3 = arith.constant 0 : index
    %c0_4 = arith.constant 0 : index
    %c0_5 = arith.constant 0 : index
    %2 = vector.load %arg1[%c0_3, %c0_4, %c0_5] : memref<4x16x128xbf16, #tpu.memory_space<vmem>>, vector<1x16x108xbf16>
    %3 = vector.shape_cast %2 : vector<1x16x108xbf16> to vector<16x108xbf16>
    %c1 = arith.constant 1 : index
    %c0_6 = arith.constant 0 : index
    %c0_7 = arith.constant 0 : index
    %4 = vector.load %arg1[%c1, %c0_6, %c0_7] : memref<4x16x128xbf16, #tpu.memory_space<vmem>>, vector<1x16x108xbf16>
    %5 = vector.shape_cast %4 : vector<1x16x108xbf16> to vector<16x108xbf16>
    %c0_8 = arith.constant 0 : index
    %c0_9 = arith.constant 0 : index
    %c1_10 = arith.constant 1 : index
    %6 = vector.load %arg1[%c0_8, %c0_9, %c1_10] : memref<4x16x128xbf16, #tpu.memory_space<vmem>>, vector<1x16x108xbf16>
    %7 = vector.shape_cast %6 : vector<1x16x108xbf16> to vector<16x108xbf16>
    %c1_11 = arith.constant 1 : index
    %c0_12 = arith.constant 0 : index
    %c1_13 = arith.constant 1 : index
    %8 = vector.load %arg1[%c1_11, %c0_12, %c1_13] : memref<4x16x128xbf16, #tpu.memory_space<vmem>>, vector<1x16x108xbf16>
    %9 = vector.shape_cast %8 : vector<1x16x108xbf16> to vector<16x108xbf16>
    %c0_14 = arith.constant 0 : index
    %c0_15 = arith.constant 0 : index
    %c2 = arith.constant 2 : index
    %10 = vector.load %arg1[%c0_14, %c0_15, %c2] : memref<4x16x128xbf16, #tpu.memory_space<vmem>>, vector<1x16x108xbf16>
    %11 = vector.shape_cast %10 : vector<1x16x108xbf16> to vector<16x108xbf16>
    %c2_16 = arith.constant 2 : index
    %c0_17 = arith.constant 0 : index
    %c0_18 = arith.constant 0 : index
    %12 = vector.load %arg1[%c2_16, %c0_17, %c0_18] : memref<4x16x128xbf16, #tpu.memory_space<vmem>>, vector<1x16x108xbf16>
    %13 = vector.shape_cast %12 : vector<1x16x108xbf16> to vector<16x108xbf16>
    %c3 = arith.constant 3 : index
    %c0_19 = arith.constant 0 : index
    %c0_20 = arith.constant 0 : index
    %14 = vector.load %arg1[%c3, %c0_19, %c0_20] : memref<4x16x128xbf16, #tpu.memory_space<vmem>>, vector<1x16x108xbf16>
    %15 = vector.shape_cast %14 : vector<1x16x108xbf16> to vector<16x108xbf16>
    %c2_21 = arith.constant 2 : index
    %c0_22 = arith.constant 0 : index
    %c1_23 = arith.constant 1 : index
    %16 = vector.load %arg1[%c2_21, %c0_22, %c1_23] : memref<4x16x128xbf16, #tpu.memory_space<vmem>>, vector<1x16x108xbf16>
    %17 = vector.shape_cast %16 : vector<1x16x108xbf16> to vector<16x108xbf16>
    %c3_24 = arith.constant 3 : index
    %c0_25 = arith.constant 0 : index
    %c1_26 = arith.constant 1 : index
    %18 = vector.load %arg1[%c3_24, %c0_25, %c1_26] : memref<4x16x128xbf16, #tpu.memory_space<vmem>>, vector<1x16x108xbf16>
    %19 = vector.shape_cast %18 : vector<1x16x108xbf16> to vector<16x108xbf16>
    %c2_27 = arith.constant 2 : index
    %c0_28 = arith.constant 0 : index
    %c2_29 = arith.constant 2 : index
    %20 = vector.load %arg1[%c2_27, %c0_28, %c2_29] : memref<4x16x128xbf16, #tpu.memory_space<vmem>>, vector<1x16x108xbf16>
    %21 = vector.shape_cast %20 : vector<1x16x108xbf16> to vector<16x108xbf16>
    %c0_30 = arith.constant 0 : index
    %c0_31 = arith.constant 0 : index
    %c9 = arith.constant 9 : index
    %22 = vector.load %arg1[%c0_30, %c0_31, %c9] : memref<4x16x128xbf16, #tpu.memory_space<vmem>>, vector<1x16x108xbf16>
    %23 = vector.shape_cast %22 : vector<1x16x108xbf16> to vector<16x108xbf16>
    %c1_32 = arith.constant 1 : index
    %c0_33 = arith.constant 0 : index
    %c9_34 = arith.constant 9 : index
    %24 = vector.load %arg1[%c1_32, %c0_33, %c9_34] : memref<4x16x128xbf16, #tpu.memory_space<vmem>>, vector<1x16x108xbf16>
    %25 = vector.shape_cast %24 : vector<1x16x108xbf16> to vector<16x108xbf16>
    %c0_35 = arith.constant 0 : index
    %c0_36 = arith.constant 0 : index
    %c10 = arith.constant 10 : index
    %26 = vector.load %arg1[%c0_35, %c0_36, %c10] : memref<4x16x128xbf16, #tpu.memory_space<vmem>>, vector<1x16x108xbf16>
    %27 = vector.shape_cast %26 : vector<1x16x108xbf16> to vector<16x108xbf16>
    %c1_37 = arith.constant 1 : index
    %c0_38 = arith.constant 0 : index
    %c10_39 = arith.constant 10 : index
    %28 = vector.load %arg1[%c1_37, %c0_38, %c10_39] : memref<4x16x128xbf16, #tpu.memory_space<vmem>>, vector<1x16x108xbf16>
    %29 = vector.shape_cast %28 : vector<1x16x108xbf16> to vector<16x108xbf16>
    %c0_40 = arith.constant 0 : index
    %c0_41 = arith.constant 0 : index
    %c11 = arith.constant 11 : index
    %30 = vector.load %arg1[%c0_40, %c0_41, %c11] : memref<4x16x128xbf16, #tpu.memory_space<vmem>>, vector<1x16x108xbf16>
    %31 = vector.shape_cast %30 : vector<1x16x108xbf16> to vector<16x108xbf16>
    %c2_42 = arith.constant 2 : index
    %c0_43 = arith.constant 0 : index
    %c9_44 = arith.constant 9 : index
    %32 = vector.load %arg1[%c2_42, %c0_43, %c9_44] : memref<4x16x128xbf16, #tpu.memory_space<vmem>>, vector<1x16x108xbf16>
    %33 = vector.shape_cast %32 : vector<1x16x108xbf16> to vector<16x108xbf16>
    %c3_45 = arith.constant 3 : index
    %c0_46 = arith.constant 0 : index
    %c9_47 = arith.constant 9 : index
    %34 = vector.load %arg1[%c3_45, %c0_46, %c9_47] : memref<4x16x128xbf16, #tpu.memory_space<vmem>>, vector<1x16x108xbf16>
    %35 = vector.shape_cast %34 : vector<1x16x108xbf16> to vector<16x108xbf16>
    %c2_48 = arith.constant 2 : index
    %c0_49 = arith.constant 0 : index
    %c10_50 = arith.constant 10 : index
    %36 = vector.load %arg1[%c2_48, %c0_49, %c10_50] : memref<4x16x128xbf16, #tpu.memory_space<vmem>>, vector<1x16x108xbf16>
    %37 = vector.shape_cast %36 : vector<1x16x108xbf16> to vector<16x108xbf16>
    %c3_51 = arith.constant 3 : index
    %c0_52 = arith.constant 0 : index
    %c10_53 = arith.constant 10 : index
    %38 = vector.load %arg1[%c3_51, %c0_52, %c10_53] : memref<4x16x128xbf16, #tpu.memory_space<vmem>>, vector<1x16x108xbf16>
    %39 = vector.shape_cast %38 : vector<1x16x108xbf16> to vector<16x108xbf16>
    %c2_54 = arith.constant 2 : index
    %c0_55 = arith.constant 0 : index
    %c11_56 = arith.constant 11 : index
    %40 = vector.load %arg1[%c2_54, %c0_55, %c11_56] : memref<4x16x128xbf16, #tpu.memory_space<vmem>>, vector<1x16x108xbf16>
    %41 = vector.shape_cast %40 : vector<1x16x108xbf16> to vector<16x108xbf16>
    %c0_57 = arith.constant 0 : index
    %c0_58 = arith.constant 0 : index
    %c18 = arith.constant 18 : index
    %42 = vector.load %arg1[%c0_57, %c0_58, %c18] : memref<4x16x128xbf16, #tpu.memory_space<vmem>>, vector<1x16x108xbf16>
    %43 = vector.shape_cast %42 : vector<1x16x108xbf16> to vector<16x108xbf16>
    %c1_59 = arith.constant 1 : index
    %c0_60 = arith.constant 0 : index
    %c18_61 = arith.constant 18 : index
    %44 = vector.load %arg1[%c1_59, %c0_60, %c18_61] : memref<4x16x128xbf16, #tpu.memory_space<vmem>>, vector<1x16x108xbf16>
    %45 = vector.shape_cast %44 : vector<1x16x108xbf16> to vector<16x108xbf16>
    %c0_62 = arith.constant 0 : index
    %c0_63 = arith.constant 0 : index
    %c19 = arith.constant 19 : index
    %46 = vector.load %arg1[%c0_62, %c0_63, %c19] : memref<4x16x128xbf16, #tpu.memory_space<vmem>>, vector<1x16x108xbf16>
    %47 = vector.shape_cast %46 : vector<1x16x108xbf16> to vector<16x108xbf16>
    %c1_64 = arith.constant 1 : index
    %c0_65 = arith.constant 0 : index
    %c19_66 = arith.constant 19 : index
    %48 = vector.load %arg1[%c1_64, %c0_65, %c19_66] : memref<4x16x128xbf16, #tpu.memory_space<vmem>>, vector<1x16x108xbf16>
    %49 = vector.shape_cast %48 : vector<1x16x108xbf16> to vector<16x108xbf16>
    %c0_67 = arith.constant 0 : index
    %c0_68 = arith.constant 0 : index
    %c20 = arith.constant 20 : index
    %50 = vector.load %arg1[%c0_67, %c0_68, %c20] : memref<4x16x128xbf16, #tpu.memory_space<vmem>>, vector<1x16x108xbf16>
    %51 = vector.shape_cast %50 : vector<1x16x108xbf16> to vector<16x108xbf16>
    %52 = tpu.concatenate %3, %5, %7, %9, %11, %13, %15, %17, %19, %21, %23, %25, %27, %29, %31, %33 in 0 : vector<16x108xbf16>, vector<16x108xbf16>, vector<16x108xbf16>, vector<16x108xbf16>, vector<16x108xbf16>, vector<16x108xbf16>, vector<16x108xbf16>, vector<16x108xbf16>, vector<16x108xbf16>, vector<16x108xbf16>, vector<16x108xbf16>, vector<16x108xbf16>, vector<16x108xbf16>, vector<16x108xbf16>, vector<16x108xbf16>, vector<16x108xbf16> -> vector<256x108xbf16>
    %53 = tpu.concatenate %35, %37, %39, %41, %43, %45, %47, %49, %51 in 0 : vector<16x108xbf16>, vector<16x108xbf16>, vector<16x108xbf16>, vector<16x108xbf16>, vector<16x108xbf16>, vector<16x108xbf16>, vector<16x108xbf16>, vector<16x108xbf16>, vector<16x108xbf16> -> vector<144x108xbf16>
    %54 = tpu.concatenate %52, %53 in 0 : vector<256x108xbf16>, vector<144x108xbf16> -> vector<400x108xbf16>
    %cst = arith.constant dense<0.000000e+00> : vector<32x108xf32>
    %55 = tpu.matmul %0, %54, %cst {dimension_numbers = #tpu.dot_dimension_numbers<[1], [0], [0], [1], [0, 0, 1, 1], [], []>} : vector<32x400xbf16>, vector<400x108xbf16>, vector<32x108xf32> -> vector<32x108xf32>
    %56 = vector.broadcast %1 : vector<32x1xf32> to vector<32x108xf32>
    %57 = arith.addf %55, %56 : vector<32x108xf32>
    %cst_69 = arith.constant 0.000000e+00 : f32
    %58 = vector.broadcast %cst_69 : f32 to vector<32x108xf32>
    %59 = arith.maximumf %57, %58 : vector<32x108xf32>
    %c1_70 = arith.constant 1 : index
    %c0_71 = arith.constant 0 : index
    %c2_72 = arith.constant 2 : index
    %60 = vector.load %arg1[%c1_70, %c0_71, %c2_72] : memref<4x16x128xbf16, #tpu.memory_space<vmem>>, vector<1x16x108xbf16>
    %61 = vector.shape_cast %60 : vector<1x16x108xbf16> to vector<16x108xbf16>
    %c3_73 = arith.constant 3 : index
    %c0_74 = arith.constant 0 : index
    %c2_75 = arith.constant 2 : index
    %62 = vector.load %arg1[%c3_73, %c0_74, %c2_75] : memref<4x16x128xbf16, #tpu.memory_space<vmem>>, vector<1x16x108xbf16>
    %63 = vector.shape_cast %62 : vector<1x16x108xbf16> to vector<16x108xbf16>
    %c1_76 = arith.constant 1 : index
    %c0_77 = arith.constant 0 : index
    %c11_78 = arith.constant 11 : index
    %64 = vector.load %arg1[%c1_76, %c0_77, %c11_78] : memref<4x16x128xbf16, #tpu.memory_space<vmem>>, vector<1x16x108xbf16>
    %65 = vector.shape_cast %64 : vector<1x16x108xbf16> to vector<16x108xbf16>
    %c3_79 = arith.constant 3 : index
    %c0_80 = arith.constant 0 : index
    %c11_81 = arith.constant 11 : index
    %66 = vector.load %arg1[%c3_79, %c0_80, %c11_81] : memref<4x16x128xbf16, #tpu.memory_space<vmem>>, vector<1x16x108xbf16>
    %67 = vector.shape_cast %66 : vector<1x16x108xbf16> to vector<16x108xbf16>
    %c1_82 = arith.constant 1 : index
    %c0_83 = arith.constant 0 : index
    %c20_84 = arith.constant 20 : index
    %68 = vector.load %arg1[%c1_82, %c0_83, %c20_84] : memref<4x16x128xbf16, #tpu.memory_space<vmem>>, vector<1x16x108xbf16>
    %69 = vector.shape_cast %68 : vector<1x16x108xbf16> to vector<16x108xbf16>
    %70 = tpu.concatenate %5, %7, %9, %11, %61, %15, %17, %19, %21, %63, %25, %27, %29, %31, %65, %35 in 0 : vector<16x108xbf16>, vector<16x108xbf16>, vector<16x108xbf16>, vector<16x108xbf16>, vector<16x108xbf16>, vector<16x108xbf16>, vector<16x108xbf16>, vector<16x108xbf16>, vector<16x108xbf16>, vector<16x108xbf16>, vector<16x108xbf16>, vector<16x108xbf16>, vector<16x108xbf16>, vector<16x108xbf16>, vector<16x108xbf16>, vector<16x108xbf16> -> vector<256x108xbf16>
    %71 = tpu.concatenate %37, %39, %41, %67, %45, %47, %49, %51, %69 in 0 : vector<16x108xbf16>, vector<16x108xbf16>, vector<16x108xbf16>, vector<16x108xbf16>, vector<16x108xbf16>, vector<16x108xbf16>, vector<16x108xbf16>, vector<16x108xbf16>, vector<16x108xbf16> -> vector<144x108xbf16>
    %72 = tpu.concatenate %70, %71 in 0 : vector<256x108xbf16>, vector<144x108xbf16> -> vector<400x108xbf16>
    %cst_85 = arith.constant dense<0.000000e+00> : vector<32x108xf32>
    %73 = tpu.matmul %0, %72, %cst_85 {dimension_numbers = #tpu.dot_dimension_numbers<[1], [0], [0], [1], [0, 0, 1, 1], [], []>} : vector<32x400xbf16>, vector<400x108xbf16>, vector<32x108xf32> -> vector<32x108xf32>
    %74 = vector.broadcast %1 : vector<32x1xf32> to vector<32x108xf32>
    %75 = arith.addf %73, %74 : vector<32x108xf32>
    %cst_86 = arith.constant 0.000000e+00 : f32
    %76 = vector.broadcast %cst_86 : f32 to vector<32x108xf32>
    %77 = arith.maximumf %75, %76 : vector<32x108xf32>
    %78 = arith.maximumf %59, %77 : vector<32x108xf32>
    %c2_87 = arith.constant 2 : index
    %c0_88 = arith.constant 0 : index
    %c18_89 = arith.constant 18 : index
    %79 = vector.load %arg1[%c2_87, %c0_88, %c18_89] : memref<4x16x128xbf16, #tpu.memory_space<vmem>>, vector<1x16x108xbf16>
    %80 = vector.shape_cast %79 : vector<1x16x108xbf16> to vector<16x108xbf16>
    %c3_90 = arith.constant 3 : index
    %c0_91 = arith.constant 0 : index
    %c18_92 = arith.constant 18 : index
    %81 = vector.load %arg1[%c3_90, %c0_91, %c18_92] : memref<4x16x128xbf16, #tpu.memory_space<vmem>>, vector<1x16x108xbf16>
    %82 = vector.shape_cast %81 : vector<1x16x108xbf16> to vector<16x108xbf16>
    %c2_93 = arith.constant 2 : index
    %c0_94 = arith.constant 0 : index
    %c19_95 = arith.constant 19 : index
    %83 = vector.load %arg1[%c2_93, %c0_94, %c19_95] : memref<4x16x128xbf16, #tpu.memory_space<vmem>>, vector<1x16x108xbf16>
    %84 = vector.shape_cast %83 : vector<1x16x108xbf16> to vector<16x108xbf16>
    %c3_96 = arith.constant 3 : index
    %c0_97 = arith.constant 0 : index
    %c19_98 = arith.constant 19 : index
    %85 = vector.load %arg1[%c3_96, %c0_97, %c19_98] : memref<4x16x128xbf16, #tpu.memory_space<vmem>>, vector<1x16x108xbf16>
    %86 = vector.shape_cast %85 : vector<1x16x108xbf16> to vector<16x108xbf16>
    %c2_99 = arith.constant 2 : index
    %c0_100 = arith.constant 0 : index
    %c20_101 = arith.constant 20 : index
    %87 = vector.load %arg1[%c2_99, %c0_100, %c20_101] : memref<4x16x128xbf16, #tpu.memory_space<vmem>>, vector<1x16x108xbf16>
    %88 = vector.shape_cast %87 : vector<1x16x108xbf16> to vector<16x108xbf16>
    %89 = tpu.concatenate %13, %15, %17, %19, %21, %23, %25, %27, %29, %31, %33, %35, %37, %39, %41, %43 in 0 : vector<16x108xbf16>, vector<16x108xbf16>, vector<16x108xbf16>, vector<16x108xbf16>, vector<16x108xbf16>, vector<16x108xbf16>, vector<16x108xbf16>, vector<16x108xbf16>, vector<16x108xbf16>, vector<16x108xbf16>, vector<16x108xbf16>, vector<16x108xbf16>, vector<16x108xbf16>, vector<16x108xbf16>, vector<16x108xbf16>, vector<16x108xbf16> -> vector<256x108xbf16>
    %90 = tpu.concatenate %45, %47, %49, %51, %80, %82, %84, %86, %88 in 0 : vector<16x108xbf16>, vector<16x108xbf16>, vector<16x108xbf16>, vector<16x108xbf16>, vector<16x108xbf16>, vector<16x108xbf16>, vector<16x108xbf16>, vector<16x108xbf16>, vector<16x108xbf16> -> vector<144x108xbf16>
    %91 = tpu.concatenate %89, %90 in 0 : vector<256x108xbf16>, vector<144x108xbf16> -> vector<400x108xbf16>
    %cst_102 = arith.constant dense<0.000000e+00> : vector<32x108xf32>
    %92 = tpu.matmul %0, %91, %cst_102 {dimension_numbers = #tpu.dot_dimension_numbers<[1], [0], [0], [1], [0, 0, 1, 1], [], []>} : vector<32x400xbf16>, vector<400x108xbf16>, vector<32x108xf32> -> vector<32x108xf32>
    %93 = vector.broadcast %1 : vector<32x1xf32> to vector<32x108xf32>
    %94 = arith.addf %92, %93 : vector<32x108xf32>
    %cst_103 = arith.constant 0.000000e+00 : f32
    %95 = vector.broadcast %cst_103 : f32 to vector<32x108xf32>
    %96 = arith.maximumf %94, %95 : vector<32x108xf32>
    %97 = arith.maximumf %78, %96 : vector<32x108xf32>
    %c3_104 = arith.constant 3 : index
    %c0_105 = arith.constant 0 : index
    %c20_106 = arith.constant 20 : index
    %98 = vector.load %arg1[%c3_104, %c0_105, %c20_106] : memref<4x16x128xbf16, #tpu.memory_space<vmem>>, vector<1x16x108xbf16>
    %99 = vector.shape_cast %98 : vector<1x16x108xbf16> to vector<16x108xbf16>
    %100 = tpu.concatenate %15, %17, %19, %21, %63, %25, %27, %29, %31, %65, %35, %37, %39, %41, %67, %45 in 0 : vector<16x108xbf16>, vector<16x108xbf16>, vector<16x108xbf16>, vector<16x108xbf16>, vector<16x108xbf16>, vector<16x108xbf16>, vector<16x108xbf16>, vector<16x108xbf16>, vector<16x108xbf16>, vector<16x108xbf16>, vector<16x108xbf16>, vector<16x108xbf16>, vector<16x108xbf16>, vector<16x108xbf16>, vector<16x108xbf16>, vector<16x108xbf16> -> vector<256x108xbf16>
    %101 = tpu.concatenate %47, %49, %51, %69, %82, %84, %86, %88, %99 in 0 : vector<16x108xbf16>, vector<16x108xbf16>, vector<16x108xbf16>, vector<16x108xbf16>, vector<16x108xbf16>, vector<16x108xbf16>, vector<16x108xbf16>, vector<16x108xbf16>, vector<16x108xbf16> -> vector<144x108xbf16>
    %102 = tpu.concatenate %100, %101 in 0 : vector<256x108xbf16>, vector<144x108xbf16> -> vector<400x108xbf16>
    %cst_107 = arith.constant dense<0.000000e+00> : vector<32x108xf32>
    %103 = tpu.matmul %0, %102, %cst_107 {dimension_numbers = #tpu.dot_dimension_numbers<[1], [0], [0], [1], [0, 0, 1, 1], [], []>} : vector<32x400xbf16>, vector<400x108xbf16>, vector<32x108xf32> -> vector<32x108xf32>
    %104 = vector.broadcast %1 : vector<32x1xf32> to vector<32x108xf32>
    %105 = arith.addf %103, %104 : vector<32x108xf32>
    %cst_108 = arith.constant 0.000000e+00 : f32
    %106 = vector.broadcast %cst_108 : f32 to vector<32x108xf32>
    %107 = arith.maximumf %105, %106 : vector<32x108xf32>
    %108 = arith.maximumf %97, %107 : vector<32x108xf32>
    %c0_109 = arith.constant 0 : index
    %c0_110 = arith.constant 0 : index
    %109 = vector.load %arg4[%c0_109, %c0_110] : memref<32x128xf32, #tpu.memory_space<vmem>>, vector<32x108xf32>
    tpu.vector_store %arg4[%c0_109, %c0_110], %108 {strides = array<i32>} : memref<32x128xf32, #tpu.memory_space<vmem>>, vector<32x108xf32>,
    %cst_111 = arith.constant 0.000000e+00 : f32
    %110 = vector.broadcast %cst_111 : f32 to vector<32x20xf32>
    %c0_112 = arith.constant 0 : index
    %c108 = arith.constant 108 : index
    %111 = vector.load %arg4[%c0_112, %c108] : memref<32x128xf32, #tpu.memory_space<vmem>>, vector<32x20xf32>
    tpu.vector_store %arg4[%c0_112, %c108], %110 {strides = array<i32>} : memref<32x128xf32, #tpu.memory_space<vmem>>, vector<32x20xf32>,
    return
  }
  func.func @transform_0(%arg0: i32) -> (i32, i32, i32) {
    %c0_i32 = arith.constant 0 : i32
    %c0_i32_0 = arith.constant 0 : i32
    %c0_i32_1 = arith.constant 0 : i32
    return %c0_i32, %c0_i32_0, %arg0 : i32, i32, i32
  }
  func.func @transform_1(%arg0: i32) -> (i32, i32) {
    %c0_i32 = arith.constant 0 : i32
    %c0_i32_0 = arith.constant 0 : i32
    %c0_i32_1 = arith.constant 0 : i32
    return %c0_i32, %c0_i32_0 : i32, i32
  }
  func.func @transform_2(%arg0: i32) -> (i32, i32) {
    %c0_i32 = arith.constant 0 : i32
    %c0_i32_0 = arith.constant 0 : i32
    %c0_i32_1 = arith.constant 0 : i32
    return %c0_i32, %c0_i32_0 : i32, i32
  }
  func.func @transform_3(%arg0: i32) -> (i32, i32) {
    %c0_i32 = arith.constant 0 : i32
    %c0_i32_0 = arith.constant 0 : i32
    return %c0_i32, %arg0 : i32, i32
  }
}

module attributes {stable_mosaic.version = 11 : i64} {
  func.func @_linear_kernel(%arg0: i32, %arg1: memref<8x1568xbf16, #tpu.memory_space<vmem>>, %arg2: memref<1568x128xbf16, #tpu.memory_space<vmem>>, %arg3: memref<1x128xf32, #tpu.memory_space<vmem>>, %arg4: memref<8x128xf32, #tpu.memory_space<vmem>>) attributes {dimension_semantics = [#tpu.dimension_semantics<parallel>], iteration_bounds = array<i64: 1>, scalar_prefetch = 0 : i64, scratch_operands = 0 : i64, tpu.core_type = #tpu.core_type<tc>, window_params = [{transform_indices = @transform_0, window_bounds = array<i64: 8, 1568>}, {pipeline_mode = #tpu.pipeline_mode<synchronous>, transform_indices = @transform_1, window_bounds = array<i64: 1568, 128>}, {pipeline_mode = #tpu.pipeline_mode<synchronous>, transform_indices = @transform_2, window_bounds = array<i64: 1, 128>}, {transform_indices = @transform_3, window_bounds = array<i64: 8, 128>}]} {
    %c0 = arith.constant 0 : index
    %c0_0 = arith.constant 0 : index
    %0 = vector.load %arg1[%c0, %c0_0] : memref<8x1568xbf16, #tpu.memory_space<vmem>>, vector<8x1568xbf16>
    %c0_1 = arith.constant 0 : index
    %c0_2 = arith.constant 0 : index
    %1 = vector.load %arg2[%c0_1, %c0_2] : memref<1568x128xbf16, #tpu.memory_space<vmem>>, vector<1568x128xbf16>
    %cst = arith.constant dense<0.000000e+00> : vector<8x128xf32>
    %2 = tpu.matmul %0, %1, %cst {dimension_numbers = #tpu.dot_dimension_numbers<[1], [0], [0], [1], [0, 0, 1, 1], [], []>} : vector<8x1568xbf16>, vector<1568x128xbf16>, vector<8x128xf32> -> vector<8x128xf32>
    %c0_3 = arith.constant 0 : index
    %c0_4 = arith.constant 0 : index
    %3 = vector.load %arg3[%c0_3, %c0_4] : memref<1x128xf32, #tpu.memory_space<vmem>>, vector<1x128xf32>
    %4 = vector.broadcast %3 : vector<1x128xf32> to vector<8x128xf32>
    %5 = arith.addf %2, %4 : vector<8x128xf32>
    %c0_5 = arith.constant 0 : index
    %c0_6 = arith.constant 0 : index
    %6 = vector.load %arg4[%c0_5, %c0_6] : memref<8x128xf32, #tpu.memory_space<vmem>>, vector<8x128xf32>
    tpu.vector_store %arg4[%c0_5, %c0_6], %5 {strides = array<i32>} : memref<8x128xf32, #tpu.memory_space<vmem>>, vector<8x128xf32>,
    return
  }
  func.func @transform_0(%arg0: i32) -> (i32, i32) {
    %c0_i32 = arith.constant 0 : i32
    %c0_i32_0 = arith.constant 0 : i32
    return %arg0, %c0_i32 : i32, i32
  }
  func.func @transform_1(%arg0: i32) -> (i32, i32) {
    %c0_i32 = arith.constant 0 : i32
    %c0_i32_0 = arith.constant 0 : i32
    %c0_i32_1 = arith.constant 0 : i32
    return %c0_i32, %c0_i32_0 : i32, i32
  }
  func.func @transform_2(%arg0: i32) -> (i32, i32) {
    %c0_i32 = arith.constant 0 : i32
    %c0_i32_0 = arith.constant 0 : i32
    %c0_i32_1 = arith.constant 0 : i32
    return %c0_i32, %c0_i32_0 : i32, i32
  }
  func.func @transform_3(%arg0: i32) -> (i32, i32) {
    %c0_i32 = arith.constant 0 : i32
    %c0_i32_0 = arith.constant 0 : i32
    return %arg0, %c0_i32 : i32, i32
  }
}

</mosaic_0001>

<llo_original>
// kernel: cnn_forward.3
$region0: #{cnn_forward.3}
  #allocation0 [shape = 'u32[]', space=smem, size = 0x4, offset = 0x4, fixed_abs, tag = 'smem constant byte address 0x4 - core index']
  #allocation1 [shape = 'u32[144,128]{1,0:T(1,128)}', space=vmem, size = 0x12000, scoped, tag = 'internal scratch']
  %s0 = inlined_call_operand.vmem [shape: bf16[4,1,512], index: 0, kind: input, shape index: {}]
  %s1 = inlined_call_operand.vmem [shape: bf16[16,25], index: 1, kind: input, shape index: {}]
  %s2 = inlined_call_operand.vmem [shape: f32[16,1], index: 2, kind: input, shape index: {}]
  %s3 = inlined_call_operand.vmem [shape: bf16[16,512], index: 3, kind: output, shape index: {}]
  %s4 = sld [smem:[#allocation0]]
  $region120: #{cnn_forward.3} parent=0
    _
  %s6 = ssub.s32 1, %s4
  %s7 = scalar_select 0, %s6, %s4
  $region1: #{cnn_forward.3} parent=0
    #allocation2 [shape = 'u8[8192]{0}', space=vmem, size = 0x2000, scoped, tag = 'input window, operand 0']
    #allocation3 [shape = 'u8[16384]{0}', space=vmem, size = 0x4000, scoped, tag = 'output window, operand 0']
    loop: start=0, step=1, limit=4
    $region2: #{cnn_forward.3} parent=1 // loop_pre_header
      _
    $region3: #{cnn_forward.3} parent=1 // loop_header
      %s9 = sphi 0, %s13
      %p10 = scmp.ge.s32.totalorder %s9, 4
      %s19 = sphi 0, %s21
      %s22 = sphi 0, %s19
      %s23 = sphi 0, %s22
      %s39 = sphi 0, %s23
      %s43 = sphi 0, %s43
      %s45 = sphi 0, %s43
      %s46 = sphi 0, %s45
      %s60 = sphi 0, %s46
      %s64 = sphi 0, %s64
      %s66 = sphi 0, %s64
      %s67 = sphi 0, %s66
      %s81 = sphi 0, %s67
      %s87 = sphi 0, %s89
      %s90 = sphi 0, %s87
      %s91 = sphi 0, %s90
      %s107 = sphi 0, %s91
    $region4: #{cnn_forward.3} parent=1 // loop_header_branch
      %12 = sbr.rel (%p10) target = $region8
    $region5: #{cnn_forward.3} parent=1 // loop_body
      %s14 = ssub.s32 %s9, 1
      %s15 = ssub.s32 %s9, 2
      %s16 = sadd.s32 %s9, 1
      %s17 = ssub.s32 %s9, %s16
      %p18 = scmp.eq.s32.totalorder %s17, 0
      %s20 = sadd.s32 %s19, 1
      %s21 = scalar_select %p18, %s19, %s20
      %p24 = pneg %p18
      %p25 = scmp.eq.s32.totalorder %s9, 1
      %p26 = por %p24, %p25
      %p27 = scmp.ne.s32.totalorder %s19, %s22
      %p28 = scmp.eq.s32.totalorder %s9, 0
      %p29 = por %p27, %p28
      %p30 = scmp.ne.s32.totalorder %s19, %s22
      %p31 = scmp.eq.s32.totalorder %s14, 1
      %p32 = por %p30, %p31
      %p33 = scmp.ne.s32.totalorder %s22, %s23
      %p34 = scmp.eq.s32.totalorder %s14, 0
      %p35 = por %p33, %p34
      %p36 = scmp.ne.s32.totalorder %s22, %s23
      %p37 = scmp.eq.s32.totalorder %s15, 1
      %p38 = por %p36, %p37
      %p40 = scmp.ne.s32.totalorder %s23, %s39
      %p41 = scmp.eq.s32.totalorder %s15, 0
      %p42 = por %p40, %p41
      %s44 = sadd.s32 %s43, 1
      %p47 = scmp.eq.s32.totalorder %s9, 1
      %p48 = scmp.ne.s32.totalorder %s43, %s45
      %p49 = scmp.eq.s32.totalorder %s9, 0
      %p50 = por %p48, %p49
      %p51 = scmp.ne.s32.totalorder %s43, %s45
      %p52 = scmp.eq.s32.totalorder %s14, 1
      %p53 = por %p51, %p52
      %p54 = scmp.ne.s32.totalorder %s45, %s46
      %p55 = scmp.eq.s32.totalorder %s14, 0
      %p56 = por %p54, %p55
      %p57 = scmp.ne.s32.totalorder %s45, %s46
      %p58 = scmp.eq.s32.totalorder %s15, 1
      %p59 = por %p57, %p58
      %p61 = scmp.ne.s32.totalorder %s46, %s60
      %p62 = scmp.eq.s32.totalorder %s15, 0
      %p63 = por %p61, %p62
      %s65 = sadd.s32 %s64, 1
      %p68 = scmp.eq.s32.totalorder %s9, 1
      %p69 = scmp.ne.s32.totalorder %s64, %s66
      %p70 = scmp.eq.s32.totalorder %s9, 0
      %p71 = por %p69, %p70
      %p72 = scmp.ne.s32.totalorder %s64, %s66
      %p73 = scmp.eq.s32.totalorder %s14, 1
      %p74 = por %p72, %p73
      %p75 = scmp.ne.s32.totalorder %s66, %s67
      %p76 = scmp.eq.s32.totalorder %s14, 0
      %p77 = por %p75, %p76
      %p78 = scmp.ne.s32.totalorder %s66, %s67
      %p79 = scmp.eq.s32.totalorder %s15, 1
      %p80 = por %p78, %p79
      %p82 = scmp.ne.s32.totalorder %s67, %s81
      %p83 = scmp.eq.s32.totalorder %s15, 0
      %p84 = por %p82, %p83
      %s85 = ssub.s32 %s9, %s16
      %p86 = scmp.eq.s32.totalorder %s85, 0
      %s88 = sadd.s32 %s87, 1
      %s89 = scalar_select %p86, %s87, %s88
      %p92 = pneg %p86
      %p93 = scmp.eq.s32.totalorder %s9, 1
      %p94 = por %p92, %p93
      %p95 = scmp.ne.s32.totalorder %s87, %s90
      %p96 = scmp.eq.s32.totalorder %s9, 0
      %p97 = por %p95, %p96
      %p98 = scmp.ne.s32.totalorder %s87, %s90
      %p99 = scmp.eq.s32.totalorder %s14, 1
      %p100 = por %p98, %p99
      %p101 = scmp.ne.s32.totalorder %s90, %s91
      %p102 = scmp.eq.s32.totalorder %s14, 0
      %p103 = por %p101, %p102
      %p104 = scmp.ne.s32.totalorder %s90, %s91
      %p105 = scmp.eq.s32.totalorder %s15, 1
      %p106 = por %p104, %p105
      %p108 = scmp.ne.s32.totalorder %s91, %s107
      %p109 = scmp.eq.s32.totalorder %s15, 0
      %p110 = por %p108, %p109
      %p111 = scmp.le.s32.totalorder 1, %s9
      %p112 = scmp.lt.s32.totalorder %s9, 3
      %p113 = pnand %p111, %p112
      %p114 = pneg %p113
      // Predicated region
      $region9: #{cnn_forward.3} parent=5 // pred_check
        _
      $region10: #{cnn_forward.3} parent=5 // pred_check_branch
        %116 = sbr.rel (%p113) target = $region12
      $region11: #{cnn_forward.3} parent=5 // pred_region
        %s117 = ssub.s32 %s9, 1
        // Predicated region
        $region13: #{cnn_forward.3} parent=11 // pred_check
          %p118 = pneg %p56
        $region14: #{cnn_forward.3} parent=11 // pred_check_branch
          %120 = sbr.rel (%p118) target = $region16
        $region15: #{cnn_forward.3} parent=11 // pred_region
          _
        $region16: #{cnn_forward.3} parent=11 // pred_fallthru
          _
        // Predicated region
        $region17: #{cnn_forward.3} parent=11 // pred_check
          %p121 = pneg %p77
        $region18: #{cnn_forward.3} parent=11 // pred_check_branch
          %123 = sbr.rel (%p121) target = $region20
        $region19: #{cnn_forward.3} parent=11 // pred_region
          _
        $region20: #{cnn_forward.3} parent=11 // pred_fallthru
          _
      $region12: #{cnn_forward.3} parent=5 // pred_fallthru
        _
      %p124 = scmp.lt.s32.totalorder %s9, 2
      // Predicated region
      $region21: #{cnn_forward.3} parent=5 // pred_check
        %p125 = pneg %p124
      $region22: #{cnn_forward.3} parent=5 // pred_check_branch
        %127 = sbr.rel (%p125) target = $region24
      $region23: #{cnn_forward.3} parent=5 // pred_region
        // Predicated region
        $region25: #{cnn_forward.3} parent=23 // pred_check
          %p128 = pneg %p29
        $region26: #{cnn_forward.3} parent=23 // pred_check_branch
          %130 = sbr.rel (%p128) target = $region28
        $region27: #{cnn_forward.3} parent=23 // pred_region
          %s131 = sand.u32 %s19, 1
          %s132 = sand.u32 %s19, 1
          %s133 = smul.addr %s132, 8
          %s134 = scalar_lea.vmem [#allocation2], %s133
          %s135 = smul.u32 2, %s9
          %s136 = scalar_lea.vmem %s0, %s135
          // Predicated region
          $region29: #{cnn_forward.3} parent=27 // pred_check
            _
          $region30: #{cnn_forward.3} parent=27 // pred_check_branch
            %138 = sbr.rel (0) target = $region32
          $region31: #{cnn_forward.3} parent=27 // pred_region
            // Predicated region
            $region33: #{cnn_forward.3} parent=31 // pred_check
              _
            $region34: #{cnn_forward.3} parent=31 // pred_check_branch
              %140 = sbr.rel target = $region36
            $region35: #{cnn_forward.3} parent=31 // pred_region
              // Predicated region
              $region48: #{cnn_forward.3} parent=35 // pred_check
                _
              $region49: #{cnn_forward.3} parent=35 // pred_check_branch
                %162 = sbr.rel (0) target = $region51
              $region50: #{cnn_forward.3} parent=35 // pred_region
                loop: start=0, step=1, limit=1
                $region52: #{cnn_forward.3} parent=50 // loop_pre_header
                  _
                $region53: #{cnn_forward.3} parent=50 // loop_header
                  %s164 = sphi 0, %s168
                  %p165 = scmp.ge.s32.totalorder %s164, 1
                  %s169 = sphi %s136, %s136
                  %s170 = sphi %s134, %s134
                $region54: #{cnn_forward.3} parent=50 // loop_header_branch
                  %167 = sbr.rel (%p165) target = $region58
                $region55: #{cnn_forward.3} parent=50 // loop_body
                  _
                $region56: #{cnn_forward.3} parent=50 // loop_footer
                  %s168 = sadd.s32 1, %s164
                $region57: #{cnn_forward.3} parent=50 // loop_footer_branch
                  %163 = sbr.rel target = $region53
                $region58: #{cnn_forward.3} parent=50 // loop_exit
                  _
                %s172 = ssub.s32 4, 1
                loop: start=0, step=1, limit=1
                $region59: #{cnn_forward.3} parent=50 // loop_pre_header
                  _
                $region60: #{cnn_forward.3} parent=50 // loop_header
                  %s174 = sphi 0, %s178
                  %p175 = scmp.ge.s32.totalorder %s174, 1
                  %s179 = sphi %s136, %s136
                  %s180 = sphi %s134, %s134
                $region61: #{cnn_forward.3} parent=50 // loop_header_branch
                  %177 = sbr.rel (%p175) target = $region65
                $region62: #{cnn_forward.3} parent=50 // loop_body
                  %v181 = vld [vmem:[%s179] sm:%s172]
                  %182 = vst [vmem:[%s180] sm:%s172] %v181
                  %v183 = vld [vmem:[%s179 + $0x4] sm:%s172]
                  %184 = vst [vmem:[%s180 + $0x2] sm:%s172] %v183
                  %v185 = vld [vmem:[%s179 + $0x8] sm:%s172]
                  %186 = vst [vmem:[%s180 + $0x4] sm:%s172] %v185
                  %v187 = vld [vmem:[%s179 + $0xc] sm:%s172]
                  %188 = vst [vmem:[%s180 + $0x6] sm:%s172] %v187
                $region63: #{cnn_forward.3} parent=50 // loop_footer
                  %s178 = sadd.s32 1, %s174
                $region64: #{cnn_forward.3} parent=50 // loop_footer_branch
                  %173 = sbr.rel target = $region60
                $region65: #{cnn_forward.3} parent=50 // loop_exit
                  _
              $region51: #{cnn_forward.3} parent=35 // pred_fallthru
                _
            $region36: #{cnn_forward.3} parent=31 // pred_fallthru
              _
            // Predicated region
            $region37: #{cnn_forward.3} parent=31 // pred_check
              _
            $region38: #{cnn_forward.3} parent=31 // pred_check_branch
              %142 = sbr.rel (0) target = $region40
            $region39: #{cnn_forward.3} parent=31 // pred_region
              %s144 = ssub.s32 4, 1
              loop: start=0, step=1, limit=1
              $region41: #{cnn_forward.3} parent=39 // loop_pre_header
                _
              $region42: #{cnn_forward.3} parent=39 // loop_header
                %s146 = sphi 0, %s150
                %p147 = scmp.ge.s32.totalorder %s146, 1
                %s151 = sphi %s136, %s136
                %s152 = sphi %s134, %s134
              $region43: #{cnn_forward.3} parent=39 // loop_header_branch
                %149 = sbr.rel (%p147) target = $region47
              $region44: #{cnn_forward.3} parent=39 // loop_body
                %v153 = vld [vmem:[%s151] sm:%s144]
                %154 = vst [vmem:[%s152] sm:%s144] %v153
                %v155 = vld [vmem:[%s151 + $0x4] sm:%s144]
                %156 = vst [vmem:[%s152 + $0x2] sm:%s144] %v155
                %v157 = vld [vmem:[%s151 + $0x8] sm:%s144]
                %158 = vst [vmem:[%s152 + $0x4] sm:%s144] %v157
                %v159 = vld [vmem:[%s151 + $0xc] sm:%s144]
                %160 = vst [vmem:[%s152 + $0x6] sm:%s144] %v159
              $region45: #{cnn_forward.3} parent=39 // loop_footer
                %s150 = sadd.s32 1, %s146
              $region46: #{cnn_forward.3} parent=39 // loop_footer_branch
                %145 = sbr.rel target = $region42
              $region47: #{cnn_forward.3} parent=39 // loop_exit
                _
            $region40: #{cnn_forward.3} parent=31 // pred_fallthru
              _
          $region32: #{cnn_forward.3} parent=27 // pred_fallthru
            _
          %189 = vnop
        $region28: #{cnn_forward.3} parent=23 // pred_fallthru
          _
      $region24: #{cnn_forward.3} parent=5 // pred_fallthru
        _
      %p190 = scmp.le.s32.totalorder 1, %s9
      %p191 = scmp.lt.s32.totalorder %s9, 3
      %p192 = pnand %p190, %p191
      %p193 = pneg %p192
      // Predicated region
      $region66: #{cnn_forward.3} parent=5 // pred_check
        _
      $region67: #{cnn_forward.3} parent=5 // pred_check_branch
        %195 = sbr.rel (%p192) target = $region69
      $region68: #{cnn_forward.3} parent=5 // pred_region
        %s196 = ssub.s32 %s9, 1
        %s197 = sand.u32 %s22, 1
        %s198 = sand.u32 %s22, 1
        %s199 = smul.addr %s198, 8
        %s200 = scalar_lea.vmem [#allocation2], %s199
        // Predicated region
        $region70: #{cnn_forward.3} parent=68 // pred_check
          %p201 = pneg %p35
        $region71: #{cnn_forward.3} parent=68 // pred_check_branch
          %203 = sbr.rel (%p201) target = $region73
        $region72: #{cnn_forward.3} parent=68 // pred_region
          _
        $region73: #{cnn_forward.3} parent=68 // pred_fallthru
          _
        %s204 = sand.u32 %s22, 1
        %s205 = sand.u32 %s22, 1
        %s206 = smul.addr %s205, 8
        %s207 = scalar_lea.vmem [#allocation2], %s206
        %p208 = pneg %p35
        %p209 = pneg %p32
        %p210 = pneg %p56
        %p211 = pneg %p53
        %p212 = pneg %p77
        %p213 = pneg %p74
        %p214 = pneg %p103
        %p215 = pneg %p100
        %s216 = sand.u32 %s90, 1
        %s217 = sand.u32 %s90, 1
        %s218 = smul.addr %s217, 16
        %s219 = scalar_lea.vmem [#allocation3], %s218
        %s220 = smul.u32 2, %s14
        %s221 = smul.u32 2, %s14
        %v223 = vld [vmem:[%s1] sm:$0xf]
        %v224 = vld [vmem:[%s1 + $0x4] sm:$0xf]
        %v225 = vld [vmem:[%s2] sm:$0xff]
        %v226 = vld [vmem:[%s2 + $0x8] sm:$0xff]
        %v227 = vld [vmem:[%s200] sm:$0x3]
        %s228 = scalar_lea.vmem %s200, 2 [#allocation2]
        %v229 = vld [vmem:[%s228] sm:$0x3]
        %s230 = scalar_lea.vmem %s200, 4 [#allocation2]
        %v231 = vld [vmem:[%s230] sm:$0x3]
        %s232 = scalar_lea.vmem %s200, 6 [#allocation2]
        %v233 = vld [vmem:[%s232] sm:$0x3]
        %v236 = vunpack.c.l.s4 1966171168
        %v237 = vunpack.c.0.s8 %v236
        %v238 = vlaneseq
        %v239 = vshrl.u32 %v238, 7
        %v240 = vsub.s32 %v237, %v239
        %v241 = vrot.slane %v227, %v240
        %v242 = vcombine.high %v241, %v241
        %v244 = vunpack.c.l.s4 1966171168
        %v245 = vunpack.c.0.s8 %v244
        %v246 = vlaneseq
        %v247 = vshrl.u32 %v246, 7
        %v248 = vsub.s32 %v245, %v247
        %v249 = vrot.slane %v241, %v248
        %v251 = vunpack.c.l.s4 1966171168
        %v252 = vunpack.c.0.s8 %v251
        %v253 = vlaneseq
        %v254 = vshrl.u32 %v253, 7
        %v255 = vsub.s32 %v252, %v254
        %v256 = vrot.slane %v242, %v255
        %v261 = vunpack.c.l.s4 1966171168
        %v262 = vunpack.c.0.s8 %v261
        %v263 = vlaneseq
        %v264 = vshrl.u32 %v263, 7
        %v265 = vsub.s32 %v262, %v264
        %v266 = vrot.slane %v229, %v265
        %v267 = vcombine.high %v266, %v266
        %v269 = vunpack.c.l.s4 1966171168
        %v270 = vunpack.c.0.s8 %v269
        %v271 = vlaneseq
        %v272 = vshrl.u32 %v271, 7
        %v273 = vsub.s32 %v270, %v272
        %v274 = vrot.slane %v266, %v273
        %v276 = vunpack.c.l.s4 1966171168
        %v277 = vunpack.c.0.s8 %v276
        %v278 = vlaneseq
        %v279 = vshrl.u32 %v278, 7
        %v280 = vsub.s32 %v277, %v279
        %v281 = vrot.slane %v267, %v280
        %v283 = vshll.u32 %v274, 16
        %v286 = vshll.u32 %v281, 16
        %v290 = vcombine.low %v227, %v227
        %v292 = vunpack.c.l.s4 1966171168
        %v293 = vunpack.c.0.s8 %v292
        %v294 = vlaneseq
        %v295 = vshrl.u32 %v294, 7
        %v296 = vsub.s32 %v293, %v295
        %v297 = vrot.slane %v290, %v296
        %v298 = vcombine.high %v297, %v297
        %v300 = vunpack.c.l.s4 1966171168
        %v301 = vunpack.c.0.s8 %v300
        %v302 = vlaneseq
        %v303 = vshrl.u32 %v302, 7
        %v304 = vsub.s32 %v301, %v303
        %v305 = vrot.slane %v297, %v304
        %v307 = vunpack.c.l.s4 1966171168
        %v308 = vunpack.c.0.s8 %v307
        %v309 = vlaneseq
        %v310 = vshrl.u32 %v309, 7
        %v311 = vsub.s32 %v308, %v310
        %v312 = vrot.slane %v298, %v311
        %313 = vrot.lane.b32.xlu0 %v305, 127
        %v314 = vpop.permute.xlu0 %313
        %315 = vrot.lane.b32.xlu0 %v312, 127
        %v316 = vpop.permute.xlu0 %315
        %vm317 = vcmask 1039360
        %v318 = vsel %vm317, %v314, %v316
        %v319 = vrot.slane %v283, 7
        %v320 = vrot.slane %v286, 7
        %321 = vrot.lane.b32.xlu0 %v319, 127
        %v322 = vpop.permute.xlu0 %321
        %323 = vrot.lane.b32.xlu0 %v320, 127
        %v324 = vpop.permute.xlu0 %323
        %v325 = vsel %vm317, %v322, %v324
        %v328 = vcombine.low %v241, %v241
        %v330 = vunpack.c.l.s4 1966171168
        %v331 = vunpack.c.0.s8 %v330
        %v332 = vlaneseq
        %v333 = vshrl.u32 %v332, 7
        %v334 = vsub.s32 %v331, %v333
        %v335 = vrot.slane %v328, %v334
        %336 = vrot.lane.b32.xlu0 %v335, 126
        %v337 = vpop.permute.xlu0 %336
        %338 = vrot.lane.b32.xlu0 %v249, 126
        %v339 = vpop.permute.xlu0 %338
        %vm340 = vcmask 1031168
        %v341 = vsel %vm340, %v337, %v339
        %v344 = vunpack.c.l.s4 1966171168
        %v345 = vunpack.c.0.s8 %v344
        %v346 = vlaneseq
        %v347 = vshrl.u32 %v346, 7
        %v348 = vsub.s32 %v345, %v347
        %v349 = vrot.slane %v231, %v348
        %v350 = vcombine.high %v349, %v349
        %v352 = vunpack.c.l.s4 1966171168
        %v353 = vunpack.c.0.s8 %v352
        %v354 = vlaneseq
        %v355 = vshrl.u32 %v354, 7
        %v356 = vsub.s32 %v353, %v355
        %v357 = vrot.slane %v349, %v356
        %v359 = vunpack.c.l.s4 1966171168
        %v360 = vunpack.c.0.s8 %v359
        %v361 = vlaneseq
        %v362 = vshrl.u32 %v361, 7
        %v363 = vsub.s32 %v360, %v362
        %v364 = vrot.slane %v350, %v363
        %v366 = vshll.u32 %v357, 16
        %v368 = vrot.slane %v366, 6
        %v370 = vshll.u32 %v364, 16
        %v372 = vrot.slane %v370, 6
        %v376 = vcombine.low %v233, %v233
        %v378 = vunpack.c.l.s4 1966171168
        %v379 = vunpack.c.0.s8 %v378
        %v380 = vlaneseq
        %v381 = vshrl.u32 %v380, 7
        %v382 = vsub.s32 %v379, %v381
        %v383 = vrot.slane %v376, %v382
        %v385 = vunpack.c.l.s4 1966171168
        %v386 = vunpack.c.0.s8 %v385
        %v387 = vlaneseq
        %v388 = vshrl.u32 %v387, 7
        %v389 = vsub.s32 %v386, %v388
        %v390 = vrot.slane %v233, %v389
        %v391 = vcombine.low %v383, %v383
        %v393 = vunpack.c.l.s4 1966171168
        %v394 = vunpack.c.0.s8 %v393
        %v395 = vlaneseq
        %v396 = vshrl.u32 %v395, 7
        %v397 = vsub.s32 %v394, %v396
        %v398 = vrot.slane %v391, %v397
        %v400 = vunpack.c.l.s4 1966171168
        %v401 = vunpack.c.0.s8 %v400
        %v402 = vlaneseq
        %v403 = vshrl.u32 %v402, 7
        %v404 = vsub.s32 %v401, %v403
        %v405 = vrot.slane %v383, %v404
        %v407 = vunpack.c.l.s4 1966171168
        %v408 = vunpack.c.0.s8 %v407
        %v409 = vlaneseq
        %v410 = vshrl.u32 %v409, 7
        %v411 = vsub.s32 %v408, %v410
        %v412 = vrot.slane %v390, %v411
        %v413 = vrot.slane %v366, 5
        %v414 = vrot.slane %v370, 5
        %415 = vrot.lane.b32.xlu0 %v413, 127
        %v416 = vpop.permute.xlu0 %415
        %417 = vrot.lane.b32.xlu0 %v414, 127
        %v418 = vpop.permute.xlu0 %417
        %v419 = vsel %vm317, %v416, %v418
        %v422 = vcombine.high %v390, %v390
        %v424 = vunpack.c.l.s4 1966171168
        %v425 = vunpack.c.0.s8 %v424
        %v426 = vlaneseq
        %v427 = vshrl.u32 %v426, 7
        %v428 = vsub.s32 %v425, %v427
        %v429 = vrot.slane %v422, %v428
        %v430 = vcombine.low %v412, %v412
        %v431 = vcombine.low %v429, %v429
        %432 = vrot.lane.b32.xlu0 %v430, 127
        %v433 = vpop.permute.xlu0 %432
        %434 = vrot.lane.b32.xlu0 %v431, 127
        %v435 = vpop.permute.xlu0 %434
        %v436 = vsel %vm317, %v433, %v435
        %v437 = vrot.slane %v366, 4
        %v438 = vrot.slane %v370, 4
        %439 = vrot.lane.b32.xlu0 %v437, 126
        %v440 = vpop.permute.xlu0 %439
        %441 = vrot.lane.b32.xlu0 %v438, 126
        %v442 = vpop.permute.xlu0 %441
        %v443 = vsel %vm340, %v440, %v442
        %v446 = vcombine.low %v305, %v305
        %v447 = vcombine.low %v312, %v312
        %448 = vrot.lane.b32.xlu0 %v446, 112
        %v449 = vpop.permute.xlu0 %448
        %450 = vrot.lane.b32.xlu0 %v447, 112
        %v451 = vpop.permute.xlu0 %450
        %vm452 = vcmask 916480
        %v453 = vsel %vm452, %v449, %v451
        %v454 = vrot.slane %v283, 3
        %v455 = vrot.slane %v286, 3
        %456 = vrot.lane.b32.xlu0 %v454, 112
        %v457 = vpop.permute.xlu0 %456
        %458 = vrot.lane.b32.xlu0 %v455, 112
        %v459 = vpop.permute.xlu0 %458
        %v460 = vsel %vm452, %v457, %v459
        %v463 = vcombine.low %v335, %v335
        %v464 = vcombine.low %v249, %v249
        %465 = vrot.lane.b32.xlu0 %v463, 111
        %v466 = vpop.permute.xlu0 %465
        %467 = vrot.lane.b32.xlu0 %v464, 111
        %v468 = vpop.permute.xlu0 %467
        %vm469 = vcmask 908288
        %v470 = vsel %vm469, %v466, %v468
        %v471 = vrot.slane %v283, 2
        %v472 = vrot.slane %v286, 2
        %473 = vrot.lane.b32.xlu0 %v471, 111
        %v474 = vpop.permute.xlu0 %473
        %475 = vrot.lane.b32.xlu0 %v472, 111
        %v476 = vpop.permute.xlu0 %475
        %v477 = vsel %vm469, %v474, %v476
        %v480 = vcombine.low %v297, %v297
        %v482 = vunpack.c.l.s4 1966171168
        %v483 = vunpack.c.0.s8 %v482
        %v484 = vlaneseq
        %v485 = vshrl.u32 %v484, 7
        %v486 = vsub.s32 %v483, %v485
        %v487 = vrot.slane %v480, %v486
        %v488 = vcombine.low %v487, %v487
        %489 = vrot.lane.b32.xlu0 %v488, 110
        %v490 = vpop.permute.xlu0 %489
        %491 = vrot.lane.b32.xlu0 %v446, 110
        %v492 = vpop.permute.xlu0 %491
        %vm493 = vcmask 900096
        %v494 = vsel %vm493, %v490, %v492
        %v495 = vrot.slane %v366, 1
        %v496 = vrot.slane %v370, 1
        %497 = vrot.lane.b32.xlu0 %v495, 112
        %v498 = vpop.permute.xlu0 %497
        %499 = vrot.lane.b32.xlu0 %v496, 112
        %v500 = vpop.permute.xlu0 %499
        %v501 = vsel %vm452, %v498, %v500
        %vm504 = vcmask 1040384
        %vm505 = vsmask.f32 256
        %vm506 = vmand %vm504, %vm505
        %v507 = vsel %vm506, %v249, %v283
        %v508 = vsel %vm506, %v256, %v286
        %vm509 = vcmask 1040384
        %v512 = vsel %vm509, %v507, %v318
        %v516 = vsel %vm509, %v508, %v316
        %vm518 = vcmask 1041408
        %vm519 = vsmask.f32 1280
        %vm520 = vmand %vm518, %vm519
        %v521 = vsel %vm520, %v512, %v325
        %v522 = vsel %vm520, %v516, %v324
        %vm523 = vcmask 1041408
        %v526 = vsel %vm523, %v521, %v341
        %v530 = vsel %vm523, %v522, %v339
        %vm532 = vcmask 1042432
        %vm533 = vsmask.f32 2304
        %vm534 = vmand %vm532, %vm533
        %v535 = vsel %vm534, %v526, %v368
        %v536 = vsel %vm534, %v530, %v372
        %vm537 = vcmask 1042432
        %v540 = vsel %vm537, %v535, %v398
        %v544 = vsel %vm537, %v536, %v405
        %vm546 = vcmask 1043456
        %vm547 = vsmask.f32 3328
        %vm548 = vmand %vm546, %vm547
        %v549 = vsel %vm548, %v540, %v419
        %v550 = vsel %vm548, %v544, %v418
        %vm551 = vcmask 1043456
        %v554 = vsel %vm551, %v549, %v436
        %v558 = vsel %vm551, %v550, %v435
        %vm560 = vcmask 1044480
        %vm561 = vsmask.f32 4352
        %vm562 = vmand %vm560, %vm561
        %v563 = vsel %vm562, %v554, %v443
        %v564 = vsel %vm562, %v558, %v442
        %vm565 = vcmask 1044480
        %v568 = vsel %vm565, %v563, %v453
        %v572 = vsel %vm565, %v564, %v451
        %vm574 = vcmask 1045504
        %vm575 = vsmask.f32 5376
        %vm576 = vmand %vm574, %vm575
        %v577 = vsel %vm576, %v568, %v460
        %v578 = vsel %vm576, %v572, %v459
        %vm579 = vcmask 1045504
        %v582 = vsel %vm579, %v577, %v470
        %v586 = vsel %vm579, %v578, %v468
        %vm588 = vcmask 1046528
        %vm589 = vsmask.f32 6400
        %vm590 = vmand %vm588, %vm589
        %v591 = vsel %vm590, %v582, %v477
        %v592 = vsel %vm590, %v586, %v476
        %vm593 = vcmask 1046528
        %v596 = vsel %vm593, %v591, %v494
        %v600 = vsel %vm593, %v592, %v492
        %vm602 = vcmask 1047552
        %vm603 = vsmask.f32 7424
        %vm604 = vmand %vm602, %vm603
        %v605 = vsel %vm604, %v596, %v501
        %v606 = vsel %vm604, %v600, %v500
        %609 = vrot.lane.b32.xlu0 %v366, 127
        %v610 = vpop.permute.xlu0 %609
        %611 = vrot.lane.b32.xlu0 %v370, 127
        %v612 = vpop.permute.xlu0 %611
        %v613 = vsel %vm317, %v610, %v612
        %v616 = vcombine.high %v383, %v383
        %v618 = vunpack.c.l.s4 1966171168
        %v619 = vunpack.c.0.s8 %v618
        %v620 = vlaneseq
        %v621 = vshrl.u32 %v620, 7
        %v622 = vsub.s32 %v619, %v621
        %v623 = vrot.slane %v616, %v622
        %624 = vrot.lane.b32.xlu0 %v405, 127
        %v625 = vpop.permute.xlu0 %624
        %626 = vrot.lane.b32.xlu0 %v623, 127
        %v627 = vpop.permute.xlu0 %626
        %v628 = vsel %vm317, %v625, %v627
        %v629 = vrot.slane %v366, 7
        %v630 = vrot.slane %v370, 7
        %631 = vrot.lane.b32.xlu0 %v629, 126
        %v632 = vpop.permute.xlu0 %631
        %633 = vrot.lane.b32.xlu0 %v630, 126
        %v634 = vpop.permute.xlu0 %633
        %v635 = vsel %vm340, %v632, %v634
        %638 = vrot.lane.b32.xlu0 %v335, 112
        %v639 = vpop.permute.xlu0 %638
        %640 = vrot.lane.b32.xlu0 %v249, 112
        %v641 = vpop.permute.xlu0 %640
        %v642 = vsel %vm452, %v639, %v641
        %v643 = vrot.slane %v283, 6
        %v644 = vrot.slane %v286, 6
        %645 = vrot.lane.b32.xlu0 %v643, 112
        %v646 = vpop.permute.xlu0 %645
        %647 = vrot.lane.b32.xlu0 %v644, 112
        %v648 = vpop.permute.xlu0 %647
        %v649 = vsel %vm452, %v646, %v648
        %652 = vrot.lane.b32.xlu0 %v487, 111
        %v653 = vpop.permute.xlu0 %652
        %654 = vrot.lane.b32.xlu0 %v305, 111
        %v655 = vpop.permute.xlu0 %654
        %v656 = vsel %vm469, %v653, %v655
        %v657 = vrot.slane %v283, 5
        %v658 = vrot.slane %v286, 5
        %659 = vrot.lane.b32.xlu0 %v657, 111
        %v660 = vpop.permute.xlu0 %659
        %661 = vrot.lane.b32.xlu0 %v658, 111
        %v662 = vpop.permute.xlu0 %661
        %v663 = vsel %vm469, %v660, %v662
        %v666 = vcombine.low %v256, %v256
        %667 = vrot.lane.b32.xlu0 %v464, 110
        %v668 = vpop.permute.xlu0 %667
        %669 = vrot.lane.b32.xlu0 %v666, 110
        %v670 = vpop.permute.xlu0 %669
        %v671 = vsel %vm493, %v668, %v670
        %v672 = vsel %vm506, %v412, %v613
        %v673 = vsel %vm506, %v429, %v612
        %v676 = vsel %vm509, %v672, %v628
        %v680 = vsel %vm509, %v673, %v627
        %v682 = vsel %vm520, %v676, %v635
        %v683 = vsel %vm520, %v680, %v634
        %v686 = vsel %vm523, %v682, %v642
        %v690 = vsel %vm523, %v683, %v641
        %v692 = vsel %vm534, %v686, %v649
        %v693 = vsel %vm534, %v690, %v648
        %v696 = vsel %vm537, %v692, %v656
        %v700 = vsel %vm537, %v693, %v655
        %v702 = vsel %vm548, %v696, %v663
        %v703 = vsel %vm548, %v700, %v662
        %v706 = vsel %vm551, %v702, %v671
        %v709 = vsel %vm551, %v703, %v670
        %712 = vrot.lane.b32.xlu0 %v706, 112
        %v713 = vpop.permute.xlu0 %712
        %714 = vrot.lane.b32.xlu0 %v709, 112
        %v715 = vpop.permute.xlu0 %714
        %v716 = vsel %vm452, %v713, %v715
        %718 = vset.pattern.permute.xlu0 0
        %719 = vperm.xlu0 %718, %v225
        %v720 = vpop.permute.xlu0 %719
        %723 = vset.pattern.permute.xlu0 0
        %724 = vperm.xlu0 %723, %v226
        %v725 = vpop.permute.xlu0 %724
        %v729 = vunpack.c.l.b16 %v223
        %v730 = vunpack.c.l.b16 %v224
        %v731 = vpack.c.b16 %v730, %v729
        %vm732 = vcmask 203776
        %v734 = vsel %vm732, %v731, 0
        %v736 = vsel %vm551, 4294967295, 65535
        %v737 = vsel %vm565, %v736, 0
        %v739 = vand.u32 %v716, %v737
        %v742 = vand.u32 %v715, %v737
        %744 = vmatprep.subr.bf16.mxu0 0
        %745 = vmatpush1.bf16.msra.mxu0 0
        %746 = vmatprep.subr.bf16.mxu0 0
        %747 = vmatpush1.bf16.msra.mxu0 0
        %748 = vmatprep.subr.bf16.mxu0 0
        %749 = vmatpush1.bf16.msra.mxu0 0
        %750 = vmatprep.subr.bf16.mxu0 0
        %751 = vmatpush1.bf16.msra.mxu0 0
        %752 = vmatprep.subr.bf16.mxu0 0
        %753 = vmatpush1.bf16.msra.mxu0 0
        %754 = vmatprep.subr.bf16.mxu0 0
        %755 = vmatpush1.bf16.msra.mxu0 0
        %756 = vmatprep.subr.bf16.mxu0 %v742
        %757 = vmatpush1.bf16.msra.mxu0 %v739
        %758 = vmatprep.subr.bf16.mxu0 %v606
        %759 = vmatpush1.bf16.msra.mxu0 %v605
        %760 = vmatprep.subr.bf16.mxu0 0
        %761 = vmatpush2.bf16.msra.mxu0 0
        %762 = vmatprep.subr.bf16.mxu0 0
        %763 = vmatpush2.bf16.msra.mxu0 0
        %764 = vmatprep.subr.bf16.mxu0 0
        %765 = vmatpush2.bf16.msra.mxu0 0
        %766 = vmatprep.subr.bf16.mxu0 0
        %767 = vmatpush2.bf16.msra.mxu0 0
        %768 = vmatprep.subr.bf16.mxu0 0
        %769 = vmatpush2.bf16.msra.mxu0 0
        %770 = vmatprep.subr.bf16.mxu0 0
        %771 = vmatpush2.bf16.msra.mxu0 0
        %772 = vmatprep.subr.bf16.mxu0 0
        %773 = vmatpush2.bf16.msra.mxu0 0
        %774 = vmatprep.subr.bf16.mxu0 0
        %775 = vmatpush2.bf16.msra.mxu0 0
        %776 = vmatprep.mubr.bf16.mxu0 0
        %777 = vmatmul.mubr.bf16.gmra.mxu0 %v734
        %v778 = vpop.f32.mrf.mxu0
        %v779 = vadd.f32 %v720, %v778
        %v780 = vpop.f32.mrf.mxu0
        %v781 = vadd.f32 %v720, %v780
        %v782 = vpop.f32.mrf.mxu0
        %v783 = vadd.f32 %v725, %v782
        %v784 = vpop.f32.mrf.mxu0
        %v785 = vadd.f32 %v725, %v784
        %786 = vdwg.mxu0
        %v787 = vmax.f32 %v779, 0.0
        %v788 = vmax.f32 %v781, 0.0
        %v789 = vmax.f32 %v783, 0.0
        %v790 = vmax.f32 %v785, 0.0
        %v791 = vld [vmem:[%s228] sm:$0x3]
        %v792 = vld [vmem:[%s232] sm:$0x3]
        %v796 = vshll.u32 %v249, 16
        %v799 = vshll.u32 %v256, 16
        %801 = vrot.lane.b32.xlu0 %v796, 127
        %v802 = vpop.permute.xlu0 %801
        %803 = vrot.lane.b32.xlu0 %v799, 127
        %v804 = vpop.permute.xlu0 %803
        %v805 = vsel %vm317, %v802, %v804
        %v808 = vcombine.low %v229, %v229
        %v810 = vunpack.c.l.s4 1966171168
        %v811 = vunpack.c.0.s8 %v810
        %v812 = vlaneseq
        %v813 = vshrl.u32 %v812, 7
        %v814 = vsub.s32 %v811, %v813
        %v815 = vrot.slane %v808, %v814
        %v816 = vcombine.high %v815, %v815
        %v818 = vunpack.c.l.s4 1966171168
        %v819 = vunpack.c.0.s8 %v818
        %v820 = vlaneseq
        %v821 = vshrl.u32 %v820, 7
        %v822 = vsub.s32 %v819, %v821
        %v823 = vrot.slane %v815, %v822
        %v825 = vunpack.c.l.s4 1966171168
        %v826 = vunpack.c.0.s8 %v825
        %v827 = vlaneseq
        %v828 = vshrl.u32 %v827, 7
        %v829 = vsub.s32 %v826, %v828
        %v830 = vrot.slane %v816, %v829
        %831 = vrot.lane.b32.xlu0 %v823, 127
        %v832 = vpop.permute.xlu0 %831
        %833 = vrot.lane.b32.xlu0 %v830, 127
        %v834 = vpop.permute.xlu0 %833
        %v835 = vsel %vm317, %v832, %v834
        %v836 = vrot.slane %v796, 7
        %v837 = vrot.slane %v799, 7
        %838 = vrot.lane.b32.xlu0 %v836, 126
        %v839 = vpop.permute.xlu0 %838
        %840 = vrot.lane.b32.xlu0 %v837, 126
        %v841 = vpop.permute.xlu0 %840
        %v842 = vsel %vm340, %v839, %v841
        %v847 = vunpack.c.l.s4 1966171168
        %v848 = vunpack.c.0.s8 %v847
        %v849 = vlaneseq
        %v850 = vshrl.u32 %v849, 7
        %v851 = vsub.s32 %v848, %v850
        %v852 = vrot.slane %v791, %v851
        %v853 = vcombine.low %v852, %v852
        %v855 = vunpack.c.l.s4 1966171168
        %v856 = vunpack.c.0.s8 %v855
        %v857 = vlaneseq
        %v858 = vshrl.u32 %v857, 7
        %v859 = vsub.s32 %v856, %v858
        %v860 = vrot.slane %v853, %v859
        %v862 = vunpack.c.l.s4 1966171168
        %v863 = vunpack.c.0.s8 %v862
        %v864 = vlaneseq
        %v865 = vshrl.u32 %v864, 7
        %v866 = vsub.s32 %v863, %v865
        %v867 = vrot.slane %v852, %v866
        %868 = vrot.lane.b32.xlu0 %v860, 126
        %v869 = vpop.permute.xlu0 %868
        %870 = vrot.lane.b32.xlu0 %v867, 126
        %v871 = vpop.permute.xlu0 %870
        %v872 = vsel %vm340, %v869, %v871
        %v874 = vshll.u32 %v412, 16
        %v876 = vrot.slane %v874, 6
        %v878 = vshll.u32 %v429, 16
        %v880 = vrot.slane %v878, 6
        %v883 = vcombine.low %v231, %v231
        %v885 = vunpack.c.l.s4 1966171168
        %v886 = vunpack.c.0.s8 %v885
        %v887 = vlaneseq
        %v888 = vshrl.u32 %v887, 7
        %v889 = vsub.s32 %v886, %v888
        %v890 = vrot.slane %v883, %v889
        %v891 = vcombine.low %v890, %v890
        %v893 = vunpack.c.l.s4 1966171168
        %v894 = vunpack.c.0.s8 %v893
        %v895 = vlaneseq
        %v896 = vshrl.u32 %v895, 7
        %v897 = vsub.s32 %v894, %v896
        %v898 = vrot.slane %v891, %v897
        %v900 = vunpack.c.l.s4 1966171168
        %v901 = vunpack.c.0.s8 %v900
        %v902 = vlaneseq
        %v903 = vshrl.u32 %v902, 7
        %v904 = vsub.s32 %v901, %v903
        %v905 = vrot.slane %v890, %v904
        %906 = vrot.lane.b32.xlu0 %v898, 127
        %v907 = vpop.permute.xlu0 %906
        %908 = vrot.lane.b32.xlu0 %v905, 127
        %v909 = vpop.permute.xlu0 %908
        %v910 = vsel %vm317, %v907, %v909
        %v911 = vrot.slane %v874, 5
        %v912 = vrot.slane %v878, 5
        %913 = vrot.lane.b32.xlu0 %v911, 127
        %v914 = vpop.permute.xlu0 %913
        %915 = vrot.lane.b32.xlu0 %v912, 127
        %v916 = vpop.permute.xlu0 %915
        %v917 = vsel %vm317, %v914, %v916
        %v920 = vcombine.low %v357, %v357
        %v921 = vcombine.low %v364, %v364
        %922 = vrot.lane.b32.xlu0 %v920, 126
        %v923 = vpop.permute.xlu0 %922
        %924 = vrot.lane.b32.xlu0 %v921, 126
        %v925 = vpop.permute.xlu0 %924
        %v926 = vsel %vm340, %v923, %v925
        %v929 = vunpack.c.l.s4 1966171168
        %v930 = vunpack.c.0.s8 %v929
        %v931 = vlaneseq
        %v932 = vshrl.u32 %v931, 7
        %v933 = vsub.s32 %v930, %v932
        %v934 = vrot.slane %v792, %v933
        %v935 = vcombine.high %v934, %v934
        %v937 = vunpack.c.l.s4 1966171168
        %v938 = vunpack.c.0.s8 %v937
        %v939 = vlaneseq
        %v940 = vshrl.u32 %v939, 7
        %v941 = vsub.s32 %v938, %v940
        %v942 = vrot.slane %v934, %v941
        %v944 = vunpack.c.l.s4 1966171168
        %v945 = vunpack.c.0.s8 %v944
        %v946 = vlaneseq
        %v947 = vshrl.u32 %v946, 7
        %v948 = vsub.s32 %v945, %v947
        %v949 = vrot.slane %v935, %v948
        %v951 = vshll.u32 %v942, 16
        %v953 = vrot.slane %v951, 4
        %v955 = vshll.u32 %v949, 16
        %v957 = vrot.slane %v955, 4
        %958 = vrot.lane.b32.xlu0 %v953, 126
        %v959 = vpop.permute.xlu0 %958
        %960 = vrot.lane.b32.xlu0 %v957, 126
        %v961 = vpop.permute.xlu0 %960
        %v962 = vsel %vm340, %v959, %v961
        %v965 = vcombine.low %v823, %v823
        %v966 = vcombine.low %v830, %v830
        %967 = vrot.lane.b32.xlu0 %v965, 112
        %v968 = vpop.permute.xlu0 %967
        %969 = vrot.lane.b32.xlu0 %v966, 112
        %v970 = vpop.permute.xlu0 %969
        %v971 = vsel %vm452, %v968, %v970
        %v972 = vrot.slane %v796, 3
        %v973 = vrot.slane %v799, 3
        %974 = vrot.lane.b32.xlu0 %v972, 111
        %v975 = vpop.permute.xlu0 %974
        %976 = vrot.lane.b32.xlu0 %v973, 111
        %v977 = vpop.permute.xlu0 %976
        %v978 = vsel %vm469, %v975, %v977
        %v981 = vcombine.low %v266, %v266
        %v983 = vunpack.c.l.s4 1966171168
        %v984 = vunpack.c.0.s8 %v983
        %v985 = vlaneseq
        %v986 = vshrl.u32 %v985, 7
        %v987 = vsub.s32 %v984, %v986
        %v988 = vrot.slane %v981, %v987
        %v989 = vcombine.low %v988, %v988
        %v990 = vcombine.low %v274, %v274
        %991 = vrot.lane.b32.xlu0 %v989, 111
        %v992 = vpop.permute.xlu0 %991
        %993 = vrot.lane.b32.xlu0 %v990, 111
        %v994 = vpop.permute.xlu0 %993
        %v995 = vsel %vm469, %v992, %v994
        %v996 = vrot.slane %v796, 2
        %v997 = vrot.slane %v799, 2
        %998 = vrot.lane.b32.xlu0 %v996, 110
        %v999 = vpop.permute.xlu0 %998
        %1000 = vrot.lane.b32.xlu0 %v997, 110
        %v1001 = vpop.permute.xlu0 %1000
        %v1002 = vsel %vm493, %v999, %v1001
        %v1005 = vcombine.low %v791, %v791
        %v1007 = vunpack.c.l.s4 1966171168
        %v1008 = vunpack.c.0.s8 %v1007
        %v1009 = vlaneseq
        %v1010 = vshrl.u32 %v1009, 7
        %v1011 = vsub.s32 %v1008, %v1010
        %v1012 = vrot.slane %v1005, %v1011
        %v1013 = vcombine.low %v1012, %v1012
        %v1015 = vunpack.c.l.s4 1966171168
        %v1016 = vunpack.c.0.s8 %v1015
        %v1017 = vlaneseq
        %v1018 = vshrl.u32 %v1017, 7
        %v1019 = vsub.s32 %v1016, %v1018
        %v1020 = vrot.slane %v1013, %v1019
        %v1022 = vunpack.c.l.s4 1966171168
        %v1023 = vunpack.c.0.s8 %v1022
        %v1024 = vlaneseq
        %v1025 = vshrl.u32 %v1024, 7
        %v1026 = vsub.s32 %v1023, %v1025
        %v1027 = vrot.slane %v1012, %v1026
        %v1028 = vcombine.low %v1020, %v1020
        %v1029 = vcombine.low %v1027, %v1027
        %1030 = vrot.lane.b32.xlu0 %v1028, 110
        %v1031 = vpop.permute.xlu0 %1030
        %1032 = vrot.lane.b32.xlu0 %v1029, 110
        %v1033 = vpop.permute.xlu0 %1032
        %v1034 = vsel %vm493, %v1031, %v1033
        %v1035 = vrot.slane %v874, 1
        %v1036 = vrot.slane %v878, 1
        %1037 = vrot.lane.b32.xlu0 %v1035, 112
        %v1038 = vpop.permute.xlu0 %1037
        %1039 = vrot.lane.b32.xlu0 %v1036, 112
        %v1040 = vpop.permute.xlu0 %1039
        %v1041 = vsel %vm452, %v1038, %v1040
        %v1044 = vsel %vm506, %v274, %v805
        %v1045 = vsel %vm506, %v281, %v804
        %v1048 = vsel %vm509, %v1044, %v835
        %v1052 = vsel %vm509, %v1045, %v834
        %v1054 = vsel %vm520, %v1048, %v842
        %v1055 = vsel %vm520, %v1052, %v841
        %v1058 = vsel %vm523, %v1054, %v872
        %v1062 = vsel %vm523, %v1055, %v871
        %v1064 = vsel %vm534, %v1058, %v876
        %v1065 = vsel %vm534, %v1062, %v880
        %v1068 = vsel %vm537, %v1064, %v910
        %v1072 = vsel %vm537, %v1065, %v909
        %v1074 = vsel %vm548, %v1068, %v917
        %v1075 = vsel %vm548, %v1072, %v916
        %v1078 = vsel %vm551, %v1074, %v926
        %v1082 = vsel %vm551, %v1075, %v925
        %v1084 = vsel %vm562, %v1078, %v962
        %v1085 = vsel %vm562, %v1082, %v961
        %v1088 = vsel %vm565, %v1084, %v971
        %v1092 = vsel %vm565, %v1085, %v970
        %v1094 = vsel %vm576, %v1088, %v978
        %v1095 = vsel %vm576, %v1092, %v977
        %v1098 = vsel %vm579, %v1094, %v995
        %v1102 = vsel %vm579, %v1095, %v994
        %v1104 = vsel %vm590, %v1098, %v1002
        %v1105 = vsel %vm590, %v1102, %v1001
        %v1108 = vsel %vm593, %v1104, %v1034
        %v1112 = vsel %vm593, %v1105, %v1033
        %v1114 = vsel %vm604, %v1108, %v1041
        %v1115 = vsel %vm604, %v1112, %v1040
        %v1120 = vcombine.high %v890, %v890
        %v1122 = vunpack.c.l.s4 1966171168
        %v1123 = vunpack.c.0.s8 %v1122
        %v1124 = vlaneseq
        %v1125 = vshrl.u32 %v1124, 7
        %v1126 = vsub.s32 %v1123, %v1125
        %v1127 = vrot.slane %v1120, %v1126
        %1128 = vrot.lane.b32.xlu0 %v1127, 127
        %v1129 = vpop.permute.xlu0 %1128
        %v1130 = vsel %vm317, %v909, %v1129
        %v1131 = vrot.slane %v951, 7
        %v1132 = vrot.slane %v955, 7
        %1133 = vrot.lane.b32.xlu0 %v1131, 127
        %v1134 = vpop.permute.xlu0 %1133
        %1135 = vrot.lane.b32.xlu0 %v1132, 127
        %v1136 = vpop.permute.xlu0 %1135
        %v1137 = vsel %vm317, %v1134, %v1136
        %1140 = vrot.lane.b32.xlu0 %v988, 113
        %v1141 = vpop.permute.xlu0 %1140
        %1142 = vrot.lane.b32.xlu0 %v274, 113
        %v1143 = vpop.permute.xlu0 %1142
        %vm1144 = vcmask 924672
        %v1145 = vsel %vm1144, %v1141, %v1143
        %v1146 = vrot.slane %v796, 6
        %v1147 = vrot.slane %v799, 6
        %1148 = vrot.lane.b32.xlu0 %v1146, 112
        %v1149 = vpop.permute.xlu0 %1148
        %1150 = vrot.lane.b32.xlu0 %v1147, 112
        %v1151 = vpop.permute.xlu0 %1150
        %v1152 = vsel %vm452, %v1149, %v1151
        %v1155 = vcombine.low %v815, %v815
        %v1157 = vunpack.c.l.s4 1966171168
        %v1158 = vunpack.c.0.s8 %v1157
        %v1159 = vlaneseq
        %v1160 = vshrl.u32 %v1159, 7
        %v1161 = vsub.s32 %v1158, %v1160
        %v1162 = vrot.slane %v1155, %v1161
        %1163 = vrot.lane.b32.xlu0 %v1162, 112
        %v1164 = vpop.permute.xlu0 %1163
        %1165 = vrot.lane.b32.xlu0 %v823, 112
        %v1166 = vpop.permute.xlu0 %1165
        %v1167 = vsel %vm452, %v1164, %v1166
        %v1168 = vrot.slane %v796, 5
        %v1169 = vrot.slane %v799, 5
        %1170 = vrot.lane.b32.xlu0 %v1168, 111
        %v1171 = vpop.permute.xlu0 %1170
        %1172 = vrot.lane.b32.xlu0 %v1169, 111
        %v1173 = vpop.permute.xlu0 %1172
        %v1174 = vsel %vm469, %v1171, %v1173
        %v1177 = vcombine.high %v852, %v852
        %v1179 = vunpack.c.l.s4 1966171168
        %v1180 = vunpack.c.0.s8 %v1179
        %v1181 = vlaneseq
        %v1182 = vshrl.u32 %v1181, 7
        %v1183 = vsub.s32 %v1180, %v1182
        %v1184 = vrot.slane %v1177, %v1183
        %v1185 = vcombine.low %v867, %v867
        %v1186 = vcombine.low %v1184, %v1184
        %1187 = vrot.lane.b32.xlu0 %v1185, 111
        %v1188 = vpop.permute.xlu0 %1187
        %1189 = vrot.lane.b32.xlu0 %v1186, 111
        %v1190 = vpop.permute.xlu0 %1189
        %v1191 = vsel %vm469, %v1188, %v1190
        %v1192 = vsel %vm506, %v357, %v874
        %v1193 = vsel %vm506, %v364, %v878
        %v1196 = vsel %vm509, %v1192, %v1130
        %v1200 = vsel %vm509, %v1193, %v1129
        %v1202 = vsel %vm520, %v1196, %v1137
        %v1203 = vsel %vm520, %v1200, %v1136
        %v1206 = vsel %vm523, %v1202, %v1145
        %v1210 = vsel %vm523, %v1203, %v1143
        %v1212 = vsel %vm534, %v1206, %v1152
        %v1213 = vsel %vm534, %v1210, %v1151
        %v1216 = vsel %vm537, %v1212, %v1167
        %v1220 = vsel %vm537, %v1213, %v1166
        %v1222 = vsel %vm548, %v1216, %v1174
        %v1223 = vsel %vm548, %v1220, %v1173
        %v1226 = vsel %vm551, %v1222, %v1191
        %v1229 = vsel %vm551, %v1223, %v1190
        %1232 = vrot.lane.b32.xlu0 %v1226, 111
        %v1233 = vpop.permute.xlu0 %1232
        %1234 = vrot.lane.b32.xlu0 %v1229, 111
        %v1235 = vpop.permute.xlu0 %1234
        %v1236 = vsel %vm469, %v1233, %v1235
        %v1238 = vand.u32 %v1236, %v737
        %v1241 = vand.u32 %v1235, %v737
        %1243 = vmatprep.subr.bf16.mxu0 0
        %1244 = vmatpush1.bf16.msra.mxu0 0
        %1245 = vmatprep.subr.bf16.mxu0 0
        %1246 = vmatpush1.bf16.msra.mxu0 0
        %1247 = vmatprep.subr.bf16.mxu0 0
        %1248 = vmatpush1.bf16.msra.mxu0 0
        %1249 = vmatprep.subr.bf16.mxu0 0
        %1250 = vmatpush1.bf16.msra.mxu0 0
        %1251 = vmatprep.subr.bf16.mxu0 0
        %1252 = vmatpush1.bf16.msra.mxu0 0
        %1253 = vmatprep.subr.bf16.mxu0 0
        %1254 = vmatpush1.bf16.msra.mxu0 0
        %1255 = vmatprep.subr.bf16.mxu0 %v1241
        %1256 = vmatpush1.bf16.msra.mxu0 %v1238
        %1257 = vmatprep.subr.bf16.mxu0 %v1115
        %1258 = vmatpush1.bf16.msra.mxu0 %v1114
        %1259 = vmatprep.subr.bf16.mxu0 0
        %1260 = vmatpush2.bf16.msra.mxu0 0
        %1261 = vmatprep.subr.bf16.mxu0 0
        %1262 = vmatpush2.bf16.msra.mxu0 0
        %1263 = vmatprep.subr.bf16.mxu0 0
        %1264 = vmatpush2.bf16.msra.mxu0 0
        %1265 = vmatprep.subr.bf16.mxu0 0
        %1266 = vmatpush2.bf16.msra.mxu0 0
        %1267 = vmatprep.subr.bf16.mxu0 0
        %1268 = vmatpush2.bf16.msra.mxu0 0
        %1269 = vmatprep.subr.bf16.mxu0 0
        %1270 = vmatpush2.bf16.msra.mxu0 0
        %1271 = vmatprep.subr.bf16.mxu0 0
        %1272 = vmatpush2.bf16.msra.mxu0 0
        %1273 = vmatprep.subr.bf16.mxu0 0
        %1274 = vmatpush2.bf16.msra.mxu0 0
        %1275 = vmatprep.mubr.bf16.mxu0 0
        %1276 = vmatmul.mubr.bf16.gmra.mxu0 %v734
        %v1277 = vpop.f32.mrf.mxu0
        %v1278 = vadd.f32 %v720, %v1277
        %v1279 = vpop.f32.mrf.mxu0
        %v1280 = vadd.f32 %v720, %v1279
        %v1281 = vpop.f32.mrf.mxu0
        %v1282 = vadd.f32 %v725, %v1281
        %v1283 = vpop.f32.mrf.mxu0
        %v1284 = vadd.f32 %v725, %v1283
        %1285 = vdwg.mxu0
        %v1286 = vmax.f32 %v1278, 0.0
        %v1287 = vmax.f32 %v1280, 0.0
        %v1288 = vmax.f32 %v1282, 0.0
        %v1289 = vmax.f32 %v1284, 0.0
        %v1290 = vmax.f32 %v787, %v1286
        %v1291 = vmax.f32 %v788, %v1287
        %v1292 = vmax.f32 %v789, %v1288
        %v1293 = vmax.f32 %v790, %v1289
        %v1294 = vld [vmem:[%s230] sm:$0x3]
        %v1295 = vld [vmem:[%s232] sm:$0x3]
        %v1296 = vrot.slane %v874, 7
        %v1297 = vrot.slane %v878, 7
        %1298 = vrot.lane.b32.xlu0 %v1296, 127
        %v1299 = vpop.permute.xlu0 %1298
        %1300 = vrot.lane.b32.xlu0 %v1297, 127
        %v1301 = vpop.permute.xlu0 %1300
        %v1302 = vsel %vm317, %v1299, %v1301
        %v1305 = vcombine.low %v349, %v349
        %v1307 = vunpack.c.l.s4 1966171168
        %v1308 = vunpack.c.0.s8 %v1307
        %v1309 = vlaneseq
        %v1310 = vshrl.u32 %v1309, 7
        %v1311 = vsub.s32 %v1308, %v1310
        %v1312 = vrot.slane %v1305, %v1311
        %1313 = vrot.lane.b32.xlu0 %v1312, 126
        %v1314 = vpop.permute.xlu0 %1313
        %1315 = vrot.lane.b32.xlu0 %v357, 126
        %v1316 = vpop.permute.xlu0 %1315
        %v1317 = vsel %vm340, %v1314, %v1316
        %v1318 = vcombine.low %v281, %v281
        %1319 = vrot.lane.b32.xlu0 %v1318, 111
        %v1320 = vpop.permute.xlu0 %1319
        %v1321 = vsel %vm469, %v994, %v1320
        %v1322 = vrot.slane %v796, 4
        %v1323 = vrot.slane %v799, 4
        %1324 = vrot.lane.b32.xlu0 %v1322, 110
        %v1325 = vpop.permute.xlu0 %1324
        %1326 = vrot.lane.b32.xlu0 %v1323, 110
        %v1327 = vpop.permute.xlu0 %1326
        %v1328 = vsel %vm493, %v1325, %v1327
        %v1331 = vcombine.low %v905, %v905
        %v1332 = vcombine.low %v1127, %v1127
        %1333 = vrot.lane.b32.xlu0 %v1331, 112
        %v1334 = vpop.permute.xlu0 %1333
        %1335 = vrot.lane.b32.xlu0 %v1332, 112
        %v1336 = vpop.permute.xlu0 %1335
        %v1337 = vsel %vm452, %v1334, %v1336
        %v1338 = vrot.slane %v874, 3
        %v1339 = vrot.slane %v878, 3
        %1340 = vrot.lane.b32.xlu0 %v1338, 112
        %v1341 = vpop.permute.xlu0 %1340
        %1342 = vrot.lane.b32.xlu0 %v1339, 112
        %v1343 = vpop.permute.xlu0 %1342
        %v1344 = vsel %vm452, %v1341, %v1343
        %v1347 = vcombine.low %v1312, %v1312
        %1348 = vrot.lane.b32.xlu0 %v1347, 111
        %v1349 = vpop.permute.xlu0 %1348
        %1350 = vrot.lane.b32.xlu0 %v920, 111
        %v1351 = vpop.permute.xlu0 %1350
        %v1352 = vsel %vm469, %v1349, %v1351
        %v1353 = vrot.slane %v874, 2
        %v1354 = vrot.slane %v878, 2
        %1355 = vrot.lane.b32.xlu0 %v1353, 111
        %v1356 = vpop.permute.xlu0 %1355
        %1357 = vrot.lane.b32.xlu0 %v1354, 111
        %v1358 = vpop.permute.xlu0 %1357
        %v1359 = vsel %vm469, %v1356, %v1358
        %v1362 = vcombine.low %v898, %v898
        %1363 = vrot.lane.b32.xlu0 %v1362, 110
        %v1364 = vpop.permute.xlu0 %1363
        %1365 = vrot.lane.b32.xlu0 %v1331, 110
        %v1366 = vpop.permute.xlu0 %1365
        %v1367 = vsel %vm493, %v1364, %v1366
        %v1368 = vrot.slane %v796, 1
        %v1369 = vrot.slane %v799, 1
        %1370 = vrot.lane.b32.xlu0 %v1368, 96
        %v1371 = vpop.permute.xlu0 %1370
        %1372 = vrot.lane.b32.xlu0 %v1369, 96
        %v1373 = vpop.permute.xlu0 %1372
        %vm1374 = vcmask 785408
        %v1375 = vsel %vm1374, %v1371, %v1373
        %v1378 = vsel %vm520, %v1196, %v1302
        %v1379 = vsel %vm520, %v1200, %v1301
        %v1382 = vsel %vm523, %v1378, %v1317
        %v1386 = vsel %vm523, %v1379, %v1316
        %v1388 = vsel %vm534, %v1382, %v1152
        %v1389 = vsel %vm534, %v1386, %v1151
        %v1391 = vsel %vm537, %v1388, %v1167
        %v1394 = vsel %vm537, %v1389, %v1166
        %v1396 = vsel %vm548, %v1391, %v1174
        %v1397 = vsel %vm548, %v1394, %v1173
        %v1400 = vsel %vm551, %v1396, %v1321
        %v1404 = vsel %vm551, %v1397, %v1320
        %v1406 = vsel %vm562, %v1400, %v1328
        %v1407 = vsel %vm562, %v1404, %v1327
        %v1410 = vsel %vm565, %v1406, %v1337
        %v1414 = vsel %vm565, %v1407, %v1336
        %v1416 = vsel %vm576, %v1410, %v1344
        %v1417 = vsel %vm576, %v1414, %v1343
        %v1420 = vsel %vm579, %v1416, %v1352
        %v1424 = vsel %vm579, %v1417, %v1351
        %v1426 = vsel %vm590, %v1420, %v1359
        %v1427 = vsel %vm590, %v1424, %v1358
        %v1430 = vsel %vm593, %v1426, %v1367
        %v1434 = vsel %vm593, %v1427, %v1366
        %v1436 = vsel %vm604, %v1430, %v1375
        %v1437 = vsel %vm604, %v1434, %v1373
        %v1440 = vunpack.c.l.s4 1966171168
        %v1441 = vunpack.c.0.s8 %v1440
        %v1442 = vlaneseq
        %v1443 = vshrl.u32 %v1442, 7
        %v1444 = vsub.s32 %v1441, %v1443
        %v1445 = vrot.slane %v1294, %v1444
        %v1446 = vcombine.low %v1445, %v1445
        %v1448 = vunpack.c.l.s4 1966171168
        %v1449 = vunpack.c.0.s8 %v1448
        %v1450 = vlaneseq
        %v1451 = vshrl.u32 %v1450, 7
        %v1452 = vsub.s32 %v1449, %v1451
        %v1453 = vrot.slane %v1446, %v1452
        %v1455 = vunpack.c.l.s4 1966171168
        %v1456 = vunpack.c.0.s8 %v1455
        %v1457 = vlaneseq
        %v1458 = vshrl.u32 %v1457, 7
        %v1459 = vsub.s32 %v1456, %v1458
        %v1460 = vrot.slane %v1445, %v1459
        %v1463 = vunpack.c.l.s4 1966171168
        %v1464 = vunpack.c.0.s8 %v1463
        %v1465 = vlaneseq
        %v1466 = vshrl.u32 %v1465, 7
        %v1467 = vsub.s32 %v1464, %v1466
        %v1468 = vrot.slane %v1295, %v1467
        %v1469 = vcombine.high %v1468, %v1468
        %v1471 = vunpack.c.l.s4 1966171168
        %v1472 = vunpack.c.0.s8 %v1471
        %v1473 = vlaneseq
        %v1474 = vshrl.u32 %v1473, 7
        %v1475 = vsub.s32 %v1472, %v1474
        %v1476 = vrot.slane %v1468, %v1475
        %v1478 = vunpack.c.l.s4 1966171168
        %v1479 = vunpack.c.0.s8 %v1478
        %v1480 = vlaneseq
        %v1481 = vshrl.u32 %v1480, 7
        %v1482 = vsub.s32 %v1479, %v1481
        %v1483 = vrot.slane %v1469, %v1482
        %v1485 = vshll.u32 %v1476, 16
        %v1487 = vrot.slane %v1485, 6
        %v1489 = vshll.u32 %v1483, 16
        %v1491 = vrot.slane %v1489, 6
        %v1494 = vcombine.low %v1294, %v1294
        %v1496 = vunpack.c.l.s4 1966171168
        %v1497 = vunpack.c.0.s8 %v1496
        %v1498 = vlaneseq
        %v1499 = vshrl.u32 %v1498, 7
        %v1500 = vsub.s32 %v1497, %v1499
        %v1501 = vrot.slane %v1494, %v1500
        %v1502 = vcombine.low %v1501, %v1501
        %v1504 = vunpack.c.l.s4 1966171168
        %v1505 = vunpack.c.0.s8 %v1504
        %v1506 = vlaneseq
        %v1507 = vshrl.u32 %v1506, 7
        %v1508 = vsub.s32 %v1505, %v1507
        %v1509 = vrot.slane %v1502, %v1508
        %v1511 = vunpack.c.l.s4 1966171168
        %v1512 = vunpack.c.0.s8 %v1511
        %v1513 = vlaneseq
        %v1514 = vshrl.u32 %v1513, 7
        %v1515 = vsub.s32 %v1512, %v1514
        %v1516 = vrot.slane %v1501, %v1515
        %1517 = vrot.lane.b32.xlu0 %v1509, 127
        %v1518 = vpop.permute.xlu0 %1517
        %1519 = vrot.lane.b32.xlu0 %v1516, 127
        %v1520 = vpop.permute.xlu0 %1519
        %v1521 = vsel %vm317, %v1518, %v1520
        %v1522 = vrot.slane %v1485, 5
        %v1523 = vrot.slane %v1489, 5
        %1524 = vrot.lane.b32.xlu0 %v1522, 127
        %v1525 = vpop.permute.xlu0 %1524
        %1526 = vrot.lane.b32.xlu0 %v1523, 127
        %v1527 = vpop.permute.xlu0 %1526
        %v1528 = vsel %vm317, %v1525, %v1527
        %v1531 = vcombine.high %v1445, %v1445
        %v1533 = vunpack.c.l.s4 1966171168
        %v1534 = vunpack.c.0.s8 %v1533
        %v1535 = vlaneseq
        %v1536 = vshrl.u32 %v1535, 7
        %v1537 = vsub.s32 %v1534, %v1536
        %v1538 = vrot.slane %v1531, %v1537
        %v1539 = vcombine.low %v1460, %v1460
        %v1540 = vcombine.low %v1538, %v1538
        %1541 = vrot.lane.b32.xlu0 %v1539, 126
        %v1542 = vpop.permute.xlu0 %1541
        %1543 = vrot.lane.b32.xlu0 %v1540, 126
        %v1544 = vpop.permute.xlu0 %1543
        %v1545 = vsel %vm340, %v1542, %v1544
        %v1547 = vsel %vm523, %v1054, %v1453
        %v1550 = vsel %vm523, %v1055, %v1460
        %v1552 = vsel %vm534, %v1547, %v1487
        %v1553 = vsel %vm534, %v1550, %v1491
        %v1556 = vsel %vm537, %v1552, %v1521
        %v1560 = vsel %vm537, %v1553, %v1520
        %v1562 = vsel %vm548, %v1556, %v1528
        %v1563 = vsel %vm548, %v1560, %v1527
        %v1566 = vsel %vm551, %v1562, %v1545
        %v1569 = vsel %vm551, %v1563, %v1544
        %1572 = vrot.lane.b32.xlu0 %v1566, 96
        %v1573 = vpop.permute.xlu0 %1572
        %1574 = vrot.lane.b32.xlu0 %v1569, 96
        %v1575 = vpop.permute.xlu0 %1574
        %v1576 = vsel %vm1374, %v1573, %v1575
        %v1578 = vand.u32 %v1576, %v737
        %v1581 = vand.u32 %v1575, %v737
        %1583 = vmatprep.subr.bf16.mxu0 0
        %1584 = vmatpush1.bf16.msra.mxu0 0
        %1585 = vmatprep.subr.bf16.mxu0 0
        %1586 = vmatpush1.bf16.msra.mxu0 0
        %1587 = vmatprep.subr.bf16.mxu0 0
        %1588 = vmatpush1.bf16.msra.mxu0 0
        %1589 = vmatprep.subr.bf16.mxu0 0
        %1590 = vmatpush1.bf16.msra.mxu0 0
        %1591 = vmatprep.subr.bf16.mxu0 0
        %1592 = vmatpush1.bf16.msra.mxu0 0
        %1593 = vmatprep.subr.bf16.mxu0 0
        %1594 = vmatpush1.bf16.msra.mxu0 0
        %1595 = vmatprep.subr.bf16.mxu0 %v1581
        %1596 = vmatpush1.bf16.msra.mxu0 %v1578
        %1597 = vmatprep.subr.bf16.mxu0 %v1437
        %1598 = vmatpush1.bf16.msra.mxu0 %v1436
        %1599 = vmatprep.subr.bf16.mxu0 0
        %1600 = vmatpush2.bf16.msra.mxu0 0
        %1601 = vmatprep.subr.bf16.mxu0 0
        %1602 = vmatpush2.bf16.msra.mxu0 0
        %1603 = vmatprep.subr.bf16.mxu0 0
        %1604 = vmatpush2.bf16.msra.mxu0 0
        %1605 = vmatprep.subr.bf16.mxu0 0
        %1606 = vmatpush2.bf16.msra.mxu0 0
        %1607 = vmatprep.subr.bf16.mxu0 0
        %1608 = vmatpush2.bf16.msra.mxu0 0
        %1609 = vmatprep.subr.bf16.mxu0 0
        %1610 = vmatpush2.bf16.msra.mxu0 0
        %1611 = vmatprep.subr.bf16.mxu0 0
        %1612 = vmatpush2.bf16.msra.mxu0 0
        %1613 = vmatprep.subr.bf16.mxu0 0
        %1614 = vmatpush2.bf16.msra.mxu0 0
        %1615 = vmatprep.mubr.bf16.mxu0 0
        %1616 = vmatmul.mubr.bf16.gmra.mxu0 %v734
        %v1617 = vpop.f32.mrf.mxu0
        %v1618 = vadd.f32 %v720, %v1617
        %v1619 = vpop.f32.mrf.mxu0
        %v1620 = vadd.f32 %v720, %v1619
        %v1621 = vpop.f32.mrf.mxu0
        %v1622 = vadd.f32 %v725, %v1621
        %v1623 = vpop.f32.mrf.mxu0
        %v1624 = vadd.f32 %v725, %v1623
        %1625 = vdwg.mxu0
        %v1626 = vmax.f32 %v1618, 0.0
        %v1627 = vmax.f32 %v1620, 0.0
        %v1628 = vmax.f32 %v1622, 0.0
        %v1629 = vmax.f32 %v1624, 0.0
        %v1630 = vmax.f32 %v1290, %v1626
        %v1631 = vmax.f32 %v1291, %v1627
        %v1632 = vmax.f32 %v1292, %v1628
        %v1633 = vmax.f32 %v1293, %v1629
        %v1634 = vld [vmem:[%s232] sm:$0x3]
        %v1635 = vcombine.low %v934, %v934
        %v1637 = vunpack.c.l.s4 1966171168
        %v1638 = vunpack.c.0.s8 %v1637
        %v1639 = vlaneseq
        %v1640 = vshrl.u32 %v1639, 7
        %v1641 = vsub.s32 %v1638, %v1640
        %v1642 = vrot.slane %v1635, %v1641
        %1643 = vrot.lane.b32.xlu0 %v1642, 126
        %v1644 = vpop.permute.xlu0 %1643
        %1645 = vrot.lane.b32.xlu0 %v942, 126
        %v1646 = vpop.permute.xlu0 %1645
        %v1647 = vsel %vm340, %v1644, %v1646
        %v1649 = vshll.u32 %v867, 16
        %v1651 = vrot.slane %v1649, 4
        %v1653 = vshll.u32 %v1184, 16
        %v1655 = vrot.slane %v1653, 4
        %1656 = vrot.lane.b32.xlu0 %v1651, 110
        %v1657 = vpop.permute.xlu0 %1656
        %1658 = vrot.lane.b32.xlu0 %v1655, 110
        %v1659 = vpop.permute.xlu0 %1658
        %v1660 = vsel %vm493, %v1657, %v1659
        %v1663 = vcombine.low %v405, %v405
        %v1664 = vcombine.low %v623, %v623
        %1665 = vrot.lane.b32.xlu0 %v1663, 112
        %v1666 = vpop.permute.xlu0 %1665
        %1667 = vrot.lane.b32.xlu0 %v1664, 112
        %v1668 = vpop.permute.xlu0 %1667
        %v1669 = vsel %vm452, %v1666, %v1668
        %v1670 = vrot.slane %v366, 3
        %v1671 = vrot.slane %v370, 3
        %1672 = vrot.lane.b32.xlu0 %v1670, 111
        %v1673 = vpop.permute.xlu0 %1672
        %1674 = vrot.lane.b32.xlu0 %v1671, 111
        %v1675 = vpop.permute.xlu0 %1674
        %v1676 = vsel %vm469, %v1673, %v1675
        %v1679 = vcombine.low %v390, %v390
        %v1681 = vunpack.c.l.s4 1966171168
        %v1682 = vunpack.c.0.s8 %v1681
        %v1683 = vlaneseq
        %v1684 = vshrl.u32 %v1683, 7
        %v1685 = vsub.s32 %v1682, %v1684
        %v1686 = vrot.slane %v1679, %v1685
        %v1687 = vcombine.low %v1686, %v1686
        %1688 = vrot.lane.b32.xlu0 %v1687, 111
        %v1689 = vpop.permute.xlu0 %1688
        %1690 = vrot.lane.b32.xlu0 %v430, 111
        %v1691 = vpop.permute.xlu0 %1690
        %v1692 = vsel %vm469, %v1689, %v1691
        %v1693 = vrot.slane %v366, 2
        %v1694 = vrot.slane %v370, 2
        %1695 = vrot.lane.b32.xlu0 %v1693, 110
        %v1696 = vpop.permute.xlu0 %1695
        %1697 = vrot.lane.b32.xlu0 %v1694, 110
        %v1698 = vpop.permute.xlu0 %1697
        %v1699 = vsel %vm493, %v1696, %v1698
        %v1702 = vcombine.low %v792, %v792
        %v1704 = vunpack.c.l.s4 1966171168
        %v1705 = vunpack.c.0.s8 %v1704
        %v1706 = vlaneseq
        %v1707 = vshrl.u32 %v1706, 7
        %v1708 = vsub.s32 %v1705, %v1707
        %v1709 = vrot.slane %v1702, %v1708
        %v1710 = vcombine.low %v1709, %v1709
        %v1712 = vunpack.c.l.s4 1966171168
        %v1713 = vunpack.c.0.s8 %v1712
        %v1714 = vlaneseq
        %v1715 = vshrl.u32 %v1714, 7
        %v1716 = vsub.s32 %v1713, %v1715
        %v1717 = vrot.slane %v1710, %v1716
        %v1719 = vunpack.c.l.s4 1966171168
        %v1720 = vunpack.c.0.s8 %v1719
        %v1721 = vlaneseq
        %v1722 = vshrl.u32 %v1721, 7
        %v1723 = vsub.s32 %v1720, %v1722
        %v1724 = vrot.slane %v1709, %v1723
        %v1725 = vcombine.low %v1717, %v1717
        %v1726 = vcombine.low %v1724, %v1724
        %1727 = vrot.lane.b32.xlu0 %v1725, 110
        %v1728 = vpop.permute.xlu0 %1727
        %1729 = vrot.lane.b32.xlu0 %v1726, 110
        %v1730 = vpop.permute.xlu0 %1729
        %v1731 = vsel %vm493, %v1728, %v1730
        %v1732 = vrot.slane %v283, 1
        %v1733 = vrot.slane %v286, 1
        %1734 = vrot.lane.b32.xlu0 %v1732, 96
        %v1735 = vpop.permute.xlu0 %1734
        %1736 = vrot.lane.b32.xlu0 %v1733, 96
        %v1737 = vpop.permute.xlu0 %1736
        %v1738 = vsel %vm1374, %v1735, %v1737
        %v1742 = vsel %vm523, %v682, %v1647
        %v1745 = vsel %vm523, %v683, %v1646
        %v1747 = vsel %vm534, %v1742, %v649
        %v1748 = vsel %vm534, %v1745, %v648
        %v1750 = vsel %vm537, %v1747, %v656
        %v1753 = vsel %vm537, %v1748, %v655
        %v1755 = vsel %vm548, %v1750, %v663
        %v1756 = vsel %vm548, %v1753, %v662
        %v1758 = vsel %vm551, %v1755, %v671
        %v1761 = vsel %vm551, %v1756, %v670
        %v1763 = vsel %vm562, %v1758, %v1660
        %v1764 = vsel %vm562, %v1761, %v1659
        %v1767 = vsel %vm565, %v1763, %v1669
        %v1771 = vsel %vm565, %v1764, %v1668
        %v1773 = vsel %vm576, %v1767, %v1676
        %v1774 = vsel %vm576, %v1771, %v1675
        %v1777 = vsel %vm579, %v1773, %v1692
        %v1781 = vsel %vm579, %v1774, %v1691
        %v1783 = vsel %vm590, %v1777, %v1699
        %v1784 = vsel %vm590, %v1781, %v1698
        %v1787 = vsel %vm593, %v1783, %v1731
        %v1791 = vsel %vm593, %v1784, %v1730
        %v1793 = vsel %vm604, %v1787, %v1738
        %v1794 = vsel %vm604, %v1791, %v1737
        %v1795 = vrot.slane %v1649, 7
        %v1796 = vrot.slane %v1653, 7
        %1797 = vrot.lane.b32.xlu0 %v1795, 127
        %v1798 = vpop.permute.xlu0 %1797
        %1799 = vrot.lane.b32.xlu0 %v1796, 127
        %v1800 = vpop.permute.xlu0 %1799
        %v1801 = vsel %vm317, %v1798, %v1800
        %v1804 = vcombine.low %v1468, %v1468
        %v1806 = vunpack.c.l.s4 1966171168
        %v1807 = vunpack.c.0.s8 %v1806
        %v1808 = vlaneseq
        %v1809 = vshrl.u32 %v1808, 7
        %v1810 = vsub.s32 %v1807, %v1809
        %v1811 = vrot.slane %v1804, %v1810
        %1812 = vrot.lane.b32.xlu0 %v1811, 1
        %v1813 = vpop.permute.xlu0 %1812
        %1814 = vrot.lane.b32.xlu0 %v1476, 1
        %v1815 = vpop.permute.xlu0 %1814
        %vm1816 = vcmask 7168
        %v1817 = vsel %vm1816, %v1813, %v1815
        %v1818 = vshll.u32 %v1460, 16
        %v1820 = vrot.slane %v1818, 6
        %v1822 = vshll.u32 %v1538, 16
        %v1824 = vrot.slane %v1822, 6
        %v1827 = vcombine.low %v1295, %v1295
        %v1829 = vunpack.c.l.s4 1966171168
        %v1830 = vunpack.c.0.s8 %v1829
        %v1831 = vlaneseq
        %v1832 = vshrl.u32 %v1831, 7
        %v1833 = vsub.s32 %v1830, %v1832
        %v1834 = vrot.slane %v1827, %v1833
        %v1835 = vcombine.low %v1834, %v1834
        %v1837 = vunpack.c.l.s4 1966171168
        %v1838 = vunpack.c.0.s8 %v1837
        %v1839 = vlaneseq
        %v1840 = vshrl.u32 %v1839, 7
        %v1841 = vsub.s32 %v1838, %v1840
        %v1842 = vrot.slane %v1835, %v1841
        %v1844 = vunpack.c.l.s4 1966171168
        %v1845 = vunpack.c.0.s8 %v1844
        %v1846 = vlaneseq
        %v1847 = vshrl.u32 %v1846, 7
        %v1848 = vsub.s32 %v1845, %v1847
        %v1849 = vrot.slane %v1834, %v1848
        %v1850 = vrot.slane %v1818, 5
        %v1851 = vrot.slane %v1822, 5
        %1852 = vrot.lane.b32.xlu0 %v1850, 127
        %v1853 = vpop.permute.xlu0 %1852
        %1854 = vrot.lane.b32.xlu0 %v1851, 127
        %v1855 = vpop.permute.xlu0 %1854
        %v1856 = vsel %vm317, %v1853, %v1855
        %v1861 = vunpack.c.l.s4 1966171168
        %v1862 = vunpack.c.0.s8 %v1861
        %v1863 = vlaneseq
        %v1864 = vshrl.u32 %v1863, 7
        %v1865 = vsub.s32 %v1862, %v1864
        %v1866 = vrot.slane %v1634, %v1865
        %v1867 = vcombine.high %v1866, %v1866
        %v1869 = vunpack.c.l.s4 1966171168
        %v1870 = vunpack.c.0.s8 %v1869
        %v1871 = vlaneseq
        %v1872 = vshrl.u32 %v1871, 7
        %v1873 = vsub.s32 %v1870, %v1872
        %v1874 = vrot.slane %v1866, %v1873
        %v1876 = vunpack.c.l.s4 1966171168
        %v1877 = vunpack.c.0.s8 %v1876
        %v1878 = vlaneseq
        %v1879 = vshrl.u32 %v1878, 7
        %v1880 = vsub.s32 %v1877, %v1879
        %v1881 = vrot.slane %v1867, %v1880
        %v1882 = vcombine.low %v1874, %v1874
        %v1883 = vcombine.low %v1881, %v1881
        %1884 = vrot.lane.b32.xlu0 %v1882, 127
        %v1885 = vpop.permute.xlu0 %1884
        %1886 = vrot.lane.b32.xlu0 %v1883, 127
        %v1887 = vpop.permute.xlu0 %1886
        %v1888 = vsel %vm317, %v1885, %v1887
        %v1889 = vsel %vm520, %v512, %v1801
        %v1890 = vsel %vm520, %v516, %v1800
        %v1893 = vsel %vm523, %v1889, %v1813
        %v1897 = vsel %vm523, %v1890, %v1817
        %v1899 = vsel %vm534, %v1893, %v1820
        %v1900 = vsel %vm534, %v1897, %v1824
        %v1903 = vsel %vm537, %v1899, %v1842
        %v1907 = vsel %vm537, %v1900, %v1849
        %v1909 = vsel %vm548, %v1903, %v1856
        %v1910 = vsel %vm548, %v1907, %v1855
        %v1913 = vsel %vm551, %v1909, %v1888
        %v1916 = vsel %vm551, %v1910, %v1887
        %1919 = vrot.lane.b32.xlu0 %v1913, 95
        %v1920 = vpop.permute.xlu0 %1919
        %1921 = vrot.lane.b32.xlu0 %v1916, 95
        %v1922 = vpop.permute.xlu0 %1921
        %vm1923 = vcmask 777216
        %v1924 = vsel %vm1923, %v1920, %v1922
        %v1926 = vand.u32 %v1924, %v737
        %v1929 = vand.u32 %v1922, %v737
        %1931 = vmatprep.subr.bf16.mxu0 0
        %1932 = vmatpush1.bf16.msra.mxu0 0
        %1933 = vmatprep.subr.bf16.mxu0 0
        %1934 = vmatpush1.bf16.msra.mxu0 0
        %1935 = vmatprep.subr.bf16.mxu0 0
        %1936 = vmatpush1.bf16.msra.mxu0 0
        %1937 = vmatprep.subr.bf16.mxu0 0
        %1938 = vmatpush1.bf16.msra.mxu0 0
        %1939 = vmatprep.subr.bf16.mxu0 0
        %1940 = vmatpush1.bf16.msra.mxu0 0
        %1941 = vmatprep.subr.bf16.mxu0 0
        %1942 = vmatpush1.bf16.msra.mxu0 0
        %1943 = vmatprep.subr.bf16.mxu0 %v1929
        %1944 = vmatpush1.bf16.msra.mxu0 %v1926
        %1945 = vmatprep.subr.bf16.mxu0 %v1794
        %1946 = vmatpush1.bf16.msra.mxu0 %v1793
        %1947 = vmatprep.subr.bf16.mxu0 0
        %1948 = vmatpush2.bf16.msra.mxu0 0
        %1949 = vmatprep.subr.bf16.mxu0 0
        %1950 = vmatpush2.bf16.msra.mxu0 0
        %1951 = vmatprep.subr.bf16.mxu0 0
        %1952 = vmatpush2.bf16.msra.mxu0 0
        %1953 = vmatprep.subr.bf16.mxu0 0
        %1954 = vmatpush2.bf16.msra.mxu0 0
        %1955 = vmatprep.subr.bf16.mxu0 0
        %1956 = vmatpush2.bf16.msra.mxu0 0
        %1957 = vmatprep.subr.bf16.mxu0 0
        %1958 = vmatpush2.bf16.msra.mxu0 0
        %1959 = vmatprep.subr.bf16.mxu0 0
        %1960 = vmatpush2.bf16.msra.mxu0 0
        %1961 = vmatprep.subr.bf16.mxu0 0
        %1962 = vmatpush2.bf16.msra.mxu0 0
        %1963 = vmatprep.mubr.bf16.mxu0 0
        %1964 = vmatmul.mubr.bf16.gmra.mxu0 %v734
        %v1965 = vpop.f32.mrf.mxu0
        %v1966 = vadd.f32 %v720, %v1965
        %v1967 = vpop.f32.mrf.mxu0
        %v1968 = vadd.f32 %v720, %v1967
        %v1969 = vpop.f32.mrf.mxu0
        %v1970 = vadd.f32 %v725, %v1969
        %v1971 = vpop.f32.mrf.mxu0
        %v1972 = vadd.f32 %v725, %v1971
        %1973 = vdwg.mxu0
        %v1974 = vmax.f32 %v1966, 0.0
        %v1975 = vmax.f32 %v1968, 0.0
        %v1976 = vmax.f32 %v1970, 0.0
        %v1977 = vmax.f32 %v1972, 0.0
        %v1978 = vmax.f32 %v1630, %v1974
        %v1979 = vmax.f32 %v1631, %v1975
        %v1980 = vmax.f32 %v1632, %v1976
        %v1981 = vmax.f32 %v1633, %v1977
        %v1982 = vpack.c.bf16 %v1980, %v1978
        %v1983 = vpack.c.bf16 %v1981, %v1979
        %v1986 = vunpack.c.l.b16 %v1982
        %v1987 = vunpack.c.l.b16 %v1983
        %v1988 = vunpack.c.h.b16 %v1982
        %v1989 = vunpack.c.h.b16 %v1983
        %v1990 = vpack.c.b16 %v1987, %v1986
        %v1991 = vpack.c.b16 %v1989, %v1988
        %vm1994 = vcmask 769028
        %vm1995 = vmor %vm1994, %vm551
        %1996 = vst.msk [vmem:[%s219] sm:$0xff] %vm1995, %v1990
        %1997 = vst.msk [vmem:[%s219 + $0x8] sm:$0xff] %vm1995, %v1991
        %vm1998 = vcmask 1044208
        %1999 = vst.msk [vmem:[%s219 + $0x4] sm:$0xf] %vm1998, 0
        %2000 = vst.msk [vmem:[%s219 + $0xc] sm:$0xf] %vm1998, 0
        %s2001 = sand.u32 %s90, 1
        %s2002 = sand.u32 %s90, 1
        %s2003 = smul.addr %s2002, 16
        %s2004 = scalar_lea.vmem [#allocation3], %s2003
        // Predicated region
        $region74: #{cnn_forward.3} parent=68 // pred_check
          %p2005 = pneg %p100
        $region75: #{cnn_forward.3} parent=68 // pred_check_branch
          %2007 = sbr.rel (%p2005) target = $region77
        $region76: #{cnn_forward.3} parent=68 // pred_region
          %s2008 = smul.u32 2, %s14
          %s2009 = smul.addr %s2008, 4
          %s2010 = scalar_lea.vmem %s3, %s2009
          // Predicated region
          $region78: #{cnn_forward.3} parent=76 // pred_check
            _
          $region79: #{cnn_forward.3} parent=76 // pred_check_branch
            %2012 = sbr.rel (0) target = $region81
          $region80: #{cnn_forward.3} parent=76 // pred_region
            // Predicated region
            $region82: #{cnn_forward.3} parent=80 // pred_check
              _
            $region83: #{cnn_forward.3} parent=80 // pred_check_branch
              %2014 = sbr.rel (0) target = $region85
            $region84: #{cnn_forward.3} parent=80 // pred_region
              // Predicated region
              $region97: #{cnn_forward.3} parent=84 // pred_check
                _
              $region98: #{cnn_forward.3} parent=84 // pred_check_branch
                %2032 = sbr.rel (0) target = $region100
              $region99: #{cnn_forward.3} parent=84 // pred_region
                loop: start=0, step=1, limit=1
                $region101: #{cnn_forward.3} parent=99 // loop_pre_header
                  _
                $region102: #{cnn_forward.3} parent=99 // loop_header
                  %s2034 = sphi 0, %s2038
                  %p2035 = scmp.ge.s32.totalorder %s2034, 1
                  %s2039 = sphi %s2004, %s2004
                  %s2040 = sphi %s2010, %s2010
                $region103: #{cnn_forward.3} parent=99 // loop_header_branch
                  %2037 = sbr.rel (%p2035) target = $region107
                $region104: #{cnn_forward.3} parent=99 // loop_body
                  %v2041 = vld [vmem:[%s2039] sm:$0xff]
                  %2042 = vst [vmem:[%s2040] sm:$0xff] %v2041
                  %v2043 = vld [vmem:[%s2039 + $0x8] sm:$0xff]
                  %2044 = vst [vmem:[%s2040 + $0x10] sm:$0xff] %v2043
                $region105: #{cnn_forward.3} parent=99 // loop_footer
                  %s2038 = sadd.s32 1, %s2034
                $region106: #{cnn_forward.3} parent=99 // loop_footer_branch
                  %2033 = sbr.rel target = $region102
                $region107: #{cnn_forward.3} parent=99 // loop_exit
                  _
              $region100: #{cnn_forward.3} parent=84 // pred_fallthru
                _
              // Predicated region
              $region108: #{cnn_forward.3} parent=84 // pred_check
                _
              $region109: #{cnn_forward.3} parent=84 // pred_check_branch
                %2046 = sbr.rel target = $region111
              $region110: #{cnn_forward.3} parent=84 // pred_region
                _
              $region111: #{cnn_forward.3} parent=84 // pred_fallthru
                _
            $region85: #{cnn_forward.3} parent=80 // pred_fallthru
              _
            // Predicated region
            $region86: #{cnn_forward.3} parent=80 // pred_check
              _
            $region87: #{cnn_forward.3} parent=80 // pred_check_branch
              %2016 = sbr.rel target = $region89
            $region88: #{cnn_forward.3} parent=80 // pred_region
              %s2018 = ssub.s32 256, 1
              loop: start=0, step=1, limit=1
              $region90: #{cnn_forward.3} parent=88 // loop_pre_header
                _
              $region91: #{cnn_forward.3} parent=88 // loop_header
                %s2020 = sphi 0, %s2024
                %p2021 = scmp.ge.s32.totalorder %s2020, 1
                %s2025 = sphi %s2004, %s2004
                %s2026 = sphi %s2010, %s2010
              $region92: #{cnn_forward.3} parent=88 // loop_header_branch
                %2023 = sbr.rel (%p2021) target = $region96
              $region93: #{cnn_forward.3} parent=88 // loop_body
                %v2027 = vld [vmem:[%s2025] sm:%s2018]
                %2028 = vst [vmem:[%s2026] sm:%s2018] %v2027
                %v2029 = vld [vmem:[%s2025 + $0x8] sm:%s2018]
                %2030 = vst [vmem:[%s2026 + $0x10] sm:%s2018] %v2029
              $region94: #{cnn_forward.3} parent=88 // loop_footer
                %s2024 = sadd.s32 1, %s2020
              $region95: #{cnn_forward.3} parent=88 // loop_footer_branch
                %2019 = sbr.rel target = $region91
              $region96: #{cnn_forward.3} parent=88 // loop_exit
                _
            $region89: #{cnn_forward.3} parent=80 // pred_fallthru
              _
          $region81: #{cnn_forward.3} parent=76 // pred_fallthru
            _
          %2047 = vnop
        $region77: #{cnn_forward.3} parent=68 // pred_fallthru
          _
      $region69: #{cnn_forward.3} parent=5 // pred_fallthru
        _
      %p2048 = scmp.le.s32.totalorder 2, %s9
      // Predicated region
      $region112: #{cnn_forward.3} parent=5 // pred_check
        %p2049 = pneg %p2048
      $region113: #{cnn_forward.3} parent=5 // pred_check_branch
        %2051 = sbr.rel (%p2049) target = $region115
      $region114: #{cnn_forward.3} parent=5 // pred_region
        %s2052 = ssub.s32 %s9, 2
        // Predicated region
        $region116: #{cnn_forward.3} parent=114 // pred_check
          %p2053 = pneg %p106
        $region117: #{cnn_forward.3} parent=114 // pred_check_branch
          %2055 = sbr.rel (%p2053) target = $region119
        $region118: #{cnn_forward.3} parent=114 // pred_region
          %s2056 = sand.u32 %s91, 1
          %s2057 = sand.u32 %s91, 1
          %s2058 = smul.addr %s2057, 16
          %s2059 = scalar_lea.vmem [#allocation3], %s2058
        $region119: #{cnn_forward.3} parent=114 // pred_fallthru
          _
      $region115: #{cnn_forward.3} parent=5 // pred_fallthru
        _
    $region6: #{cnn_forward.3} parent=1 // loop_footer
      %s13 = sadd.s32 1, %s9
    $region7: #{cnn_forward.3} parent=1 // loop_footer_branch
      %8 = sbr.rel target = $region3
    $region8: #{cnn_forward.3} parent=1 // loop_exit
      _

// kernel: cnn_forward.4
$region0: #{cnn_forward.4}
  #allocation0 [shape = 'u32[]', space=smem, size = 0x4, offset = 0x4, fixed_abs, tag = 'smem constant byte address 0x4 - core index']
  #allocation1 [shape = 'u32[144,128]{1,0:T(1,128)}', space=vmem, size = 0x12000, scoped, tag = 'internal scratch']
  %s0 = inlined_call_operand.vmem [shape: bf16[4,16,256], index: 0, kind: input, shape index: {}]
  %s1 = inlined_call_operand.vmem [shape: bf16[32,400], index: 1, kind: input, shape index: {}]
  %s2 = inlined_call_operand.vmem [shape: f32[32,1], index: 2, kind: input, shape index: {}]
  %s3 = inlined_call_operand.vmem [shape: f32[32,256], index: 3, kind: output, shape index: {}]
  %s4 = sld [smem:[#allocation0]]
  $region120: #{cnn_forward.4} parent=0
    _
  %s6 = ssub.s32 1, %s4
  %s7 = scalar_select 0, %s6, %s4
  $region1: #{cnn_forward.4} parent=0
    #allocation2 [shape = 'u8[32768]{0}', space=vmem, size = 0x8000, scoped, tag = 'input window, operand 0']
    #allocation3 [shape = 'u8[32768]{0}', space=vmem, size = 0x8000, scoped, tag = 'output window, operand 0']
    loop: start=0, step=1, limit=4
    $region2: #{cnn_forward.4} parent=1 // loop_pre_header
      _
    $region3: #{cnn_forward.4} parent=1 // loop_header
      %s9 = sphi 0, %s13
      %p10 = scmp.ge.s32.totalorder %s9, 4
      %s19 = sphi 0, %s21
      %s22 = sphi 0, %s19
      %s23 = sphi 0, %s22
      %s39 = sphi 0, %s23
      %s43 = sphi 0, %s43
      %s45 = sphi 0, %s43
      %s46 = sphi 0, %s45
      %s60 = sphi 0, %s46
      %s64 = sphi 0, %s64
      %s66 = sphi 0, %s64
      %s67 = sphi 0, %s66
      %s81 = sphi 0, %s67
      %s87 = sphi 0, %s89
      %s90 = sphi 0, %s87
      %s91 = sphi 0, %s90
      %s107 = sphi 0, %s91
    $region4: #{cnn_forward.4} parent=1 // loop_header_branch
      %12 = sbr.rel (%p10) target = $region8
    $region5: #{cnn_forward.4} parent=1 // loop_body
      %s14 = ssub.s32 %s9, 1
      %s15 = ssub.s32 %s9, 2
      %s16 = sadd.s32 %s9, 1
      %s17 = ssub.s32 %s9, %s16
      %p18 = scmp.eq.s32.totalorder %s17, 0
      %s20 = sadd.s32 %s19, 1
      %s21 = scalar_select %p18, %s19, %s20
      %p24 = pneg %p18
      %p25 = scmp.eq.s32.totalorder %s9, 1
      %p26 = por %p24, %p25
      %p27 = scmp.ne.s32.totalorder %s19, %s22
      %p28 = scmp.eq.s32.totalorder %s9, 0
      %p29 = por %p27, %p28
      %p30 = scmp.ne.s32.totalorder %s19, %s22
      %p31 = scmp.eq.s32.totalorder %s14, 1
      %p32 = por %p30, %p31
      %p33 = scmp.ne.s32.totalorder %s22, %s23
      %p34 = scmp.eq.s32.totalorder %s14, 0
      %p35 = por %p33, %p34
      %p36 = scmp.ne.s32.totalorder %s22, %s23
      %p37 = scmp.eq.s32.totalorder %s15, 1
      %p38 = por %p36, %p37
      %p40 = scmp.ne.s32.totalorder %s23, %s39
      %p41 = scmp.eq.s32.totalorder %s15, 0
      %p42 = por %p40, %p41
      %s44 = sadd.s32 %s43, 1
      %p47 = scmp.eq.s32.totalorder %s9, 1
      %p48 = scmp.ne.s32.totalorder %s43, %s45
      %p49 = scmp.eq.s32.totalorder %s9, 0
      %p50 = por %p48, %p49
      %p51 = scmp.ne.s32.totalorder %s43, %s45
      %p52 = scmp.eq.s32.totalorder %s14, 1
      %p53 = por %p51, %p52
      %p54 = scmp.ne.s32.totalorder %s45, %s46
      %p55 = scmp.eq.s32.totalorder %s14, 0
      %p56 = por %p54, %p55
      %p57 = scmp.ne.s32.totalorder %s45, %s46
      %p58 = scmp.eq.s32.totalorder %s15, 1
      %p59 = por %p57, %p58
      %p61 = scmp.ne.s32.totalorder %s46, %s60
      %p62 = scmp.eq.s32.totalorder %s15, 0
      %p63 = por %p61, %p62
      %s65 = sadd.s32 %s64, 1
      %p68 = scmp.eq.s32.totalorder %s9, 1
      %p69 = scmp.ne.s32.totalorder %s64, %s66
      %p70 = scmp.eq.s32.totalorder %s9, 0
      %p71 = por %p69, %p70
      %p72 = scmp.ne.s32.totalorder %s64, %s66
      %p73 = scmp.eq.s32.totalorder %s14, 1
      %p74 = por %p72, %p73
      %p75 = scmp.ne.s32.totalorder %s66, %s67
      %p76 = scmp.eq.s32.totalorder %s14, 0
      %p77 = por %p75, %p76
      %p78 = scmp.ne.s32.totalorder %s66, %s67
      %p79 = scmp.eq.s32.totalorder %s15, 1
      %p80 = por %p78, %p79
      %p82 = scmp.ne.s32.totalorder %s67, %s81
      %p83 = scmp.eq.s32.totalorder %s15, 0
      %p84 = por %p82, %p83
      %s85 = ssub.s32 %s9, %s16
      %p86 = scmp.eq.s32.totalorder %s85, 0
      %s88 = sadd.s32 %s87, 1
      %s89 = scalar_select %p86, %s87, %s88
      %p92 = pneg %p86
      %p93 = scmp.eq.s32.totalorder %s9, 1
      %p94 = por %p92, %p93
      %p95 = scmp.ne.s32.totalorder %s87, %s90
      %p96 = scmp.eq.s32.totalorder %s9, 0
      %p97 = por %p95, %p96
      %p98 = scmp.ne.s32.totalorder %s87, %s90
      %p99 = scmp.eq.s32.totalorder %s14, 1
      %p100 = por %p98, %p99
      %p101 = scmp.ne.s32.totalorder %s90, %s91
      %p102 = scmp.eq.s32.totalorder %s14, 0
      %p103 = por %p101, %p102
      %p104 = scmp.ne.s32.totalorder %s90, %s91
      %p105 = scmp.eq.s32.totalorder %s15, 1
      %p106 = por %p104, %p105
      %p108 = scmp.ne.s32.totalorder %s91, %s107
      %p109 = scmp.eq.s32.totalorder %s15, 0
      %p110 = por %p108, %p109
      %p111 = scmp.le.s32.totalorder 1, %s9
      %p112 = scmp.lt.s32.totalorder %s9, 3
      %p113 = pnand %p111, %p112
      %p114 = pneg %p113
      // Predicated region
      $region9: #{cnn_forward.4} parent=5 // pred_check
        _
      $region10: #{cnn_forward.4} parent=5 // pred_check_branch
        %116 = sbr.rel (%p113) target = $region12
      $region11: #{cnn_forward.4} parent=5 // pred_region
        %s117 = ssub.s32 %s9, 1
        // Predicated region
        $region13: #{cnn_forward.4} parent=11 // pred_check
          %p118 = pneg %p56
        $region14: #{cnn_forward.4} parent=11 // pred_check_branch
          %120 = sbr.rel (%p118) target = $region16
        $region15: #{cnn_forward.4} parent=11 // pred_region
          _
        $region16: #{cnn_forward.4} parent=11 // pred_fallthru
          _
        // Predicated region
        $region17: #{cnn_forward.4} parent=11 // pred_check
          %p121 = pneg %p77
        $region18: #{cnn_forward.4} parent=11 // pred_check_branch
          %123 = sbr.rel (%p121) target = $region20
        $region19: #{cnn_forward.4} parent=11 // pred_region
          _
        $region20: #{cnn_forward.4} parent=11 // pred_fallthru
          _
      $region12: #{cnn_forward.4} parent=5 // pred_fallthru
        _
      %p124 = scmp.lt.s32.totalorder %s9, 2
      // Predicated region
      $region21: #{cnn_forward.4} parent=5 // pred_check
        %p125 = pneg %p124
      $region22: #{cnn_forward.4} parent=5 // pred_check_branch
        %127 = sbr.rel (%p125) target = $region24
      $region23: #{cnn_forward.4} parent=5 // pred_region
        // Predicated region
        $region25: #{cnn_forward.4} parent=23 // pred_check
          %p128 = pneg %p29
        $region26: #{cnn_forward.4} parent=23 // pred_check_branch
          %130 = sbr.rel (%p128) target = $region28
        $region27: #{cnn_forward.4} parent=23 // pred_region
          %s131 = sand.u32 %s19, 1
          %s132 = sand.u32 %s19, 1
          %s133 = smul.addr %s132, 32
          %s134 = scalar_lea.vmem [#allocation2], %s133
          %s135 = smul.addr %s9, 4
          %s136 = scalar_lea.vmem %s0, %s135
          // Predicated region
          $region29: #{cnn_forward.4} parent=27 // pred_check
            _
          $region30: #{cnn_forward.4} parent=27 // pred_check_branch
            %138 = sbr.rel (0) target = $region32
          $region31: #{cnn_forward.4} parent=27 // pred_region
            // Predicated region
            $region33: #{cnn_forward.4} parent=31 // pred_check
              _
            $region34: #{cnn_forward.4} parent=31 // pred_check_branch
              %140 = sbr.rel target = $region36
            $region35: #{cnn_forward.4} parent=31 // pred_region
              // Predicated region
              $region48: #{cnn_forward.4} parent=35 // pred_check
                _
              $region49: #{cnn_forward.4} parent=35 // pred_check_branch
                %170 = sbr.rel (0) target = $region51
              $region50: #{cnn_forward.4} parent=35 // pred_region
                loop: start=0, step=1, limit=1
                $region52: #{cnn_forward.4} parent=50 // loop_pre_header
                  _
                $region53: #{cnn_forward.4} parent=50 // loop_header
                  %s172 = sphi 0, %s176
                  %p173 = scmp.ge.s32.totalorder %s172, 1
                  %s177 = sphi %s136, %s136
                  %s178 = sphi %s134, %s134
                $region54: #{cnn_forward.4} parent=50 // loop_header_branch
                  %175 = sbr.rel (%p173) target = $region58
                $region55: #{cnn_forward.4} parent=50 // loop_body
                  _
                $region56: #{cnn_forward.4} parent=50 // loop_footer
                  %s176 = sadd.s32 1, %s172
                $region57: #{cnn_forward.4} parent=50 // loop_footer_branch
                  %171 = sbr.rel target = $region53
                $region58: #{cnn_forward.4} parent=50 // loop_exit
                  _
                %s180 = ssub.s32 16, 1
                loop: start=0, step=1, limit=1
                $region59: #{cnn_forward.4} parent=50 // loop_pre_header
                  _
                $region60: #{cnn_forward.4} parent=50 // loop_header
                  %s182 = sphi 0, %s186
                  %p183 = scmp.ge.s32.totalorder %s182, 1
                  %s187 = sphi %s136, %s136
                  %s188 = sphi %s134, %s134
                $region61: #{cnn_forward.4} parent=50 // loop_header_branch
                  %185 = sbr.rel (%p183) target = $region65
                $region62: #{cnn_forward.4} parent=50 // loop_body
                  %v189 = vld [vmem:[%s187] sm:%s180]
                  %190 = vst [vmem:[%s188] sm:%s180] %v189
                  %v191 = vld [vmem:[%s187 + $0x8] sm:%s180]
                  %192 = vst [vmem:[%s188 + $0x4] sm:%s180] %v191
                  %v193 = vld [vmem:[%s187 + $0x10] sm:%s180]
                  %194 = vst [vmem:[%s188 + $0x8] sm:%s180] %v193
                  %v195 = vld [vmem:[%s187 + $0x18] sm:%s180]
                  %196 = vst [vmem:[%s188 + $0xc] sm:%s180] %v195
                  %v197 = vld [vmem:[%s187 + $0x20] sm:%s180]
                  %198 = vst [vmem:[%s188 + $0x10] sm:%s180] %v197
                  %v199 = vld [vmem:[%s187 + $0x28] sm:%s180]
                  %200 = vst [vmem:[%s188 + $0x14] sm:%s180] %v199
                  %v201 = vld [vmem:[%s187 + $0x30] sm:%s180]
                  %202 = vst [vmem:[%s188 + $0x18] sm:%s180] %v201
                  %v203 = vld [vmem:[%s187 + $0x38] sm:%s180]
                  %204 = vst [vmem:[%s188 + $0x1c] sm:%s180] %v203
                $region63: #{cnn_forward.4} parent=50 // loop_footer
                  %s186 = sadd.s32 1, %s182
                $region64: #{cnn_forward.4} parent=50 // loop_footer_branch
                  %181 = sbr.rel target = $region60
                $region65: #{cnn_forward.4} parent=50 // loop_exit
                  _
              $region51: #{cnn_forward.4} parent=35 // pred_fallthru
                _
            $region36: #{cnn_forward.4} parent=31 // pred_fallthru
              _
            // Predicated region
            $region37: #{cnn_forward.4} parent=31 // pred_check
              _
            $region38: #{cnn_forward.4} parent=31 // pred_check_branch
              %142 = sbr.rel (0) target = $region40
            $region39: #{cnn_forward.4} parent=31 // pred_region
              %s144 = ssub.s32 16, 1
              loop: start=0, step=1, limit=1
              $region41: #{cnn_forward.4} parent=39 // loop_pre_header
                _
              $region42: #{cnn_forward.4} parent=39 // loop_header
                %s146 = sphi 0, %s150
                %p147 = scmp.ge.s32.totalorder %s146, 1
                %s151 = sphi %s136, %s136
                %s152 = sphi %s134, %s134
              $region43: #{cnn_forward.4} parent=39 // loop_header_branch
                %149 = sbr.rel (%p147) target = $region47
              $region44: #{cnn_forward.4} parent=39 // loop_body
                %v153 = vld [vmem:[%s151] sm:%s144]
                %154 = vst [vmem:[%s152] sm:%s144] %v153
                %v155 = vld [vmem:[%s151 + $0x8] sm:%s144]
                %156 = vst [vmem:[%s152 + $0x4] sm:%s144] %v155
                %v157 = vld [vmem:[%s151 + $0x10] sm:%s144]
                %158 = vst [vmem:[%s152 + $0x8] sm:%s144] %v157
                %v159 = vld [vmem:[%s151 + $0x18] sm:%s144]
                %160 = vst [vmem:[%s152 + $0xc] sm:%s144] %v159
                %v161 = vld [vmem:[%s151 + $0x20] sm:%s144]
                %162 = vst [vmem:[%s152 + $0x10] sm:%s144] %v161
                %v163 = vld [vmem:[%s151 + $0x28] sm:%s144]
                %164 = vst [vmem:[%s152 + $0x14] sm:%s144] %v163
                %v165 = vld [vmem:[%s151 + $0x30] sm:%s144]
                %166 = vst [vmem:[%s152 + $0x18] sm:%s144] %v165
                %v167 = vld [vmem:[%s151 + $0x38] sm:%s144]
                %168 = vst [vmem:[%s152 + $0x1c] sm:%s144] %v167
              $region45: #{cnn_forward.4} parent=39 // loop_footer
                %s150 = sadd.s32 1, %s146
              $region46: #{cnn_forward.4} parent=39 // loop_footer_branch
                %145 = sbr.rel target = $region42
              $region47: #{cnn_forward.4} parent=39 // loop_exit
                _
            $region40: #{cnn_forward.4} parent=31 // pred_fallthru
              _
          $region32: #{cnn_forward.4} parent=27 // pred_fallthru
            _
          %205 = vnop
        $region28: #{cnn_forward.4} parent=23 // pred_fallthru
          _
      $region24: #{cnn_forward.4} parent=5 // pred_fallthru
        _
      %p206 = scmp.le.s32.totalorder 1, %s9
      %p207 = scmp.lt.s32.totalorder %s9, 3
      %p208 = pnand %p206, %p207
      %p209 = pneg %p208
      // Predicated region
      $region66: #{cnn_forward.4} parent=5 // pred_check
        _
      $region67: #{cnn_forward.4} parent=5 // pred_check_branch
        %211 = sbr.rel (%p208) target = $region69
      $region68: #{cnn_forward.4} parent=5 // pred_region
        %s212 = ssub.s32 %s9, 1
        %s213 = sand.u32 %s22, 1
        %s214 = sand.u32 %s22, 1
        %s215 = smul.addr %s214, 32
        %s216 = scalar_lea.vmem [#allocation2], %s215
        // Predicated region
        $region70: #{cnn_forward.4} parent=68 // pred_check
          %p217 = pneg %p35
        $region71: #{cnn_forward.4} parent=68 // pred_check_branch
          %219 = sbr.rel (%p217) target = $region73
        $region72: #{cnn_forward.4} parent=68 // pred_region
          _
        $region73: #{cnn_forward.4} parent=68 // pred_fallthru
          _
        %s220 = sand.u32 %s22, 1
        %s221 = sand.u32 %s22, 1
        %s222 = smul.addr %s221, 32
        %s223 = scalar_lea.vmem [#allocation2], %s222
        %p224 = pneg %p35
        %p225 = pneg %p32
        %p226 = pneg %p56
        %p227 = pneg %p53
        %p228 = pneg %p77
        %p229 = pneg %p74
        %p230 = pneg %p103
        %p231 = pneg %p100
        %s232 = sand.u32 %s90, 1
        %s233 = sand.u32 %s90, 1
        %s234 = smul.addr %s233, 32
        %s235 = scalar_lea.vmem [#allocation3], %s234
        %v237 = vld [vmem:[%s1] sm:$0xff]
        %v238 = vld [vmem:[%s1 + $0x8] sm:$0xff]
        %v239 = vld [vmem:[%s1 + $0x10] sm:$0xff]
        %v240 = vld [vmem:[%s1 + $0x18] sm:$0xff]
        %v241 = vld [vmem:[%s1 + $0x20] sm:$0xff]
        %v242 = vld [vmem:[%s1 + $0x28] sm:$0xff]
        %v243 = vld [vmem:[%s1 + $0x30] sm:$0xff]
        %v244 = vld [vmem:[%s1 + $0x38] sm:$0xff]
        %v245 = vld [vmem:[%s2] sm:$0xff]
        %v246 = vld [vmem:[%s2 + $0x8] sm:$0xff]
        %v247 = vld [vmem:[%s2 + $0x10] sm:$0xff]
        %v248 = vld [vmem:[%s2 + $0x18] sm:$0xff]
        %v249 = vld [vmem:[%s216] sm:$0xf]
        %v250 = vld [vmem:[%s216 + $0x4] sm:$0xf]
        %s251 = scalar_lea.vmem %s216, 8 [#allocation2]
        %v252 = vld [vmem:[%s251] sm:$0xf]
        %v253 = vld [vmem:[%s251 + $0x4] sm:$0xf]
        %s254 = scalar_lea.vmem %s216, 16 [#allocation2]
        %v255 = vld [vmem:[%s254] sm:$0xf]
        %v256 = vld [vmem:[%s254 + $0x4] sm:$0xf]
        %s257 = scalar_lea.vmem %s216, 24 [#allocation2]
        %v258 = vld [vmem:[%s257] sm:$0xf]
        %v259 = vld [vmem:[%s257 + $0x4] sm:$0xf]
        %v262 = vunpack.c.l.b16 %v249
        %v263 = vunpack.c.l.b16 %v250
        %v264 = vpack.c.b16 %v263, %v262
        %v268 = vunpack.c.l.b16 %v252
        %v269 = vunpack.c.l.b16 %v253
        %v270 = vpack.c.b16 %v269, %v268
        %272 = vrot.lane.b32.xlu0 %v264, 127
        %v273 = vpop.permute.xlu0 %272
        %275 = vrot.lane.b32.xlu0 %v270, 127
        %v276 = vpop.permute.xlu0 %275
        %278 = vrot.lane.b32.xlu0 %v264, 126
        %v279 = vpop.permute.xlu0 %278
        %v283 = vunpack.c.l.b16 %v255
        %v284 = vunpack.c.l.b16 %v256
        %v285 = vpack.c.b16 %v284, %v283
        %v289 = vunpack.c.l.b16 %v258
        %v290 = vunpack.c.l.b16 %v259
        %v291 = vpack.c.b16 %v290, %v289
        %293 = vrot.lane.b32.xlu0 %v285, 127
        %v294 = vpop.permute.xlu0 %293
        %296 = vrot.lane.b32.xlu0 %v291, 127
        %v297 = vpop.permute.xlu0 %296
        %299 = vrot.lane.b32.xlu0 %v285, 126
        %v300 = vpop.permute.xlu0 %299
        %302 = vrot.lane.b32.xlu0 %v264, 119
        %v303 = vpop.permute.xlu0 %302
        %305 = vrot.lane.b32.xlu0 %v270, 119
        %v306 = vpop.permute.xlu0 %305
        %308 = vrot.lane.b32.xlu0 %v264, 118
        %v309 = vpop.permute.xlu0 %308
        %311 = vrot.lane.b32.xlu0 %v270, 118
        %v312 = vpop.permute.xlu0 %311
        %314 = vrot.lane.b32.xlu0 %v264, 117
        %v315 = vpop.permute.xlu0 %314
        %317 = vrot.lane.b32.xlu0 %v285, 119
        %v318 = vpop.permute.xlu0 %317
        %320 = vrot.lane.b32.xlu0 %v291, 119
        %v321 = vpop.permute.xlu0 %320
        %322 = vrot.lane.b32.xlu0 %v294, 119
        %v323 = vpop.permute.xlu0 %322
        %324 = vrot.lane.b32.xlu0 %v297, 119
        %v325 = vpop.permute.xlu0 %324
        %326 = vrot.lane.b32.xlu0 %v300, 119
        %v327 = vpop.permute.xlu0 %326
        %328 = vrot.lane.b32.xlu0 %v303, 119
        %v329 = vpop.permute.xlu0 %328
        %330 = vrot.lane.b32.xlu0 %v306, 119
        %v331 = vpop.permute.xlu0 %330
        %332 = vrot.lane.b32.xlu0 %v309, 119
        %v333 = vpop.permute.xlu0 %332
        %334 = vrot.lane.b32.xlu0 %v312, 119
        %v335 = vpop.permute.xlu0 %334
        %336 = vrot.lane.b32.xlu0 %v315, 119
        %v337 = vpop.permute.xlu0 %336
        %348 = vset.pattern.permute.xlu0 0
        %349 = vperm.xlu0 %348, %v245
        %v350 = vpop.permute.xlu0 %349
        %353 = vset.pattern.permute.xlu0 0
        %354 = vperm.xlu0 %353, %v246
        %v355 = vpop.permute.xlu0 %354
        %358 = vset.pattern.permute.xlu0 0
        %359 = vperm.xlu0 %358, %v247
        %v360 = vpop.permute.xlu0 %359
        %363 = vset.pattern.permute.xlu0 0
        %364 = vperm.xlu0 %363, %v248
        %v365 = vpop.permute.xlu0 %364
        %v375 = vunpack.c.l.b16 %v237
        %v376 = vunpack.c.h.b16 %v237
        %v377 = vunpack.c.l.b16 %v238
        %v378 = vunpack.c.h.b16 %v238
        %v379 = vunpack.c.l.b16 %v239
        %v380 = vunpack.c.h.b16 %v239
        %v381 = vunpack.c.l.b16 %v240
        %v382 = vunpack.c.h.b16 %v240
        %v383 = vunpack.c.l.b16 %v241
        %v384 = vunpack.c.h.b16 %v241
        %v385 = vunpack.c.l.b16 %v242
        %v386 = vunpack.c.h.b16 %v242
        %v387 = vunpack.c.l.b16 %v243
        %v388 = vunpack.c.h.b16 %v243
        %v389 = vunpack.c.l.b16 %v244
        %v390 = vunpack.c.h.b16 %v244
        %v391 = vpack.c.b16 %v379, %v375
        %v392 = vpack.c.b16 %v380, %v376
        %v393 = vpack.c.b16 %v381, %v377
        %v394 = vpack.c.b16 %v382, %v378
        %v395 = vpack.c.b16 %v387, %v383
        %v396 = vpack.c.b16 %v388, %v384
        %v397 = vpack.c.b16 %v389, %v385
        %v398 = vpack.c.b16 %v390, %v386
        %vm405 = vcmask 130048
        %v407 = vsel %vm405, %v394, 0
        %v410 = vsel %vm405, %v398, 0
        %412 = vmatprep.subr.bf16.mxu0 0
        %413 = vmatpush1.bf16.msra.mxu0 %v294
        %414 = vmatprep.subr.bf16.mxu0 0
        %415 = vmatpush1.bf16.msra.mxu0 %v291
        %416 = vmatprep.subr.bf16.mxu0 0
        %417 = vmatpush1.bf16.msra.mxu0 %v285
        %418 = vmatprep.subr.bf16.mxu0 0
        %419 = vmatpush1.bf16.msra.mxu0 %v279
        %420 = vmatprep.subr.bf16.mxu0 0
        %421 = vmatpush1.bf16.msra.mxu0 %v276
        %422 = vmatprep.subr.bf16.mxu0 0
        %423 = vmatpush1.bf16.msra.mxu0 %v273
        %424 = vmatprep.subr.bf16.mxu0 0
        %425 = vmatpush1.bf16.msra.mxu0 %v270
        %426 = vmatprep.subr.bf16.mxu0 0
        %427 = vmatpush1.bf16.msra.mxu0 %v264
        %428 = vmatprep.subr.bf16.mxu0 0
        %429 = vmatpush2.bf16.msra.mxu0 %v318
        %430 = vmatprep.subr.bf16.mxu0 0
        %431 = vmatpush2.bf16.msra.mxu0 %v315
        %432 = vmatprep.subr.bf16.mxu0 0
        %433 = vmatpush2.bf16.msra.mxu0 %v312
        %434 = vmatprep.subr.bf16.mxu0 0
        %435 = vmatpush2.bf16.msra.mxu0 %v309
        %436 = vmatprep.subr.bf16.mxu0 0
        %437 = vmatpush2.bf16.msra.mxu0 %v306
        %438 = vmatprep.subr.bf16.mxu0 0
        %439 = vmatpush2.bf16.msra.mxu0 %v303
        %440 = vmatprep.subr.bf16.mxu0 0
        %441 = vmatpush2.bf16.msra.mxu0 %v300
        %442 = vmatprep.subr.bf16.mxu0 0
        %443 = vmatpush2.bf16.msra.mxu0 %v297
        %444 = vmatprep.mubr.bf16.mxu0 %v392
        %445 = vmatmul.mubr.bf16.gmra.mxu0 %v391
        %v446 = vpop.f32.mrf.mxu0
        %v447 = vadd.f32 %v350, %v446
        %v448 = vpop.f32.mrf.mxu0
        %v449 = vpop.f32.mrf.mxu0
        %v450 = vadd.f32 %v355, %v449
        %v451 = vpop.f32.mrf.mxu0
        %452 = vmatprep.mubr.bf16.mxu0 %v396
        %453 = vmatmul.mubr.bf16.gmra.mxu0 %v395
        %v454 = vpop.f32.mrf.mxu0
        %v455 = vadd.f32 %v360, %v454
        %v456 = vpop.f32.mrf.mxu0
        %v457 = vpop.f32.mrf.mxu0
        %v458 = vadd.f32 %v365, %v457
        %v459 = vpop.f32.mrf.mxu0
        %460 = vdwg.mxu0
        %461 = vmatprep.subr.bf16.mxu0 0
        %462 = vmatpush1.bf16.msra.mxu0 %v335
        %463 = vmatprep.subr.bf16.mxu0 0
        %464 = vmatpush1.bf16.msra.mxu0 %v333
        %465 = vmatprep.subr.bf16.mxu0 0
        %466 = vmatpush1.bf16.msra.mxu0 %v331
        %467 = vmatprep.subr.bf16.mxu0 0
        %468 = vmatpush1.bf16.msra.mxu0 %v329
        %469 = vmatprep.subr.bf16.mxu0 0
        %470 = vmatpush1.bf16.msra.mxu0 %v327
        %471 = vmatprep.subr.bf16.mxu0 0
        %472 = vmatpush1.bf16.msra.mxu0 %v325
        %473 = vmatprep.subr.bf16.mxu0 0
        %474 = vmatpush1.bf16.msra.mxu0 %v323
        %475 = vmatprep.subr.bf16.mxu0 0
        %476 = vmatpush1.bf16.msra.mxu0 %v321
        %477 = vmatprep.subr.bf16.mxu0 0
        %478 = vmatpush2.bf16.msra.mxu0 0
        %479 = vmatprep.subr.bf16.mxu0 0
        %480 = vmatpush2.bf16.msra.mxu0 0
        %481 = vmatprep.subr.bf16.mxu0 0
        %482 = vmatpush2.bf16.msra.mxu0 0
        %483 = vmatprep.subr.bf16.mxu0 0
        %484 = vmatpush2.bf16.msra.mxu0 0
        %485 = vmatprep.subr.bf16.mxu0 0
        %486 = vmatpush2.bf16.msra.mxu0 0
        %487 = vmatprep.subr.bf16.mxu0 0
        %488 = vmatpush2.bf16.msra.mxu0 0
        %489 = vmatprep.subr.bf16.mxu0 0
        %490 = vmatpush2.bf16.msra.mxu0 0
        %491 = vmatprep.subr.bf16.mxu0 0
        %492 = vmatpush2.bf16.msra.mxu0 %v337
        %493 = vmatprep.mubr.bf16.mxu0 %v407
        %494 = vmatmul.mubr.bf16.gmra.mxu0 %v393
        %v495 = vpop.f32.mrf.mxu0
        %v496 = vadd.f32 %v447, %v495
        %v497 = vpop.f32.mrf.mxu0
        %v498 = vpop.f32.mrf.mxu0
        %v499 = vadd.f32 %v450, %v498
        %v500 = vpop.f32.mrf.mxu0
        %501 = vmatprep.mubr.bf16.mxu0 %v410
        %502 = vmatmul.mubr.bf16.gmra.mxu0 %v397
        %v503 = vpop.f32.mrf.mxu0
        %v504 = vadd.f32 %v455, %v503
        %v505 = vpop.f32.mrf.mxu0
        %v506 = vpop.f32.mrf.mxu0
        %v507 = vadd.f32 %v458, %v506
        %v508 = vpop.f32.mrf.mxu0
        %509 = vdwg.mxu0
        %v510 = vmax.f32 %v496, 0.0
        %v511 = vmax.f32 %v499, 0.0
        %v512 = vmax.f32 %v504, 0.0
        %v513 = vmax.f32 %v507, 0.0
        %514 = vrot.lane.b32.xlu0 %v270, 126
        %v515 = vpop.permute.xlu0 %514
        %517 = vrot.lane.b32.xlu0 %v291, 126
        %v518 = vpop.permute.xlu0 %517
        %520 = vrot.lane.b32.xlu0 %v270, 117
        %v521 = vpop.permute.xlu0 %520
        %523 = vrot.lane.b32.xlu0 %v270, 120
        %v524 = vpop.permute.xlu0 %523
        %525 = vrot.lane.b32.xlu0 %v285, 118
        %v526 = vpop.permute.xlu0 %525
        %527 = vrot.lane.b32.xlu0 %v291, 118
        %v528 = vpop.permute.xlu0 %527
        %529 = vrot.lane.b32.xlu0 %v294, 118
        %v530 = vpop.permute.xlu0 %529
        %531 = vrot.lane.b32.xlu0 %v297, 118
        %v532 = vpop.permute.xlu0 %531
        %533 = vrot.lane.b32.xlu0 %v524, 118
        %v534 = vpop.permute.xlu0 %533
        %535 = vrot.lane.b32.xlu0 %v303, 118
        %v536 = vpop.permute.xlu0 %535
        %537 = vrot.lane.b32.xlu0 %v306, 118
        %v538 = vpop.permute.xlu0 %537
        %539 = vrot.lane.b32.xlu0 %v309, 118
        %v540 = vpop.permute.xlu0 %539
        %541 = vrot.lane.b32.xlu0 %v312, 118
        %v542 = vpop.permute.xlu0 %541
        %552 = vmatprep.subr.bf16.mxu0 0
        %553 = vmatpush1.bf16.msra.mxu0 %v297
        %554 = vmatprep.subr.bf16.mxu0 0
        %555 = vmatpush1.bf16.msra.mxu0 %v294
        %556 = vmatprep.subr.bf16.mxu0 0
        %557 = vmatpush1.bf16.msra.mxu0 %v291
        %558 = vmatprep.subr.bf16.mxu0 0
        %559 = vmatpush1.bf16.msra.mxu0 %v515
        %560 = vmatprep.subr.bf16.mxu0 0
        %561 = vmatpush1.bf16.msra.mxu0 %v279
        %562 = vmatprep.subr.bf16.mxu0 0
        %563 = vmatpush1.bf16.msra.mxu0 %v276
        %564 = vmatprep.subr.bf16.mxu0 0
        %565 = vmatpush1.bf16.msra.mxu0 %v273
        %566 = vmatprep.subr.bf16.mxu0 0
        %567 = vmatpush1.bf16.msra.mxu0 %v270
        %568 = vmatprep.subr.bf16.mxu0 0
        %569 = vmatpush2.bf16.msra.mxu0 %v321
        %570 = vmatprep.subr.bf16.mxu0 0
        %571 = vmatpush2.bf16.msra.mxu0 %v521
        %572 = vmatprep.subr.bf16.mxu0 0
        %573 = vmatpush2.bf16.msra.mxu0 %v315
        %574 = vmatprep.subr.bf16.mxu0 0
        %575 = vmatpush2.bf16.msra.mxu0 %v312
        %576 = vmatprep.subr.bf16.mxu0 0
        %577 = vmatpush2.bf16.msra.mxu0 %v309
        %578 = vmatprep.subr.bf16.mxu0 0
        %579 = vmatpush2.bf16.msra.mxu0 %v306
        %580 = vmatprep.subr.bf16.mxu0 0
        %581 = vmatpush2.bf16.msra.mxu0 %v518
        %582 = vmatprep.subr.bf16.mxu0 0
        %583 = vmatpush2.bf16.msra.mxu0 %v300
        %584 = vmatprep.mubr.bf16.mxu0 %v392
        %585 = vmatmul.mubr.bf16.gmra.mxu0 %v391
        %v586 = vpop.f32.mrf.mxu0
        %v587 = vadd.f32 %v350, %v586
        %v588 = vpop.f32.mrf.mxu0
        %v589 = vpop.f32.mrf.mxu0
        %v590 = vadd.f32 %v355, %v589
        %v591 = vpop.f32.mrf.mxu0
        %592 = vmatprep.mubr.bf16.mxu0 %v396
        %593 = vmatmul.mubr.bf16.gmra.mxu0 %v395
        %v594 = vpop.f32.mrf.mxu0
        %v595 = vadd.f32 %v360, %v594
        %v596 = vpop.f32.mrf.mxu0
        %v597 = vpop.f32.mrf.mxu0
        %v598 = vadd.f32 %v365, %v597
        %v599 = vpop.f32.mrf.mxu0
        %600 = vdwg.mxu0
        %601 = vmatprep.subr.bf16.mxu0 0
        %602 = vmatpush1.bf16.msra.mxu0 %v540
        %603 = vmatprep.subr.bf16.mxu0 0
        %604 = vmatpush1.bf16.msra.mxu0 %v538
        %605 = vmatprep.subr.bf16.mxu0 0
        %606 = vmatpush1.bf16.msra.mxu0 %v536
        %607 = vmatprep.subr.bf16.mxu0 0
        %608 = vmatpush1.bf16.msra.mxu0 %v534
        %609 = vmatprep.subr.bf16.mxu0 0
        %610 = vmatpush1.bf16.msra.mxu0 %v532
        %611 = vmatprep.subr.bf16.mxu0 0
        %612 = vmatpush1.bf16.msra.mxu0 %v530
        %613 = vmatprep.subr.bf16.mxu0 0
        %614 = vmatpush1.bf16.msra.mxu0 %v528
        %615 = vmatprep.subr.bf16.mxu0 0
        %616 = vmatpush1.bf16.msra.mxu0 %v526
        %617 = vmatprep.subr.bf16.mxu0 0
        %618 = vmatpush2.bf16.msra.mxu0 0
        %619 = vmatprep.subr.bf16.mxu0 0
        %620 = vmatpush2.bf16.msra.mxu0 0
        %621 = vmatprep.subr.bf16.mxu0 0
        %622 = vmatpush2.bf16.msra.mxu0 0
        %623 = vmatprep.subr.bf16.mxu0 0
        %624 = vmatpush2.bf16.msra.mxu0 0
        %625 = vmatprep.subr.bf16.mxu0 0
        %626 = vmatpush2.bf16.msra.mxu0 0
        %627 = vmatprep.subr.bf16.mxu0 0
        %628 = vmatpush2.bf16.msra.mxu0 0
        %629 = vmatprep.subr.bf16.mxu0 0
        %630 = vmatpush2.bf16.msra.mxu0 0
        %631 = vmatprep.subr.bf16.mxu0 0
        %632 = vmatpush2.bf16.msra.mxu0 %v542
        %633 = vmatprep.mubr.bf16.mxu0 %v407
        %634 = vmatmul.mubr.bf16.gmra.mxu0 %v393
        %v635 = vpop.f32.mrf.mxu0
        %v636 = vadd.f32 %v587, %v635
        %v637 = vpop.f32.mrf.mxu0
        %v638 = vpop.f32.mrf.mxu0
        %v639 = vadd.f32 %v590, %v638
        %v640 = vpop.f32.mrf.mxu0
        %641 = vmatprep.mubr.bf16.mxu0 %v410
        %642 = vmatmul.mubr.bf16.gmra.mxu0 %v397
        %v643 = vpop.f32.mrf.mxu0
        %v644 = vadd.f32 %v595, %v643
        %v645 = vpop.f32.mrf.mxu0
        %v646 = vpop.f32.mrf.mxu0
        %v647 = vadd.f32 %v598, %v646
        %v648 = vpop.f32.mrf.mxu0
        %649 = vdwg.mxu0
        %v650 = vmax.f32 %v636, 0.0
        %v651 = vmax.f32 %v639, 0.0
        %v652 = vmax.f32 %v644, 0.0
        %v653 = vmax.f32 %v647, 0.0
        %v654 = vmax.f32 %v510, %v650
        %v655 = vmax.f32 %v511, %v651
        %v656 = vmax.f32 %v512, %v652
        %v657 = vmax.f32 %v513, %v653
        %658 = vrot.lane.b32.xlu0 %v285, 117
        %v659 = vpop.permute.xlu0 %658
        %661 = vrot.lane.b32.xlu0 %v264, 110
        %v662 = vpop.permute.xlu0 %661
        %664 = vrot.lane.b32.xlu0 %v270, 110
        %v665 = vpop.permute.xlu0 %664
        %666 = vrot.lane.b32.xlu0 %v273, 110
        %v667 = vpop.permute.xlu0 %666
        %668 = vrot.lane.b32.xlu0 %v276, 110
        %v669 = vpop.permute.xlu0 %668
        %670 = vrot.lane.b32.xlu0 %v279, 110
        %v671 = vpop.permute.xlu0 %670
        %672 = vrot.lane.b32.xlu0 %v285, 110
        %v673 = vpop.permute.xlu0 %672
        %674 = vrot.lane.b32.xlu0 %v291, 110
        %v675 = vpop.permute.xlu0 %674
        %676 = vrot.lane.b32.xlu0 %v294, 110
        %v677 = vpop.permute.xlu0 %676
        %678 = vrot.lane.b32.xlu0 %v297, 110
        %v679 = vpop.permute.xlu0 %678
        %680 = vrot.lane.b32.xlu0 %v300, 110
        %v681 = vpop.permute.xlu0 %680
        %691 = vmatprep.subr.bf16.mxu0 0
        %692 = vmatpush1.bf16.msra.mxu0 %v309
        %693 = vmatprep.subr.bf16.mxu0 0
        %694 = vmatpush1.bf16.msra.mxu0 %v306
        %695 = vmatprep.subr.bf16.mxu0 0
        %696 = vmatpush1.bf16.msra.mxu0 %v303
        %697 = vmatprep.subr.bf16.mxu0 0
        %698 = vmatpush1.bf16.msra.mxu0 %v300
        %699 = vmatprep.subr.bf16.mxu0 0
        %700 = vmatpush1.bf16.msra.mxu0 %v297
        %701 = vmatprep.subr.bf16.mxu0 0
        %702 = vmatpush1.bf16.msra.mxu0 %v294
        %703 = vmatprep.subr.bf16.mxu0 0
        %704 = vmatpush1.bf16.msra.mxu0 %v291
        %705 = vmatprep.subr.bf16.mxu0 0
        %706 = vmatpush1.bf16.msra.mxu0 %v285
        %707 = vmatprep.subr.bf16.mxu0 0
        %708 = vmatpush2.bf16.msra.mxu0 %v662
        %709 = vmatprep.subr.bf16.mxu0 0
        %710 = vmatpush2.bf16.msra.mxu0 %v659
        %711 = vmatprep.subr.bf16.mxu0 0
        %712 = vmatpush2.bf16.msra.mxu0 %v528
        %713 = vmatprep.subr.bf16.mxu0 0
        %714 = vmatpush2.bf16.msra.mxu0 %v526
        %715 = vmatprep.subr.bf16.mxu0 0
        %716 = vmatpush2.bf16.msra.mxu0 %v321
        %717 = vmatprep.subr.bf16.mxu0 0
        %718 = vmatpush2.bf16.msra.mxu0 %v318
        %719 = vmatprep.subr.bf16.mxu0 0
        %720 = vmatpush2.bf16.msra.mxu0 %v315
        %721 = vmatprep.subr.bf16.mxu0 0
        %722 = vmatpush2.bf16.msra.mxu0 %v312
        %723 = vmatprep.mubr.bf16.mxu0 %v392
        %724 = vmatmul.mubr.bf16.gmra.mxu0 %v391
        %v725 = vpop.f32.mrf.mxu0
        %v726 = vadd.f32 %v350, %v725
        %v727 = vpop.f32.mrf.mxu0
        %v728 = vpop.f32.mrf.mxu0
        %v729 = vadd.f32 %v355, %v728
        %v730 = vpop.f32.mrf.mxu0
        %731 = vmatprep.mubr.bf16.mxu0 %v396
        %732 = vmatmul.mubr.bf16.gmra.mxu0 %v395
        %v733 = vpop.f32.mrf.mxu0
        %v734 = vadd.f32 %v360, %v733
        %v735 = vpop.f32.mrf.mxu0
        %v736 = vpop.f32.mrf.mxu0
        %v737 = vadd.f32 %v365, %v736
        %v738 = vpop.f32.mrf.mxu0
        %739 = vdwg.mxu0
        %740 = vmatprep.subr.bf16.mxu0 0
        %741 = vmatpush1.bf16.msra.mxu0 %v679
        %742 = vmatprep.subr.bf16.mxu0 0
        %743 = vmatpush1.bf16.msra.mxu0 %v677
        %744 = vmatprep.subr.bf16.mxu0 0
        %745 = vmatpush1.bf16.msra.mxu0 %v675
        %746 = vmatprep.subr.bf16.mxu0 0
        %747 = vmatpush1.bf16.msra.mxu0 %v673
        %748 = vmatprep.subr.bf16.mxu0 0
        %749 = vmatpush1.bf16.msra.mxu0 %v671
        %750 = vmatprep.subr.bf16.mxu0 0
        %751 = vmatpush1.bf16.msra.mxu0 %v669
        %752 = vmatprep.subr.bf16.mxu0 0
        %753 = vmatpush1.bf16.msra.mxu0 %v667
        %754 = vmatprep.subr.bf16.mxu0 0
        %755 = vmatpush1.bf16.msra.mxu0 %v665
        %756 = vmatprep.subr.bf16.mxu0 0
        %757 = vmatpush2.bf16.msra.mxu0 0
        %758 = vmatprep.subr.bf16.mxu0 0
        %759 = vmatpush2.bf16.msra.mxu0 0
        %760 = vmatprep.subr.bf16.mxu0 0
        %761 = vmatpush2.bf16.msra.mxu0 0
        %762 = vmatprep.subr.bf16.mxu0 0
        %763 = vmatpush2.bf16.msra.mxu0 0
        %764 = vmatprep.subr.bf16.mxu0 0
        %765 = vmatpush2.bf16.msra.mxu0 0
        %766 = vmatprep.subr.bf16.mxu0 0
        %767 = vmatpush2.bf16.msra.mxu0 0
        %768 = vmatprep.subr.bf16.mxu0 0
        %769 = vmatpush2.bf16.msra.mxu0 0
        %770 = vmatprep.subr.bf16.mxu0 0
        %771 = vmatpush2.bf16.msra.mxu0 %v681
        %772 = vmatprep.mubr.bf16.mxu0 %v407
        %773 = vmatmul.mubr.bf16.gmra.mxu0 %v393
        %v774 = vpop.f32.mrf.mxu0
        %v775 = vadd.f32 %v726, %v774
        %v776 = vpop.f32.mrf.mxu0
        %v777 = vpop.f32.mrf.mxu0
        %v778 = vadd.f32 %v729, %v777
        %v779 = vpop.f32.mrf.mxu0
        %780 = vmatprep.mubr.bf16.mxu0 %v410
        %781 = vmatmul.mubr.bf16.gmra.mxu0 %v397
        %v782 = vpop.f32.mrf.mxu0
        %v783 = vadd.f32 %v734, %v782
        %v784 = vpop.f32.mrf.mxu0
        %v785 = vpop.f32.mrf.mxu0
        %v786 = vadd.f32 %v737, %v785
        %v787 = vpop.f32.mrf.mxu0
        %788 = vdwg.mxu0
        %v789 = vmax.f32 %v775, 0.0
        %v790 = vmax.f32 %v778, 0.0
        %v791 = vmax.f32 %v783, 0.0
        %v792 = vmax.f32 %v786, 0.0
        %v793 = vmax.f32 %v654, %v789
        %v794 = vmax.f32 %v655, %v790
        %v795 = vmax.f32 %v656, %v791
        %v796 = vmax.f32 %v657, %v792
        %797 = vrot.lane.b32.xlu0 %v291, 117
        %v798 = vpop.permute.xlu0 %797
        %800 = vrot.lane.b32.xlu0 %v291, 1
        %v801 = vpop.permute.xlu0 %800
        %802 = vrot.lane.b32.xlu0 %v264, 109
        %v803 = vpop.permute.xlu0 %802
        %804 = vrot.lane.b32.xlu0 %v270, 109
        %v805 = vpop.permute.xlu0 %804
        %806 = vrot.lane.b32.xlu0 %v273, 109
        %v807 = vpop.permute.xlu0 %806
        %808 = vrot.lane.b32.xlu0 %v276, 109
        %v809 = vpop.permute.xlu0 %808
        %810 = vrot.lane.b32.xlu0 %v801, 109
        %v811 = vpop.permute.xlu0 %810
        %812 = vrot.lane.b32.xlu0 %v285, 109
        %v813 = vpop.permute.xlu0 %812
        %814 = vrot.lane.b32.xlu0 %v291, 109
        %v815 = vpop.permute.xlu0 %814
        %816 = vrot.lane.b32.xlu0 %v294, 109
        %v817 = vpop.permute.xlu0 %816
        %818 = vrot.lane.b32.xlu0 %v297, 109
        %v819 = vpop.permute.xlu0 %818
        %829 = vmatprep.subr.bf16.mxu0 0
        %830 = vmatpush1.bf16.msra.mxu0 %v312
        %831 = vmatprep.subr.bf16.mxu0 0
        %832 = vmatpush1.bf16.msra.mxu0 %v309
        %833 = vmatprep.subr.bf16.mxu0 0
        %834 = vmatpush1.bf16.msra.mxu0 %v306
        %835 = vmatprep.subr.bf16.mxu0 0
        %836 = vmatpush1.bf16.msra.mxu0 %v518
        %837 = vmatprep.subr.bf16.mxu0 0
        %838 = vmatpush1.bf16.msra.mxu0 %v300
        %839 = vmatprep.subr.bf16.mxu0 0
        %840 = vmatpush1.bf16.msra.mxu0 %v297
        %841 = vmatprep.subr.bf16.mxu0 0
        %842 = vmatpush1.bf16.msra.mxu0 %v294
        %843 = vmatprep.subr.bf16.mxu0 0
        %844 = vmatpush1.bf16.msra.mxu0 %v291
        %845 = vmatprep.subr.bf16.mxu0 0
        %846 = vmatpush2.bf16.msra.mxu0 %v665
        %847 = vmatprep.subr.bf16.mxu0 0
        %848 = vmatpush2.bf16.msra.mxu0 %v798
        %849 = vmatprep.subr.bf16.mxu0 0
        %850 = vmatpush2.bf16.msra.mxu0 %v659
        %851 = vmatprep.subr.bf16.mxu0 0
        %852 = vmatpush2.bf16.msra.mxu0 %v528
        %853 = vmatprep.subr.bf16.mxu0 0
        %854 = vmatpush2.bf16.msra.mxu0 %v526
        %855 = vmatprep.subr.bf16.mxu0 0
        %856 = vmatpush2.bf16.msra.mxu0 %v321
        %857 = vmatprep.subr.bf16.mxu0 0
        %858 = vmatpush2.bf16.msra.mxu0 %v521
        %859 = vmatprep.subr.bf16.mxu0 0
        %860 = vmatpush2.bf16.msra.mxu0 %v315
        %861 = vmatprep.mubr.bf16.mxu0 %v392
        %862 = vmatmul.mubr.bf16.gmra.mxu0 %v391
        %v863 = vpop.f32.mrf.mxu0
        %v864 = vadd.f32 %v350, %v863
        %v865 = vpop.f32.mrf.mxu0
        %v866 = vpop.f32.mrf.mxu0
        %v867 = vadd.f32 %v355, %v866
        %v868 = vpop.f32.mrf.mxu0
        %869 = vmatprep.mubr.bf16.mxu0 %v396
        %870 = vmatmul.mubr.bf16.gmra.mxu0 %v395
        %v871 = vpop.f32.mrf.mxu0
        %v872 = vadd.f32 %v360, %v871
        %v873 = vpop.f32.mrf.mxu0
        %v874 = vpop.f32.mrf.mxu0
        %v875 = vadd.f32 %v365, %v874
        %v876 = vpop.f32.mrf.mxu0
        %877 = vdwg.mxu0
        %878 = vmatprep.subr.bf16.mxu0 0
        %879 = vmatpush1.bf16.msra.mxu0 %v817
        %880 = vmatprep.subr.bf16.mxu0 0
        %881 = vmatpush1.bf16.msra.mxu0 %v815
        %882 = vmatprep.subr.bf16.mxu0 0
        %883 = vmatpush1.bf16.msra.mxu0 %v813
        %884 = vmatprep.subr.bf16.mxu0 0
        %885 = vmatpush1.bf16.msra.mxu0 %v811
        %886 = vmatprep.subr.bf16.mxu0 0
        %887 = vmatpush1.bf16.msra.mxu0 %v809
        %888 = vmatprep.subr.bf16.mxu0 0
        %889 = vmatpush1.bf16.msra.mxu0 %v807
        %890 = vmatprep.subr.bf16.mxu0 0
        %891 = vmatpush1.bf16.msra.mxu0 %v805
        %892 = vmatprep.subr.bf16.mxu0 0
        %893 = vmatpush1.bf16.msra.mxu0 %v803
        %894 = vmatprep.subr.bf16.mxu0 0
        %895 = vmatpush2.bf16.msra.mxu0 0
        %896 = vmatprep.subr.bf16.mxu0 0
        %897 = vmatpush2.bf16.msra.mxu0 0
        %898 = vmatprep.subr.bf16.mxu0 0
        %899 = vmatpush2.bf16.msra.mxu0 0
        %900 = vmatprep.subr.bf16.mxu0 0
        %901 = vmatpush2.bf16.msra.mxu0 0
        %902 = vmatprep.subr.bf16.mxu0 0
        %903 = vmatpush2.bf16.msra.mxu0 0
        %904 = vmatprep.subr.bf16.mxu0 0
        %905 = vmatpush2.bf16.msra.mxu0 0
        %906 = vmatprep.subr.bf16.mxu0 0
        %907 = vmatpush2.bf16.msra.mxu0 0
        %908 = vmatprep.subr.bf16.mxu0 0
        %909 = vmatpush2.bf16.msra.mxu0 %v819
        %910 = vmatprep.mubr.bf16.mxu0 %v407
        %911 = vmatmul.mubr.bf16.gmra.mxu0 %v393
        %v912 = vpop.f32.mrf.mxu0
        %v913 = vadd.f32 %v864, %v912
        %v914 = vpop.f32.mrf.mxu0
        %v915 = vpop.f32.mrf.mxu0
        %v916 = vadd.f32 %v867, %v915
        %v917 = vpop.f32.mrf.mxu0
        %918 = vmatprep.mubr.bf16.mxu0 %v410
        %919 = vmatmul.mubr.bf16.gmra.mxu0 %v397
        %v920 = vpop.f32.mrf.mxu0
        %v921 = vadd.f32 %v872, %v920
        %v922 = vpop.f32.mrf.mxu0
        %v923 = vpop.f32.mrf.mxu0
        %v924 = vadd.f32 %v875, %v923
        %v925 = vpop.f32.mrf.mxu0
        %926 = vdwg.mxu0
        %v927 = vmax.f32 %v913, 0.0
        %v928 = vmax.f32 %v916, 0.0
        %v929 = vmax.f32 %v921, 0.0
        %v930 = vmax.f32 %v924, 0.0
        %v931 = vmax.f32 %v793, %v927
        %v932 = vmax.f32 %v794, %v928
        %v933 = vmax.f32 %v795, %v929
        %v934 = vmax.f32 %v796, %v930
        %vm935 = vcmask 883712
        %936 = vst.msk [vmem:[%s235] sm:$0xff] %vm935, %v931
        %937 = vst.msk [vmem:[%s235 + $0x8] sm:$0xff] %vm935, %v932
        %938 = vst.msk [vmem:[%s235 + $0x10] sm:$0xff] %vm935, %v933
        %939 = vst.msk [vmem:[%s235 + $0x18] sm:$0xff] %vm935, %v934
        %vm940 = vcmask 1048416
        %941 = vst.msk [vmem:[%s235] sm:$0xff] %vm940, 0.0
        %942 = vst.msk [vmem:[%s235 + $0x8] sm:$0xff] %vm940, 0.0
        %943 = vst.msk [vmem:[%s235 + $0x10] sm:$0xff] %vm940, 0.0
        %944 = vst.msk [vmem:[%s235 + $0x18] sm:$0xff] %vm940, 0.0
        %s945 = sand.u32 %s90, 1
        %s946 = sand.u32 %s90, 1
        %s947 = smul.addr %s946, 32
        %s948 = scalar_lea.vmem [#allocation3], %s947
        // Predicated region
        $region74: #{cnn_forward.4} parent=68 // pred_check
          %p949 = pneg %p100
        $region75: #{cnn_forward.4} parent=68 // pred_check_branch
          %951 = sbr.rel (%p949) target = $region77
        $region76: #{cnn_forward.4} parent=68 // pred_region
          %s952 = smul.addr %s14, 8
          %s953 = scalar_lea.vmem %s3, %s952
          // Predicated region
          $region78: #{cnn_forward.4} parent=76 // pred_check
            _
          $region79: #{cnn_forward.4} parent=76 // pred_check_branch
            %955 = sbr.rel (0) target = $region81
          $region80: #{cnn_forward.4} parent=76 // pred_region
            // Predicated region
            $region82: #{cnn_forward.4} parent=80 // pred_check
              _
            $region83: #{cnn_forward.4} parent=80 // pred_check_branch
              %957 = sbr.rel (0) target = $region85
            $region84: #{cnn_forward.4} parent=80 // pred_region
              // Predicated region
              $region97: #{cnn_forward.4} parent=84 // pred_check
                _
              $region98: #{cnn_forward.4} parent=84 // pred_check_branch
                %979 = sbr.rel (0) target = $region100
              $region99: #{cnn_forward.4} parent=84 // pred_region
                loop: start=0, step=1, limit=1
                $region101: #{cnn_forward.4} parent=99 // loop_pre_header
                  _
                $region102: #{cnn_forward.4} parent=99 // loop_header
                  %s981 = sphi 0, %s985
                  %p982 = scmp.ge.s32.totalorder %s981, 1
                  %s986 = sphi %s948, %s948
                  %s987 = sphi %s953, %s953
                $region103: #{cnn_forward.4} parent=99 // loop_header_branch
                  %984 = sbr.rel (%p982) target = $region107
                $region104: #{cnn_forward.4} parent=99 // loop_body
                  %v988 = vld [vmem:[%s986] sm:$0xff]
                  %989 = vst [vmem:[%s987] sm:$0xff] %v988
                  %v990 = vld [vmem:[%s986 + $0x8] sm:$0xff]
                  %991 = vst [vmem:[%s987 + $0x10] sm:$0xff] %v990
                  %v992 = vld [vmem:[%s986 + $0x10] sm:$0xff]
                  %993 = vst [vmem:[%s987 + $0x20] sm:$0xff] %v992
                  %v994 = vld [vmem:[%s986 + $0x18] sm:$0xff]
                  %995 = vst [vmem:[%s987 + $0x30] sm:$0xff] %v994
                $region105: #{cnn_forward.4} parent=99 // loop_footer
                  %s985 = sadd.s32 1, %s981
                $region106: #{cnn_forward.4} parent=99 // loop_footer_branch
                  %980 = sbr.rel target = $region102
                $region107: #{cnn_forward.4} parent=99 // loop_exit
                  _
              $region100: #{cnn_forward.4} parent=84 // pred_fallthru
                _
              // Predicated region
              $region108: #{cnn_forward.4} parent=84 // pred_check
                _
              $region109: #{cnn_forward.4} parent=84 // pred_check_branch
                %997 = sbr.rel target = $region111
              $region110: #{cnn_forward.4} parent=84 // pred_region
                _
              $region111: #{cnn_forward.4} parent=84 // pred_fallthru
                _
            $region85: #{cnn_forward.4} parent=80 // pred_fallthru
              _
            // Predicated region
            $region86: #{cnn_forward.4} parent=80 // pred_check
              _
            $region87: #{cnn_forward.4} parent=80 // pred_check_branch
              %959 = sbr.rel target = $region89
            $region88: #{cnn_forward.4} parent=80 // pred_region
              %s961 = ssub.s32 256, 1
              loop: start=0, step=1, limit=1
              $region90: #{cnn_forward.4} parent=88 // loop_pre_header
                _
              $region91: #{cnn_forward.4} parent=88 // loop_header
                %s963 = sphi 0, %s967
                %p964 = scmp.ge.s32.totalorder %s963, 1
                %s968 = sphi %s948, %s948
                %s969 = sphi %s953, %s953
              $region92: #{cnn_forward.4} parent=88 // loop_header_branch
                %966 = sbr.rel (%p964) target = $region96
              $region93: #{cnn_forward.4} parent=88 // loop_body
                %v970 = vld [vmem:[%s968] sm:%s961]
                %971 = vst [vmem:[%s969] sm:%s961] %v970
                %v972 = vld [vmem:[%s968 + $0x8] sm:%s961]
                %973 = vst [vmem:[%s969 + $0x10] sm:%s961] %v972
                %v974 = vld [vmem:[%s968 + $0x10] sm:%s961]
                %975 = vst [vmem:[%s969 + $0x20] sm:%s961] %v974
                %v976 = vld [vmem:[%s968 + $0x18] sm:%s961]
                %977 = vst [vmem:[%s969 + $0x30] sm:%s961] %v976
              $region94: #{cnn_forward.4} parent=88 // loop_footer
                %s967 = sadd.s32 1, %s963
              $region95: #{cnn_forward.4} parent=88 // loop_footer_branch
                %962 = sbr.rel target = $region91
              $region96: #{cnn_forward.4} parent=88 // loop_exit
                _
            $region89: #{cnn_forward.4} parent=80 // pred_fallthru
              _
          $region81: #{cnn_forward.4} parent=76 // pred_fallthru
            _
          %998 = vnop
        $region77: #{cnn_forward.4} parent=68 // pred_fallthru
          _
      $region69: #{cnn_forward.4} parent=5 // pred_fallthru
        _
      %p999 = scmp.le.s32.totalorder 2, %s9
      // Predicated region
      $region112: #{cnn_forward.4} parent=5 // pred_check
        %p1000 = pneg %p999
      $region113: #{cnn_forward.4} parent=5 // pred_check_branch
        %1002 = sbr.rel (%p1000) target = $region115
      $region114: #{cnn_forward.4} parent=5 // pred_region
        %s1003 = ssub.s32 %s9, 2
        // Predicated region
        $region116: #{cnn_forward.4} parent=114 // pred_check
          %p1004 = pneg %p106
        $region117: #{cnn_forward.4} parent=114 // pred_check_branch
          %1006 = sbr.rel (%p1004) target = $region119
        $region118: #{cnn_forward.4} parent=114 // pred_region
          %s1007 = sand.u32 %s91, 1
          %s1008 = sand.u32 %s91, 1
          %s1009 = smul.addr %s1008, 32
          %s1010 = scalar_lea.vmem [#allocation3], %s1009
        $region119: #{cnn_forward.4} parent=114 // pred_fallthru
          _
      $region115: #{cnn_forward.4} parent=5 // pred_fallthru
        _
    $region6: #{cnn_forward.4} parent=1 // loop_footer
      %s13 = sadd.s32 1, %s9
    $region7: #{cnn_forward.4} parent=1 // loop_footer_branch
      %8 = sbr.rel target = $region3
    $region8: #{cnn_forward.4} parent=1 // loop_exit
      _

// kernel: cnn_forward.5
$region0: #{cnn_forward.5}
  #allocation0 [shape = 'u32[]', space=smem, size = 0x4, offset = 0x4, fixed_abs, tag = 'smem constant byte address 0x4 - core index']
  #allocation1 [shape = 'u32[144,128]{1,0:T(1,128)}', space=vmem, size = 0x12000, scoped, tag = 'internal scratch']
  %s0 = inlined_call_operand.vmem [shape: bf16[8,1568], index: 0, kind: input, shape index: {}]
  %s1 = inlined_call_operand.vmem [shape: bf16[1568,128], index: 1, kind: input, shape index: {}]
  %s2 = inlined_call_operand.vmem [shape: f32[1,128], index: 2, kind: input, shape index: {}]
  %s3 = inlined_call_operand.vmem [shape: f32[8,128], index: 3, kind: output, shape index: {}]
  %s4 = sld [smem:[#allocation0]]
  $region22: #{cnn_forward.5} parent=0
    _
  %s6 = ssub.s32 1, %s4
  %s7 = scalar_select 0, %s6, %s4
  // Predicated region
  $region2: #{cnn_forward.5} parent=0 // pred_check
    _
  $region3: #{cnn_forward.5} parent=0 // pred_check_branch
    %9 = sbr.rel (0) target = $region5
  $region4: #{cnn_forward.5} parent=0 // pred_region
    _
  $region5: #{cnn_forward.5} parent=0 // pred_fallthru
    _
  // Predicated region
  $region6: #{cnn_forward.5} parent=0 // pred_check
    _
  $region7: #{cnn_forward.5} parent=0 // pred_check_branch
    %11 = sbr.rel (0) target = $region9
  $region8: #{cnn_forward.5} parent=0 // pred_region
    _
  $region9: #{cnn_forward.5} parent=0 // pred_fallthru
    _
  // Predicated region
  $region10: #{cnn_forward.5} parent=0 // pred_check
    _
  $region11: #{cnn_forward.5} parent=0 // pred_check_branch
    %13 = sbr.rel (0) target = $region13
  $region12: #{cnn_forward.5} parent=0 // pred_region
    _
  $region13: #{cnn_forward.5} parent=0 // pred_fallthru
    _
  %v15 = vld [vmem:[%s0] sm:$0xff]
  %v16 = vld [vmem:[%s0 + $0x8] sm:$0xff]
  %v17 = vld [vmem:[%s0 + $0x10] sm:$0xff]
  %v18 = vld [vmem:[%s0 + $0x18] sm:$0xff]
  %v19 = vld [vmem:[%s0 + $0x20] sm:$0xff]
  %v20 = vld [vmem:[%s0 + $0x28] sm:$0xff]
  %v21 = vld [vmem:[%s0 + $0x30] sm:$0xf]
  %v22 = vld [vmem:[%s1] sm:$0xf]
  %v23 = vld [vmem:[%s1 + $0x4] sm:$0xf]
  %v24 = vld [vmem:[%s1 + $0x8] sm:$0xf]
  %v25 = vld [vmem:[%s1 + $0xc] sm:$0xf]
  %v26 = vld [vmem:[%s1 + $0x10] sm:$0xf]
  %v27 = vld [vmem:[%s1 + $0x14] sm:$0xf]
  %v28 = vld [vmem:[%s1 + $0x18] sm:$0xf]
  %v29 = vld [vmem:[%s1 + $0x1c] sm:$0xf]
  %v30 = vld [vmem:[%s1 + $0x20] sm:$0xf]
  %v31 = vld [vmem:[%s1 + $0x24] sm:$0xf]
  %v32 = vld [vmem:[%s1 + $0x28] sm:$0xf]
  %v33 = vld [vmem:[%s1 + $0x2c] sm:$0xf]
  %v34 = vld [vmem:[%s1 + $0x30] sm:$0xf]
  %v35 = vld [vmem:[%s1 + $0x34] sm:$0xf]
  %v36 = vld [vmem:[%s1 + $0x38] sm:$0xf]
  %v37 = vld [vmem:[%s1 + $0x3c] sm:$0xf]
  %v38 = vld [vmem:[%s1 + $0x40] sm:$0xf]
  %v39 = vld [vmem:[%s1 + $0x44] sm:$0xf]
  %v40 = vld [vmem:[%s1 + $0x48] sm:$0xf]
  %v41 = vld [vmem:[%s1 + $0x4c] sm:$0xf]
  %v42 = vld [vmem:[%s1 + $0x50] sm:$0xf]
  %v43 = vld [vmem:[%s1 + $0x54] sm:$0xf]
  %v44 = vld [vmem:[%s1 + $0x58] sm:$0xf]
  %v45 = vld [vmem:[%s1 + $0x5c] sm:$0xf]
  %v46 = vld [vmem:[%s1 + $0x60] sm:$0xf]
  %v47 = vld [vmem:[%s1 + $0x64] sm:$0xf]
  %v48 = vld [vmem:[%s1 + $0x68] sm:$0xf]
  %v49 = vld [vmem:[%s1 + $0x6c] sm:$0xf]
  %v50 = vld [vmem:[%s1 + $0x70] sm:$0xf]
  %v51 = vld [vmem:[%s1 + $0x74] sm:$0xf]
  %v52 = vld [vmem:[%s1 + $0x78] sm:$0xf]
  %v53 = vld [vmem:[%s1 + $0x7c] sm:$0xf]
  %v54 = vld [vmem:[%s1 + $0x80] sm:$0xf]
  %v55 = vld [vmem:[%s1 + $0x84] sm:$0xf]
  %v56 = vld [vmem:[%s1 + $0x88] sm:$0xf]
  %v57 = vld [vmem:[%s1 + $0x8c] sm:$0xf]
  %v58 = vld [vmem:[%s1 + $0x90] sm:$0xf]
  %v59 = vld [vmem:[%s1 + $0x94] sm:$0xf]
  %v60 = vld [vmem:[%s1 + $0x98] sm:$0xf]
  %v61 = vld [vmem:[%s1 + $0x9c] sm:$0xf]
  %v62 = vld [vmem:[%s1 + $0xa0] sm:$0xf]
  %v63 = vld [vmem:[%s1 + $0xa4] sm:$0xf]
  %v64 = vld [vmem:[%s1 + $0xa8] sm:$0xf]
  %v65 = vld [vmem:[%s1 + $0xac] sm:$0xf]
  %v66 = vld [vmem:[%s1 + $0xb0] sm:$0xf]
  %v67 = vld [vmem:[%s1 + $0xb4] sm:$0xf]
  %v68 = vld [vmem:[%s1 + $0xb8] sm:$0xf]
  %v69 = vld [vmem:[%s1 + $0xbc] sm:$0xf]
  %v70 = vld [vmem:[%s1 + $0xc0] sm:$0xf]
  %v71 = vld [vmem:[%s1 + $0xc4] sm:$0xf]
  %v72 = vld [vmem:[%s1 + $0xc8] sm:$0xf]
  %v73 = vld [vmem:[%s1 + $0xcc] sm:$0xf]
  %v74 = vld [vmem:[%s1 + $0xd0] sm:$0xf]
  %v75 = vld [vmem:[%s1 + $0xd4] sm:$0xf]
  %v76 = vld [vmem:[%s1 + $0xd8] sm:$0xf]
  %v77 = vld [vmem:[%s1 + $0xdc] sm:$0xf]
  %v78 = vld [vmem:[%s1 + $0xe0] sm:$0xf]
  %v79 = vld [vmem:[%s1 + $0xe4] sm:$0xf]
  %v80 = vld [vmem:[%s1 + $0xe8] sm:$0xf]
  %v81 = vld [vmem:[%s1 + $0xec] sm:$0xf]
  %v82 = vld [vmem:[%s1 + $0xf0] sm:$0xf]
  %v83 = vld [vmem:[%s1 + $0xf4] sm:$0xf]
  %v84 = vld [vmem:[%s1 + $0xf8] sm:$0xf]
  %v85 = vld [vmem:[%s1 + $0xfc] sm:$0xf]
  %v86 = vld [vmem:[%s1 + $0x100] sm:$0xf]
  %v87 = vld [vmem:[%s1 + $0x104] sm:$0xf]
  %v88 = vld [vmem:[%s1 + $0x108] sm:$0xf]
  %v89 = vld [vmem:[%s1 + $0x10c] sm:$0xf]
  %v90 = vld [vmem:[%s1 + $0x110] sm:$0xf]
  %v91 = vld [vmem:[%s1 + $0x114] sm:$0xf]
  %v92 = vld [vmem:[%s1 + $0x118] sm:$0xf]
  %v93 = vld [vmem:[%s1 + $0x11c] sm:$0xf]
  %v94 = vld [vmem:[%s1 + $0x120] sm:$0xf]
  %v95 = vld [vmem:[%s1 + $0x124] sm:$0xf]
  %v96 = vld [vmem:[%s1 + $0x128] sm:$0xf]
  %v97 = vld [vmem:[%s1 + $0x12c] sm:$0xf]
  %v98 = vld [vmem:[%s1 + $0x130] sm:$0xf]
  %v99 = vld [vmem:[%s1 + $0x134] sm:$0xf]
  %v100 = vld [vmem:[%s1 + $0x138] sm:$0xf]
  %v101 = vld [vmem:[%s1 + $0x13c] sm:$0xf]
  %v102 = vld [vmem:[%s1 + $0x140] sm:$0xf]
  %v103 = vld [vmem:[%s1 + $0x144] sm:$0xf]
  %v104 = vld [vmem:[%s1 + $0x148] sm:$0xf]
  %v105 = vld [vmem:[%s1 + $0x14c] sm:$0xf]
  %v106 = vld [vmem:[%s1 + $0x150] sm:$0xf]
  %v107 = vld [vmem:[%s1 + $0x154] sm:$0xf]
  %v108 = vld [vmem:[%s1 + $0x158] sm:$0xf]
  %v109 = vld [vmem:[%s1 + $0x15c] sm:$0xf]
  %v110 = vld [vmem:[%s1 + $0x160] sm:$0xf]
  %v111 = vld [vmem:[%s1 + $0x164] sm:$0xf]
  %v112 = vld [vmem:[%s1 + $0x168] sm:$0xf]
  %v113 = vld [vmem:[%s1 + $0x16c] sm:$0xf]
  %v114 = vld [vmem:[%s1 + $0x170] sm:$0xf]
  %v115 = vld [vmem:[%s1 + $0x174] sm:$0xf]
  %v116 = vld [vmem:[%s1 + $0x178] sm:$0xf]
  %v117 = vld [vmem:[%s1 + $0x17c] sm:$0xf]
  %v118 = vld [vmem:[%s1 + $0x180] sm:$0xf]
  %v119 = vld [vmem:[%s1 + $0x184] sm:$0xf]
  %v120 = vld [vmem:[%s1 + $0x188] sm:$0xf]
  %v121 = vld [vmem:[%s1 + $0x18c] sm:$0xf]
  %v122 = vld [vmem:[%s1 + $0x190] sm:$0xf]
  %v123 = vld [vmem:[%s1 + $0x194] sm:$0xf]
  %v124 = vld [vmem:[%s1 + $0x198] sm:$0xf]
  %v125 = vld [vmem:[%s1 + $0x19c] sm:$0xf]
  %v126 = vld [vmem:[%s1 + $0x1a0] sm:$0xf]
  %v127 = vld [vmem:[%s1 + $0x1a4] sm:$0xf]
  %v128 = vld [vmem:[%s1 + $0x1a8] sm:$0xf]
  %v129 = vld [vmem:[%s1 + $0x1ac] sm:$0xf]
  %v130 = vld [vmem:[%s1 + $0x1b0] sm:$0xf]
  %v131 = vld [vmem:[%s1 + $0x1b4] sm:$0xf]
  %v132 = vld [vmem:[%s1 + $0x1b8] sm:$0xf]
  %v133 = vld [vmem:[%s1 + $0x1bc] sm:$0xf]
  %v134 = vld [vmem:[%s1 + $0x1c0] sm:$0xf]
  %v135 = vld [vmem:[%s1 + $0x1c4] sm:$0xf]
  %v136 = vld [vmem:[%s1 + $0x1c8] sm:$0xf]
  %v137 = vld [vmem:[%s1 + $0x1cc] sm:$0xf]
  %v138 = vld [vmem:[%s1 + $0x1d0] sm:$0xf]
  %v139 = vld [vmem:[%s1 + $0x1d4] sm:$0xf]
  %v140 = vld [vmem:[%s1 + $0x1d8] sm:$0xf]
  %v141 = vld [vmem:[%s1 + $0x1dc] sm:$0xf]
  %v142 = vld [vmem:[%s1 + $0x1e0] sm:$0xf]
  %v143 = vld [vmem:[%s1 + $0x1e4] sm:$0xf]
  %v144 = vld [vmem:[%s1 + $0x1e8] sm:$0xf]
  %v145 = vld [vmem:[%s1 + $0x1ec] sm:$0xf]
  %v146 = vld [vmem:[%s1 + $0x1f0] sm:$0xf]
  %v147 = vld [vmem:[%s1 + $0x1f4] sm:$0xf]
  %v148 = vld [vmem:[%s1 + $0x1f8] sm:$0xf]
  %v149 = vld [vmem:[%s1 + $0x1fc] sm:$0xf]
  %v150 = vld [vmem:[%s1 + $0x200] sm:$0xf]
  %v151 = vld [vmem:[%s1 + $0x204] sm:$0xf]
  %v152 = vld [vmem:[%s1 + $0x208] sm:$0xf]
  %v153 = vld [vmem:[%s1 + $0x20c] sm:$0xf]
  %v154 = vld [vmem:[%s1 + $0x210] sm:$0xf]
  %v155 = vld [vmem:[%s1 + $0x214] sm:$0xf]
  %v156 = vld [vmem:[%s1 + $0x218] sm:$0xf]
  %v157 = vld [vmem:[%s1 + $0x21c] sm:$0xf]
  %v158 = vld [vmem:[%s1 + $0x220] sm:$0xf]
  %v159 = vld [vmem:[%s1 + $0x224] sm:$0xf]
  %v160 = vld [vmem:[%s1 + $0x228] sm:$0xf]
  %v161 = vld [vmem:[%s1 + $0x22c] sm:$0xf]
  %v162 = vld [vmem:[%s1 + $0x230] sm:$0xf]
  %v163 = vld [vmem:[%s1 + $0x234] sm:$0xf]
  %v164 = vld [vmem:[%s1 + $0x238] sm:$0xf]
  %v165 = vld [vmem:[%s1 + $0x23c] sm:$0xf]
  %v166 = vld [vmem:[%s1 + $0x240] sm:$0xf]
  %v167 = vld [vmem:[%s1 + $0x244] sm:$0xf]
  %v168 = vld [vmem:[%s1 + $0x248] sm:$0xf]
  %v169 = vld [vmem:[%s1 + $0x24c] sm:$0xf]
  %v170 = vld [vmem:[%s1 + $0x250] sm:$0xf]
  %v171 = vld [vmem:[%s1 + $0x254] sm:$0xf]
  %v172 = vld [vmem:[%s1 + $0x258] sm:$0xf]
  %v173 = vld [vmem:[%s1 + $0x25c] sm:$0xf]
  %v174 = vld [vmem:[%s1 + $0x260] sm:$0xf]
  %v175 = vld [vmem:[%s1 + $0x264] sm:$0xf]
  %v176 = vld [vmem:[%s1 + $0x268] sm:$0xf]
  %v177 = vld [vmem:[%s1 + $0x26c] sm:$0xf]
  %v178 = vld [vmem:[%s1 + $0x270] sm:$0xf]
  %v179 = vld [vmem:[%s1 + $0x274] sm:$0xf]
  %v180 = vld [vmem:[%s1 + $0x278] sm:$0xf]
  %v181 = vld [vmem:[%s1 + $0x27c] sm:$0xf]
  %v182 = vld [vmem:[%s1 + $0x280] sm:$0xf]
  %v183 = vld [vmem:[%s1 + $0x284] sm:$0xf]
  %v184 = vld [vmem:[%s1 + $0x288] sm:$0xf]
  %v185 = vld [vmem:[%s1 + $0x28c] sm:$0xf]
  %v186 = vld [vmem:[%s1 + $0x290] sm:$0xf]
  %v187 = vld [vmem:[%s1 + $0x294] sm:$0xf]
  %v188 = vld [vmem:[%s1 + $0x298] sm:$0xf]
  %v189 = vld [vmem:[%s1 + $0x29c] sm:$0xf]
  %v190 = vld [vmem:[%s1 + $0x2a0] sm:$0xf]
  %v191 = vld [vmem:[%s1 + $0x2a4] sm:$0xf]
  %v192 = vld [vmem:[%s1 + $0x2a8] sm:$0xf]
  %v193 = vld [vmem:[%s1 + $0x2ac] sm:$0xf]
  %v194 = vld [vmem:[%s1 + $0x2b0] sm:$0xf]
  %v195 = vld [vmem:[%s1 + $0x2b4] sm:$0xf]
  %v196 = vld [vmem:[%s1 + $0x2b8] sm:$0xf]
  %v197 = vld [vmem:[%s1 + $0x2bc] sm:$0xf]
  %v198 = vld [vmem:[%s1 + $0x2c0] sm:$0xf]
  %v199 = vld [vmem:[%s1 + $0x2c4] sm:$0xf]
  %v200 = vld [vmem:[%s1 + $0x2c8] sm:$0xf]
  %v201 = vld [vmem:[%s1 + $0x2cc] sm:$0xf]
  %v202 = vld [vmem:[%s1 + $0x2d0] sm:$0xf]
  %v203 = vld [vmem:[%s1 + $0x2d4] sm:$0xf]
  %v204 = vld [vmem:[%s1 + $0x2d8] sm:$0xf]
  %v205 = vld [vmem:[%s1 + $0x2dc] sm:$0xf]
  %v206 = vld [vmem:[%s1 + $0x2e0] sm:$0xf]
  %v207 = vld [vmem:[%s1 + $0x2e4] sm:$0xf]
  %v208 = vld [vmem:[%s1 + $0x2e8] sm:$0xf]
  %v209 = vld [vmem:[%s1 + $0x2ec] sm:$0xf]
  %v210 = vld [vmem:[%s1 + $0x2f0] sm:$0xf]
  %v211 = vld [vmem:[%s1 + $0x2f4] sm:$0xf]
  %v212 = vld [vmem:[%s1 + $0x2f8] sm:$0xf]
  %v213 = vld [vmem:[%s1 + $0x2fc] sm:$0xf]
  %v214 = vld [vmem:[%s1 + $0x300] sm:$0xf]
  %v215 = vld [vmem:[%s1 + $0x304] sm:$0xf]
  %v216 = vld [vmem:[%s1 + $0x308] sm:$0xf]
  %v217 = vld [vmem:[%s1 + $0x30c] sm:$0xf]
  %v218 = vld [vmem:[%s2] sm:$0x1]
  %v220 = vlaneseq
  %v221 = vshrl.u32 %v220, 7
  %v222 = vsub.s32 0, %v221
  %v223 = vrot.slane %v218, %v222
  %v232 = vunpack.c.l.b16 %v15
  %v233 = vunpack.c.h.b16 %v15
  %v234 = vunpack.c.l.b16 %v16
  %v235 = vunpack.c.h.b16 %v16
  %v236 = vunpack.c.l.b16 %v17
  %v237 = vunpack.c.h.b16 %v17
  %v238 = vunpack.c.l.b16 %v18
  %v239 = vunpack.c.h.b16 %v18
  %v240 = vunpack.c.l.b16 %v19
  %v241 = vunpack.c.h.b16 %v19
  %v242 = vunpack.c.l.b16 %v20
  %v243 = vunpack.c.h.b16 %v20
  %v244 = vunpack.c.l.b16 %v21
  %v245 = vpack.c.b16 %v232, %v232
  %v246 = vpack.c.b16 %v233, %v233
  %v247 = vpack.c.b16 %v234, %v234
  %v248 = vpack.c.b16 %v235, %v235
  %v249 = vpack.c.b16 %v236, %v236
  %v250 = vpack.c.b16 %v237, %v237
  %v251 = vpack.c.b16 %v238, %v238
  %v252 = vpack.c.b16 %v239, %v239
  %v253 = vpack.c.b16 %v240, %v240
  %v254 = vpack.c.b16 %v241, %v241
  %v255 = vpack.c.b16 %v242, %v242
  %v256 = vpack.c.b16 %v243, %v243
  %v257 = vpack.c.b16 %v244, %v244
  %v466 = vunpack.c.l.b16 %v22
  %v467 = vunpack.c.l.b16 %v23
  %v468 = vunpack.c.l.b16 %v24
  %v469 = vunpack.c.l.b16 %v25
  %v470 = vunpack.c.l.b16 %v26
  %v471 = vunpack.c.l.b16 %v27
  %v472 = vunpack.c.l.b16 %v28
  %v473 = vunpack.c.l.b16 %v29
  %v474 = vunpack.c.l.b16 %v30
  %v475 = vunpack.c.l.b16 %v31
  %v476 = vunpack.c.l.b16 %v32
  %v477 = vunpack.c.l.b16 %v33
  %v478 = vunpack.c.l.b16 %v34
  %v479 = vunpack.c.l.b16 %v35
  %v480 = vunpack.c.l.b16 %v36
  %v481 = vunpack.c.l.b16 %v37
  %v482 = vunpack.c.l.b16 %v38
  %v483 = vunpack.c.l.b16 %v39
  %v484 = vunpack.c.l.b16 %v40
  %v485 = vunpack.c.l.b16 %v41
  %v486 = vunpack.c.l.b16 %v42
  %v487 = vunpack.c.l.b16 %v43
  %v488 = vunpack.c.l.b16 %v44
  %v489 = vunpack.c.l.b16 %v45
  %v490 = vunpack.c.l.b16 %v46
  %v491 = vunpack.c.l.b16 %v47
  %v492 = vunpack.c.l.b16 %v48
  %v493 = vunpack.c.l.b16 %v49
  %v494 = vunpack.c.l.b16 %v50
  %v495 = vunpack.c.l.b16 %v51
  %v496 = vunpack.c.l.b16 %v52
  %v497 = vunpack.c.l.b16 %v53
  %v498 = vunpack.c.l.b16 %v54
  %v499 = vunpack.c.l.b16 %v55
  %v500 = vunpack.c.l.b16 %v56
  %v501 = vunpack.c.l.b16 %v57
  %v502 = vunpack.c.l.b16 %v58
  %v503 = vunpack.c.l.b16 %v59
  %v504 = vunpack.c.l.b16 %v60
  %v505 = vunpack.c.l.b16 %v61
  %v506 = vunpack.c.l.b16 %v62
  %v507 = vunpack.c.l.b16 %v63
  %v508 = vunpack.c.l.b16 %v64
  %v509 = vunpack.c.l.b16 %v65
  %v510 = vunpack.c.l.b16 %v66
  %v511 = vunpack.c.l.b16 %v67
  %v512 = vunpack.c.l.b16 %v68
  %v513 = vunpack.c.l.b16 %v69
  %v514 = vunpack.c.l.b16 %v70
  %v515 = vunpack.c.l.b16 %v71
  %v516 = vunpack.c.l.b16 %v72
  %v517 = vunpack.c.l.b16 %v73
  %v518 = vunpack.c.l.b16 %v74
  %v519 = vunpack.c.l.b16 %v75
  %v520 = vunpack.c.l.b16 %v76
  %v521 = vunpack.c.l.b16 %v77
  %v522 = vunpack.c.l.b16 %v78
  %v523 = vunpack.c.l.b16 %v79
  %v524 = vunpack.c.l.b16 %v80
  %v525 = vunpack.c.l.b16 %v81
  %v526 = vunpack.c.l.b16 %v82
  %v527 = vunpack.c.l.b16 %v83
  %v528 = vunpack.c.l.b16 %v84
  %v529 = vunpack.c.l.b16 %v85
  %v530 = vunpack.c.l.b16 %v86
  %v531 = vunpack.c.l.b16 %v87
  %v532 = vunpack.c.l.b16 %v88
  %v533 = vunpack.c.l.b16 %v89
  %v534 = vunpack.c.l.b16 %v90
  %v535 = vunpack.c.l.b16 %v91
  %v536 = vunpack.c.l.b16 %v92
  %v537 = vunpack.c.l.b16 %v93
  %v538 = vunpack.c.l.b16 %v94
  %v539 = vunpack.c.l.b16 %v95
  %v540 = vunpack.c.l.b16 %v96
  %v541 = vunpack.c.l.b16 %v97
  %v542 = vunpack.c.l.b16 %v98
  %v543 = vunpack.c.l.b16 %v99
  %v544 = vunpack.c.l.b16 %v100
  %v545 = vunpack.c.l.b16 %v101
  %v546 = vunpack.c.l.b16 %v102
  %v547 = vunpack.c.l.b16 %v103
  %v548 = vunpack.c.l.b16 %v104
  %v549 = vunpack.c.l.b16 %v105
  %v550 = vunpack.c.l.b16 %v106
  %v551 = vunpack.c.l.b16 %v107
  %v552 = vunpack.c.l.b16 %v108
  %v553 = vunpack.c.l.b16 %v109
  %v554 = vunpack.c.l.b16 %v110
  %v555 = vunpack.c.l.b16 %v111
  %v556 = vunpack.c.l.b16 %v112
  %v557 = vunpack.c.l.b16 %v113
  %v558 = vunpack.c.l.b16 %v114
  %v559 = vunpack.c.l.b16 %v115
  %v560 = vunpack.c.l.b16 %v116
  %v561 = vunpack.c.l.b16 %v117
  %v562 = vunpack.c.l.b16 %v118
  %v563 = vunpack.c.l.b16 %v119
  %v564 = vunpack.c.l.b16 %v120
  %v565 = vunpack.c.l.b16 %v121
  %v566 = vunpack.c.l.b16 %v122
  %v567 = vunpack.c.l.b16 %v123
  %v568 = vunpack.c.l.b16 %v124
  %v569 = vunpack.c.l.b16 %v125
  %v570 = vunpack.c.l.b16 %v126
  %v571 = vunpack.c.l.b16 %v127
  %v572 = vunpack.c.l.b16 %v128
  %v573 = vunpack.c.l.b16 %v129
  %v574 = vunpack.c.l.b16 %v130
  %v575 = vunpack.c.l.b16 %v131
  %v576 = vunpack.c.l.b16 %v132
  %v577 = vunpack.c.l.b16 %v133
  %v578 = vunpack.c.l.b16 %v134
  %v579 = vunpack.c.l.b16 %v135
  %v580 = vunpack.c.l.b16 %v136
  %v581 = vunpack.c.l.b16 %v137
  %v582 = vunpack.c.l.b16 %v138
  %v583 = vunpack.c.l.b16 %v139
  %v584 = vunpack.c.l.b16 %v140
  %v585 = vunpack.c.l.b16 %v141
  %v586 = vunpack.c.l.b16 %v142
  %v587 = vunpack.c.l.b16 %v143
  %v588 = vunpack.c.l.b16 %v144
  %v589 = vunpack.c.l.b16 %v145
  %v590 = vunpack.c.l.b16 %v146
  %v591 = vunpack.c.l.b16 %v147
  %v592 = vunpack.c.l.b16 %v148
  %v593 = vunpack.c.l.b16 %v149
  %v594 = vunpack.c.l.b16 %v150
  %v595 = vunpack.c.l.b16 %v151
  %v596 = vunpack.c.l.b16 %v152
  %v597 = vunpack.c.l.b16 %v153
  %v598 = vunpack.c.l.b16 %v154
  %v599 = vunpack.c.l.b16 %v155
  %v600 = vunpack.c.l.b16 %v156
  %v601 = vunpack.c.l.b16 %v157
  %v602 = vunpack.c.l.b16 %v158
  %v603 = vunpack.c.l.b16 %v159
  %v604 = vunpack.c.l.b16 %v160
  %v605 = vunpack.c.l.b16 %v161
  %v606 = vunpack.c.l.b16 %v162
  %v607 = vunpack.c.l.b16 %v163
  %v608 = vunpack.c.l.b16 %v164
  %v609 = vunpack.c.l.b16 %v165
  %v610 = vunpack.c.l.b16 %v166
  %v611 = vunpack.c.l.b16 %v167
  %v612 = vunpack.c.l.b16 %v168
  %v613 = vunpack.c.l.b16 %v169
  %v614 = vunpack.c.l.b16 %v170
  %v615 = vunpack.c.l.b16 %v171
  %v616 = vunpack.c.l.b16 %v172
  %v617 = vunpack.c.l.b16 %v173
  %v618 = vunpack.c.l.b16 %v174
  %v619 = vunpack.c.l.b16 %v175
  %v620 = vunpack.c.l.b16 %v176
  %v621 = vunpack.c.l.b16 %v177
  %v622 = vunpack.c.l.b16 %v178
  %v623 = vunpack.c.l.b16 %v179
  %v624 = vunpack.c.l.b16 %v180
  %v625 = vunpack.c.l.b16 %v181
  %v626 = vunpack.c.l.b16 %v182
  %v627 = vunpack.c.l.b16 %v183
  %v628 = vunpack.c.l.b16 %v184
  %v629 = vunpack.c.l.b16 %v185
  %v630 = vunpack.c.l.b16 %v186
  %v631 = vunpack.c.l.b16 %v187
  %v632 = vunpack.c.l.b16 %v188
  %v633 = vunpack.c.l.b16 %v189
  %v634 = vunpack.c.l.b16 %v190
  %v635 = vunpack.c.l.b16 %v191
  %v636 = vunpack.c.l.b16 %v192
  %v637 = vunpack.c.l.b16 %v193
  %v638 = vunpack.c.l.b16 %v194
  %v639 = vunpack.c.l.b16 %v195
  %v640 = vunpack.c.l.b16 %v196
  %v641 = vunpack.c.l.b16 %v197
  %v642 = vunpack.c.l.b16 %v198
  %v643 = vunpack.c.l.b16 %v199
  %v644 = vunpack.c.l.b16 %v200
  %v645 = vunpack.c.l.b16 %v201
  %v646 = vunpack.c.l.b16 %v202
  %v647 = vunpack.c.l.b16 %v203
  %v648 = vunpack.c.l.b16 %v204
  %v649 = vunpack.c.l.b16 %v205
  %v650 = vunpack.c.l.b16 %v206
  %v651 = vunpack.c.l.b16 %v207
  %v652 = vunpack.c.l.b16 %v208
  %v653 = vunpack.c.l.b16 %v209
  %v654 = vunpack.c.l.b16 %v210
  %v655 = vunpack.c.l.b16 %v211
  %v656 = vunpack.c.l.b16 %v212
  %v657 = vunpack.c.l.b16 %v213
  %v658 = vunpack.c.l.b16 %v214
  %v659 = vunpack.c.l.b16 %v215
  %v660 = vunpack.c.l.b16 %v216
  %v661 = vunpack.c.l.b16 %v217
  %v662 = vpack.c.b16 %v467, %v466
  %v663 = vpack.c.b16 %v469, %v468
  %v664 = vpack.c.b16 %v471, %v470
  %v665 = vpack.c.b16 %v473, %v472
  %v666 = vpack.c.b16 %v475, %v474
  %v667 = vpack.c.b16 %v477, %v476
  %v668 = vpack.c.b16 %v479, %v478
  %v669 = vpack.c.b16 %v481, %v480
  %v670 = vpack.c.b16 %v483, %v482
  %v671 = vpack.c.b16 %v485, %v484
  %v672 = vpack.c.b16 %v487, %v486
  %v673 = vpack.c.b16 %v489, %v488
  %v674 = vpack.c.b16 %v491, %v490
  %v675 = vpack.c.b16 %v493, %v492
  %v676 = vpack.c.b16 %v495, %v494
  %v677 = vpack.c.b16 %v497, %v496
  %v678 = vpack.c.b16 %v499, %v498
  %v679 = vpack.c.b16 %v501, %v500
  %v680 = vpack.c.b16 %v503, %v502
  %v681 = vpack.c.b16 %v505, %v504
  %v682 = vpack.c.b16 %v507, %v506
  %v683 = vpack.c.b16 %v509, %v508
  %v684 = vpack.c.b16 %v511, %v510
  %v685 = vpack.c.b16 %v513, %v512
  %v686 = vpack.c.b16 %v515, %v514
  %v687 = vpack.c.b16 %v517, %v516
  %v688 = vpack.c.b16 %v519, %v518
  %v689 = vpack.c.b16 %v521, %v520
  %v690 = vpack.c.b16 %v523, %v522
  %v691 = vpack.c.b16 %v525, %v524
  %v692 = vpack.c.b16 %v527, %v526
  %v693 = vpack.c.b16 %v529, %v528
  %v694 = vpack.c.b16 %v531, %v530
  %v695 = vpack.c.b16 %v533, %v532
  %v696 = vpack.c.b16 %v535, %v534
  %v697 = vpack.c.b16 %v537, %v536
  %v698 = vpack.c.b16 %v539, %v538
  %v699 = vpack.c.b16 %v541, %v540
  %v700 = vpack.c.b16 %v543, %v542
  %v701 = vpack.c.b16 %v545, %v544
  %v702 = vpack.c.b16 %v547, %v546
  %v703 = vpack.c.b16 %v549, %v548
  %v704 = vpack.c.b16 %v551, %v550
  %v705 = vpack.c.b16 %v553, %v552
  %v706 = vpack.c.b16 %v555, %v554
  %v707 = vpack.c.b16 %v557, %v556
  %v708 = vpack.c.b16 %v559, %v558
  %v709 = vpack.c.b16 %v561, %v560
  %v710 = vpack.c.b16 %v563, %v562
  %v711 = vpack.c.b16 %v565, %v564
  %v712 = vpack.c.b16 %v567, %v566
  %v713 = vpack.c.b16 %v569, %v568
  %v714 = vpack.c.b16 %v571, %v570
  %v715 = vpack.c.b16 %v573, %v572
  %v716 = vpack.c.b16 %v575, %v574
  %v717 = vpack.c.b16 %v577, %v576
  %v718 = vpack.c.b16 %v579, %v578
  %v719 = vpack.c.b16 %v581, %v580
  %v720 = vpack.c.b16 %v583, %v582
  %v721 = vpack.c.b16 %v585, %v584
  %v722 = vpack.c.b16 %v587, %v586
  %v723 = vpack.c.b16 %v589, %v588
  %v724 = vpack.c.b16 %v591, %v590
  %v725 = vpack.c.b16 %v593, %v592
  %v726 = vpack.c.b16 %v595, %v594
  %v727 = vpack.c.b16 %v597, %v596
  %v728 = vpack.c.b16 %v599, %v598
  %v729 = vpack.c.b16 %v601, %v600
  %v730 = vpack.c.b16 %v603, %v602
  %v731 = vpack.c.b16 %v605, %v604
  %v732 = vpack.c.b16 %v607, %v606
  %v733 = vpack.c.b16 %v609, %v608
  %v734 = vpack.c.b16 %v611, %v610
  %v735 = vpack.c.b16 %v613, %v612
  %v736 = vpack.c.b16 %v615, %v614
  %v737 = vpack.c.b16 %v617, %v616
  %v738 = vpack.c.b16 %v619, %v618
  %v739 = vpack.c.b16 %v621, %v620
  %v740 = vpack.c.b16 %v623, %v622
  %v741 = vpack.c.b16 %v625, %v624
  %v742 = vpack.c.b16 %v627, %v626
  %v743 = vpack.c.b16 %v629, %v628
  %v744 = vpack.c.b16 %v631, %v630
  %v745 = vpack.c.b16 %v633, %v632
  %v746 = vpack.c.b16 %v635, %v634
  %v747 = vpack.c.b16 %v637, %v636
  %v748 = vpack.c.b16 %v639, %v638
  %v749 = vpack.c.b16 %v641, %v640
  %v750 = vpack.c.b16 %v643, %v642
  %v751 = vpack.c.b16 %v645, %v644
  %v752 = vpack.c.b16 %v647, %v646
  %v753 = vpack.c.b16 %v649, %v648
  %v754 = vpack.c.b16 %v651, %v650
  %v755 = vpack.c.b16 %v653, %v652
  %v756 = vpack.c.b16 %v655, %v654
  %v757 = vpack.c.b16 %v657, %v656
  %v758 = vpack.c.b16 %v659, %v658
  %v759 = vpack.c.b16 %v661, %v660
  %vm858 = vcmask 261120
  %v860 = vsel %vm858, %v257, 0
  %862 = vmatprep.subr.bf16.mxu0 0
  %863 = vmatpush1.bf16.msra.mxu0 %v669
  %864 = vmatprep.subr.bf16.mxu0 0
  %865 = vmatpush1.bf16.msra.mxu0 %v668
  %866 = vmatprep.subr.bf16.mxu0 0
  %867 = vmatpush1.bf16.msra.mxu0 %v667
  %868 = vmatprep.subr.bf16.mxu0 0
  %869 = vmatpush1.bf16.msra.mxu0 %v666
  %870 = vmatprep.subr.bf16.mxu0 0
  %871 = vmatpush1.bf16.msra.mxu0 %v665
  %872 = vmatprep.subr.bf16.mxu0 0
  %873 = vmatpush1.bf16.msra.mxu0 %v664
  %874 = vmatprep.subr.bf16.mxu0 0
  %875 = vmatpush1.bf16.msra.mxu0 %v663
  %876 = vmatprep.subr.bf16.mxu0 0
  %877 = vmatpush1.bf16.msra.mxu0 %v662
  %878 = vmatprep.subr.bf16.mxu0 0
  %879 = vmatpush2.bf16.msra.mxu0 %v677
  %880 = vmatprep.subr.bf16.mxu0 0
  %881 = vmatpush2.bf16.msra.mxu0 %v676
  %882 = vmatprep.subr.bf16.mxu0 0
  %883 = vmatpush2.bf16.msra.mxu0 %v675
  %884 = vmatprep.subr.bf16.mxu0 0
  %885 = vmatpush2.bf16.msra.mxu0 %v674
  %886 = vmatprep.subr.bf16.mxu0 0
  %887 = vmatpush2.bf16.msra.mxu0 %v673
  %888 = vmatprep.subr.bf16.mxu0 0
  %889 = vmatpush2.bf16.msra.mxu0 %v672
  %890 = vmatprep.subr.bf16.mxu0 0
  %891 = vmatpush2.bf16.msra.mxu0 %v671
  %892 = vmatprep.subr.bf16.mxu0 0
  %893 = vmatpush2.bf16.msra.mxu0 %v670
  %894 = vmatprep.mubr.bf16.mxu0 %v246
  %895 = vmatmul.mubr.bf16.gmra.mxu0 %v245
  %v896 = vpop.f32.mrf.mxu0
  %v897 = vadd.f32 %v223, %v896
  %v898 = vpop.f32.mrf.mxu0
  %v899 = vpop.f32.mrf.mxu0
  %v900 = vpop.f32.mrf.mxu0
  %901 = vdwg.mxu0
  %902 = vmatprep.subr.bf16.mxu0 0
  %903 = vmatpush1.bf16.msra.mxu0 %v685
  %904 = vmatprep.subr.bf16.mxu0 0
  %905 = vmatpush1.bf16.msra.mxu0 %v684
  %906 = vmatprep.subr.bf16.mxu0 0
  %907 = vmatpush1.bf16.msra.mxu0 %v683
  %908 = vmatprep.subr.bf16.mxu0 0
  %909 = vmatpush1.bf16.msra.mxu0 %v682
  %910 = vmatprep.subr.bf16.mxu0 0
  %911 = vmatpush1.bf16.msra.mxu0 %v681
  %912 = vmatprep.subr.bf16.mxu0 0
  %913 = vmatpush1.bf16.msra.mxu0 %v680
  %914 = vmatprep.subr.bf16.mxu0 0
  %915 = vmatpush1.bf16.msra.mxu0 %v679
  %916 = vmatprep.subr.bf16.mxu0 0
  %917 = vmatpush1.bf16.msra.mxu0 %v678
  %918 = vmatprep.subr.bf16.mxu0 0
  %919 = vmatpush2.bf16.msra.mxu0 %v693
  %920 = vmatprep.subr.bf16.mxu0 0
  %921 = vmatpush2.bf16.msra.mxu0 %v692
  %922 = vmatprep.subr.bf16.mxu0 0
  %923 = vmatpush2.bf16.msra.mxu0 %v691
  %924 = vmatprep.subr.bf16.mxu0 0
  %925 = vmatpush2.bf16.msra.mxu0 %v690
  %926 = vmatprep.subr.bf16.mxu0 0
  %927 = vmatpush2.bf16.msra.mxu0 %v689
  %928 = vmatprep.subr.bf16.mxu0 0
  %929 = vmatpush2.bf16.msra.mxu0 %v688
  %930 = vmatprep.subr.bf16.mxu0 0
  %931 = vmatpush2.bf16.msra.mxu0 %v687
  %932 = vmatprep.subr.bf16.mxu0 0
  %933 = vmatpush2.bf16.msra.mxu0 %v686
  %934 = vmatprep.mubr.bf16.mxu0 %v248
  %935 = vmatmul.mubr.bf16.gmra.mxu0 %v247
  %v936 = vpop.f32.mrf.mxu0
  %v937 = vadd.f32 %v897, %v936
  %v938 = vpop.f32.mrf.mxu0
  %v939 = vpop.f32.mrf.mxu0
  %v940 = vpop.f32.mrf.mxu0
  %941 = vdwg.mxu0
  %942 = vmatprep.subr.bf16.mxu0 0
  %943 = vmatpush1.bf16.msra.mxu0 %v701
  %944 = vmatprep.subr.bf16.mxu0 0
  %945 = vmatpush1.bf16.msra.mxu0 %v700
  %946 = vmatprep.subr.bf16.mxu0 0
  %947 = vmatpush1.bf16.msra.mxu0 %v699
  %948 = vmatprep.subr.bf16.mxu0 0
  %949 = vmatpush1.bf16.msra.mxu0 %v698
  %950 = vmatprep.subr.bf16.mxu0 0
  %951 = vmatpush1.bf16.msra.mxu0 %v697
  %952 = vmatprep.subr.bf16.mxu0 0
  %953 = vmatpush1.bf16.msra.mxu0 %v696
  %954 = vmatprep.subr.bf16.mxu0 0
  %955 = vmatpush1.bf16.msra.mxu0 %v695
  %956 = vmatprep.subr.bf16.mxu0 0
  %957 = vmatpush1.bf16.msra.mxu0 %v694
  %958 = vmatprep.subr.bf16.mxu0 0
  %959 = vmatpush2.bf16.msra.mxu0 %v709
  %960 = vmatprep.subr.bf16.mxu0 0
  %961 = vmatpush2.bf16.msra.mxu0 %v708
  %962 = vmatprep.subr.bf16.mxu0 0
  %963 = vmatpush2.bf16.msra.mxu0 %v707
  %964 = vmatprep.subr.bf16.mxu0 0
  %965 = vmatpush2.bf16.msra.mxu0 %v706
  %966 = vmatprep.subr.bf16.mxu0 0
  %967 = vmatpush2.bf16.msra.mxu0 %v705
  %968 = vmatprep.subr.bf16.mxu0 0
  %969 = vmatpush2.bf16.msra.mxu0 %v704
  %970 = vmatprep.subr.bf16.mxu0 0
  %971 = vmatpush2.bf16.msra.mxu0 %v703
  %972 = vmatprep.subr.bf16.mxu0 0
  %973 = vmatpush2.bf16.msra.mxu0 %v702
  %974 = vmatprep.mubr.bf16.mxu0 %v250
  %975 = vmatmul.mubr.bf16.gmra.mxu0 %v249
  %v976 = vpop.f32.mrf.mxu0
  %v977 = vadd.f32 %v937, %v976
  %v978 = vpop.f32.mrf.mxu0
  %v979 = vpop.f32.mrf.mxu0
  %v980 = vpop.f32.mrf.mxu0
  %981 = vdwg.mxu0
  %982 = vmatprep.subr.bf16.mxu0 0
  %983 = vmatpush1.bf16.msra.mxu0 %v717
  %984 = vmatprep.subr.bf16.mxu0 0
  %985 = vmatpush1.bf16.msra.mxu0 %v716
  %986 = vmatprep.subr.bf16.mxu0 0
  %987 = vmatpush1.bf16.msra.mxu0 %v715
  %988 = vmatprep.subr.bf16.mxu0 0
  %989 = vmatpush1.bf16.msra.mxu0 %v714
  %990 = vmatprep.subr.bf16.mxu0 0
  %991 = vmatpush1.bf16.msra.mxu0 %v713
  %992 = vmatprep.subr.bf16.mxu0 0
  %993 = vmatpush1.bf16.msra.mxu0 %v712
  %994 = vmatprep.subr.bf16.mxu0 0
  %995 = vmatpush1.bf16.msra.mxu0 %v711
  %996 = vmatprep.subr.bf16.mxu0 0
  %997 = vmatpush1.bf16.msra.mxu0 %v710
  %998 = vmatprep.subr.bf16.mxu0 0
  %999 = vmatpush2.bf16.msra.mxu0 %v725
  %1000 = vmatprep.subr.bf16.mxu0 0
  %1001 = vmatpush2.bf16.msra.mxu0 %v724
  %1002 = vmatprep.subr.bf16.mxu0 0
  %1003 = vmatpush2.bf16.msra.mxu0 %v723
  %1004 = vmatprep.subr.bf16.mxu0 0
  %1005 = vmatpush2.bf16.msra.mxu0 %v722
  %1006 = vmatprep.subr.bf16.mxu0 0
  %1007 = vmatpush2.bf16.msra.mxu0 %v721
  %1008 = vmatprep.subr.bf16.mxu0 0
  %1009 = vmatpush2.bf16.msra.mxu0 %v720
  %1010 = vmatprep.subr.bf16.mxu0 0
  %1011 = vmatpush2.bf16.msra.mxu0 %v719
  %1012 = vmatprep.subr.bf16.mxu0 0
  %1013 = vmatpush2.bf16.msra.mxu0 %v718
  %1014 = vmatprep.mubr.bf16.mxu0 %v252
  %1015 = vmatmul.mubr.bf16.gmra.mxu0 %v251
  %v1016 = vpop.f32.mrf.mxu0
  %v1017 = vadd.f32 %v977, %v1016
  %v1018 = vpop.f32.mrf.mxu0
  %v1019 = vpop.f32.mrf.mxu0
  %v1020 = vpop.f32.mrf.mxu0
  %1021 = vdwg.mxu0
  %1022 = vmatprep.subr.bf16.mxu0 0
  %1023 = vmatpush1.bf16.msra.mxu0 %v733
  %1024 = vmatprep.subr.bf16.mxu0 0
  %1025 = vmatpush1.bf16.msra.mxu0 %v732
  %1026 = vmatprep.subr.bf16.mxu0 0
  %1027 = vmatpush1.bf16.msra.mxu0 %v731
  %1028 = vmatprep.subr.bf16.mxu0 0
  %1029 = vmatpush1.bf16.msra.mxu0 %v730
  %1030 = vmatprep.subr.bf16.mxu0 0
  %1031 = vmatpush1.bf16.msra.mxu0 %v729
  %1032 = vmatprep.subr.bf16.mxu0 0
  %1033 = vmatpush1.bf16.msra.mxu0 %v728
  %1034 = vmatprep.subr.bf16.mxu0 0
  %1035 = vmatpush1.bf16.msra.mxu0 %v727
  %1036 = vmatprep.subr.bf16.mxu0 0
  %1037 = vmatpush1.bf16.msra.mxu0 %v726
  %1038 = vmatprep.subr.bf16.mxu0 0
  %1039 = vmatpush2.bf16.msra.mxu0 %v741
  %1040 = vmatprep.subr.bf16.mxu0 0
  %1041 = vmatpush2.bf16.msra.mxu0 %v740
  %1042 = vmatprep.subr.bf16.mxu0 0
  %1043 = vmatpush2.bf16.msra.mxu0 %v739
  %1044 = vmatprep.subr.bf16.mxu0 0
  %1045 = vmatpush2.bf16.msra.mxu0 %v738
  %1046 = vmatprep.subr.bf16.mxu0 0
  %1047 = vmatpush2.bf16.msra.mxu0 %v737
  %1048 = vmatprep.subr.bf16.mxu0 0
  %1049 = vmatpush2.bf16.msra.mxu0 %v736
  %1050 = vmatprep.subr.bf16.mxu0 0
  %1051 = vmatpush2.bf16.msra.mxu0 %v735
  %1052 = vmatprep.subr.bf16.mxu0 0
  %1053 = vmatpush2.bf16.msra.mxu0 %v734
  %1054 = vmatprep.mubr.bf16.mxu0 %v254
  %1055 = vmatmul.mubr.bf16.gmra.mxu0 %v253
  %v1056 = vpop.f32.mrf.mxu0
  %v1057 = vadd.f32 %v1017, %v1056
  %v1058 = vpop.f32.mrf.mxu0
  %v1059 = vpop.f32.mrf.mxu0
  %v1060 = vpop.f32.mrf.mxu0
  %1061 = vdwg.mxu0
  %1062 = vmatprep.subr.bf16.mxu0 0
  %1063 = vmatpush1.bf16.msra.mxu0 %v749
  %1064 = vmatprep.subr.bf16.mxu0 0
  %1065 = vmatpush1.bf16.msra.mxu0 %v748
  %1066 = vmatprep.subr.bf16.mxu0 0
  %1067 = vmatpush1.bf16.msra.mxu0 %v747
  %1068 = vmatprep.subr.bf16.mxu0 0
  %1069 = vmatpush1.bf16.msra.mxu0 %v746
  %1070 = vmatprep.subr.bf16.mxu0 0
  %1071 = vmatpush1.bf16.msra.mxu0 %v745
  %1072 = vmatprep.subr.bf16.mxu0 0
  %1073 = vmatpush1.bf16.msra.mxu0 %v744
  %1074 = vmatprep.subr.bf16.mxu0 0
  %1075 = vmatpush1.bf16.msra.mxu0 %v743
  %1076 = vmatprep.subr.bf16.mxu0 0
  %1077 = vmatpush1.bf16.msra.mxu0 %v742
  %1078 = vmatprep.subr.bf16.mxu0 0
  %1079 = vmatpush2.bf16.msra.mxu0 %v757
  %1080 = vmatprep.subr.bf16.mxu0 0
  %1081 = vmatpush2.bf16.msra.mxu0 %v756
  %1082 = vmatprep.subr.bf16.mxu0 0
  %1083 = vmatpush2.bf16.msra.mxu0 %v755
  %1084 = vmatprep.subr.bf16.mxu0 0
  %1085 = vmatpush2.bf16.msra.mxu0 %v754
  %1086 = vmatprep.subr.bf16.mxu0 0
  %1087 = vmatpush2.bf16.msra.mxu0 %v753
  %1088 = vmatprep.subr.bf16.mxu0 0
  %1089 = vmatpush2.bf16.msra.mxu0 %v752
  %1090 = vmatprep.subr.bf16.mxu0 0
  %1091 = vmatpush2.bf16.msra.mxu0 %v751
  %1092 = vmatprep.subr.bf16.mxu0 0
  %1093 = vmatpush2.bf16.msra.mxu0 %v750
  %1094 = vmatprep.mubr.bf16.mxu0 %v256
  %1095 = vmatmul.mubr.bf16.gmra.mxu0 %v255
  %v1096 = vpop.f32.mrf.mxu0
  %v1097 = vadd.f32 %v1057, %v1096
  %v1098 = vpop.f32.mrf.mxu0
  %v1099 = vpop.f32.mrf.mxu0
  %v1100 = vpop.f32.mrf.mxu0
  %1101 = vdwg.mxu0
  %1102 = vmatprep.subr.bf16.mxu0 0
  %1103 = vmatpush1.bf16.msra.mxu0 0
  %1104 = vmatprep.subr.bf16.mxu0 0
  %1105 = vmatpush1.bf16.msra.mxu0 0
  %1106 = vmatprep.subr.bf16.mxu0 0
  %1107 = vmatpush1.bf16.msra.mxu0 0
  %1108 = vmatprep.subr.bf16.mxu0 0
  %1109 = vmatpush1.bf16.msra.mxu0 0
  %1110 = vmatprep.subr.bf16.mxu0 0
  %1111 = vmatpush1.bf16.msra.mxu0 0
  %1112 = vmatprep.subr.bf16.mxu0 0
  %1113 = vmatpush1.bf16.msra.mxu0 0
  %1114 = vmatprep.subr.bf16.mxu0 0
  %1115 = vmatpush1.bf16.msra.mxu0 %v759
  %1116 = vmatprep.subr.bf16.mxu0 0
  %1117 = vmatpush1.bf16.msra.mxu0 %v758
  %1118 = vmatprep.subr.bf16.mxu0 0
  %1119 = vmatpush2.bf16.msra.mxu0 0
  %1120 = vmatprep.subr.bf16.mxu0 0
  %1121 = vmatpush2.bf16.msra.mxu0 0
  %1122 = vmatprep.subr.bf16.mxu0 0
  %1123 = vmatpush2.bf16.msra.mxu0 0
  %1124 = vmatprep.subr.bf16.mxu0 0
  %1125 = vmatpush2.bf16.msra.mxu0 0
  %1126 = vmatprep.subr.bf16.mxu0 0
  %1127 = vmatpush2.bf16.msra.mxu0 0
  %1128 = vmatprep.subr.bf16.mxu0 0
  %1129 = vmatpush2.bf16.msra.mxu0 0
  %1130 = vmatprep.subr.bf16.mxu0 0
  %1131 = vmatpush2.bf16.msra.mxu0 0
  %1132 = vmatprep.subr.bf16.mxu0 0
  %1133 = vmatpush2.bf16.msra.mxu0 0
  %1134 = vmatprep.mubr.bf16.mxu0 0
  %1135 = vmatmul.mubr.bf16.gmra.mxu0 %v860
  %v1136 = vpop.f32.mrf.mxu0
  %v1137 = vadd.f32 %v1097, %v1136
  %v1138 = vpop.f32.mrf.mxu0
  %v1139 = vpop.f32.mrf.mxu0
  %v1140 = vpop.f32.mrf.mxu0
  %1141 = vdwg.mxu0
  %1142 = vst [vmem:[%s3] sm:$0xff] %v1137
  // Predicated region
  $region14: #{cnn_forward.5} parent=0 // pred_check
    _
  $region15: #{cnn_forward.5} parent=0 // pred_check_branch
    %1144 = sbr.rel (0) target = $region17
  $region16: #{cnn_forward.5} parent=0 // pred_region
    _
  $region17: #{cnn_forward.5} parent=0 // pred_fallthru
    _
  // Predicated region
  $region18: #{cnn_forward.5} parent=0 // pred_check
    _
  $region19: #{cnn_forward.5} parent=0 // pred_check_branch
    %1146 = sbr.rel (0) target = $region21
  $region20: #{cnn_forward.5} parent=0 // pred_region
    _
  $region21: #{cnn_forward.5} parent=0 // pred_fallthru
    _

</llo_original>
